<compile_context>
chip_gen: v7x
topology: tpu7x:2x2x1
jax: 0.10.0
libtpu: 0.0.40
codegen_flags: <defaults>
</compile_context>

<pallas_src>
import math

import jax
import jax.numpy as jnp
from jax import lax
from jax.experimental import pallas as pl
from jax.experimental.pallas import tpu as pltpu

# ----------------------------- config (small) --------------------------------
B = 2               # batch
S = 8               # sequence length (num patches + cls)
H = 32              # hidden_size
NUM_HEADS = 4       # num_attention_heads
HEAD_DIM = H // NUM_HEADS
I = 4 * H           # intermediate_size (=128, naturally lane-dense)
L = 2               # num_hidden_layers
LN_EPS = 1e-12      # layer_norm_eps (transformers ViT default)
BS = B * S
VEC_W = 128

# Lane-block offsets inside the [L, H, WSLAB_W] weight slab (all multiples of 128).
OFF_Q, OFF_K, OFF_V, OFF_WO, OFF_WI, OFF_HB = 0, 128, 256, 384, 512, 640
QKV_W = 3 * 128      # 384: fused QKV RHS width (Q/K/V each on a 128-lane boundary)
WSLAB_W = 768

# Row indices inside the [L, 16, 128] vector slab.
(ROW_LN1_G, ROW_LN1_B, ROW_LN2_G, ROW_LN2_B,
 ROW_BQ, ROW_BK, ROW_BV, ROW_BO, ROW_BI, ROW_B2) = range(10)
VEC_ROWS = 16


# ------------------------- in-kernel math helpers -----------------------------
def _layer_norm(x, gamma, beta):
    # One-pass stats: mean and E[x^2] reductions are independent (overlap on XLU).
    mean = jnp.mean(x, axis=-1, keepdims=True)
    msq = jnp.mean(x * x, axis=-1, keepdims=True)
    var = msq - mean * mean
    return (x - mean) * lax.rsqrt(var + LN_EPS) * gamma + beta


_GELU_C = math.sqrt(2.0 / math.pi)


def _gelu_tanh(x):
    # tanh-approximation GELU: one EUP tanh + a few FMAs; |err| << 1e-3 at these
    # pre-activation magnitudes.
    return 0.5 * x * (1.0 + jnp.tanh(_GELU_C * (x + 0.044715 * x * x * x)))


def _vit_layer_fused(h, w_ref, w2_ref, vec_ref, head_blk, l):
    """One ViTLayer on flattened [BS, H] f32 hidden states (all operands in VMEM)."""
    def vec(row, width=H):
        return vec_ref[l, row:row + 1, :width]          # [1, width] f32

    ln1_g, ln1_b = vec(ROW_LN1_G), vec(ROW_LN1_B)
    ln2_g, ln2_b = vec(ROW_LN2_G), vec(ROW_LN2_B)
    b_q, b_k, b_v = vec(ROW_BQ), vec(ROW_BK), vec(ROW_BV)
    b_o, b_2 = vec(ROW_BO), vec(ROW_B2)
    b_i = vec(ROW_BI, I)

    wqkv = w_ref[l, :, 0:QKV_W]                 # [H, 384] bf16 (Q pre-scaled)
    wo = w_ref[l, :, OFF_WO:OFF_WO + H]         # [H, H]   bf16
    wi = w_ref[l, :, OFF_WI:OFF_WI + I]         # [H, I]   bf16
    w2 = w2_ref[l]                              # [I, H]   bf16

    # layernorm_before + fused QKV projection (bf16 operands, f32 accumulation).
    ln1 = _layer_norm(h, ln1_g, ln1_b)
    qkv = jnp.dot(ln1.astype(jnp.bfloat16), wqkv,
                  preferred_element_type=jnp.float32)    # [BS, 384]
    q = qkv[:, OFF_Q:OFF_Q + H] + b_q           # lane-aligned slices (no rotates)
    k = qkv[:, OFF_K:OFF_K + H] + b_k
    v = qkv[:, OFF_V:OFF_V + H] + b_v

    # All-head attention without per-head slicing; one batch element at a time to
    # keep the [S,S,H] intermediates at ~8 vregs each (v5e vreg-pressure guard).
    ctx_parts = []
    for b in range(B):
        qr = q[b * S:(b + 1) * S, :]            # [S, H], vreg-aligned row slice
        kr = k[b * S:(b + 1) * S, :]
        vr = v[b * S:(b + 1) * S, :]
        qb = lax.broadcast_in_dim(qr, (S, S, H), (0, 2))
        kb = lax.broadcast_in_dim(kr, (S, S, H), (1, 2))
        prod = (qb * kb).astype(jnp.bfloat16)
        # scores[s,t,h] = sum_{h' in head(h)} prod[s,t,h']  (block-diag matmul)
        sc = jnp.dot(prod.reshape(S * S, H), head_blk,
                     preferred_element_type=jnp.float32).reshape(S, S, H)
        # softmax over the key axis (sublane-axis reduction)
        sc = sc - jnp.max(sc, axis=1, keepdims=True)
        e = jnp.exp(sc)
        p = e * pl.reciprocal(jnp.sum(e, axis=1, keepdims=True), approx=True)
        vb = lax.broadcast_in_dim(vr, (S, S, H), (1, 2))
        ctx_parts.append(jnp.sum(p * vb, axis=1))        # [S, H]
    ctx = jnp.concatenate(ctx_parts, axis=0)             # [BS, H]

    # ViTSelfOutput dense + first residual (dropout = identity in eval mode).
    h = jnp.dot(ctx.astype(jnp.bfloat16), wo,
                preferred_element_type=jnp.float32) + b_o + h

    # layernorm_after + ViTIntermediate (GELU on lane-dense [BS, I]) + ViTOutput.
    ln2 = _layer_norm(h, ln2_g, ln2_b)
    inter = _gelu_tanh(jnp.dot(ln2.astype(jnp.bfloat16), wi,
                               preferred_element_type=jnp.float32) + b_i)
    h = jnp.dot(inter.astype(jnp.bfloat16), w2,
                preferred_element_type=jnp.float32) + b_2 + h
    return h


# ------------------------------ Pallas kernel ---------------------------------
def vit_encoder_kernel(x_ref, w_ref, w2_ref, vec_ref, out_ref):
    # Host-precomputed block-diagonal head mask (exact 0/1 in bf16), stashed in the
    # weight-slab padding lanes; identical for every layer so read it once.
    head_blk = w_ref[0, :, OFF_HB:OFF_HB + H]            # [H, H] bf16
    h = x_ref[...].reshape(BS, H)                        # [2,8,32] -> [16,32]
    for l in range(L):                                   # static unroll: stack in VMEM
        h = _vit_layer_fused(h, w_ref, w2_ref, vec_ref, head_blk, l)
    out_ref[...] = h.reshape(B, S, H).astype(out_ref.dtype)


def vit_encoder(x, params):
    """x: [B, S, H] f32; params: 16 stacked per-layer arrays (see make_params)."""
    (ln1_g, ln1_b, wq, bq, wk, bk, wv, bv, wo, bo,
     ln2_g, ln2_b, wi, bi, w2, b2) = params

    scale = 1.0 / math.sqrt(HEAD_DIM)      # 1/sqrt(head_dim) folded into Q projection

    def lane_block(w):                      # pad last dim of [L, H, n] to 128 lanes
        return jnp.pad(w, ((0, 0), (0, 0), (0, 128 - w.shape[-1])))

    head_ids = jnp.arange(H) // HEAD_DIM
    head_blk = (head_ids[:, None] == head_ids[None, :]).astype(jnp.float32)
    head_blk = jnp.broadcast_to(head_blk, (L, H, H))

    # One lane-dense [L, 32, 768] bf16 weight slab; Q/K/V/Wo/Wi/head-mask each start
    # on a 128-lane boundary so every in-kernel slice is alignment-free.
    wslab = jnp.concatenate(
        [lane_block(wq * scale), lane_block(wk), lane_block(wv),
         lane_block(wo), wi, lane_block(head_blk)],
        axis=-1).astype(jnp.bfloat16)                    # [L, 32, 768]

    w2_slab = w2.astype(jnp.bfloat16)                    # [L, 128, 32]

    def vrow(v):                            # [L, 1, n] -> [L, 1, 128]
        return jnp.pad(v, ((0, 0), (0, 0), (0, VEC_W - v.shape[-1])))

    # All per-layer vectors (LN params + biases) packed into one [L, 16, 128] f32 slab.
    vecs = jnp.concatenate(
        [vrow(ln1_g), vrow(ln1_b), vrow(ln2_g), vrow(ln2_b),
         vrow(bq * scale), vrow(bk), vrow(bv), vrow(bo), vrow(bi), vrow(b2),
         jnp.zeros((L, VEC_ROWS - 10, VEC_W), jnp.float32)],
        axis=1)                                          # [L, 16, 128]

    vmem = pl.BlockSpec(memory_space=pltpu.MemorySpace.VMEM)  # whole array in VMEM
    return pl.pallas_call(
        vit_encoder_kernel,
        out_shape=jax.ShapeDtypeStruct((B, S, H), jnp.float32),
        in_specs=[vmem] * 4,
        out_specs=vmem,
    )(x, wslab, w2_slab, vecs)
    # TODO(synk): production ViT sizes (H=768, S>=197, L=12) need a layer/token grid
    # with streamed (single-buffered, bf16) FFN weights + explicit vmem_limit_bytes on
    # v7x (64 MiB VMEM), and a "parallel" token-tile axis to use both TensorCores.


# ------------------------- deterministic parameter init -----------------------
def make_params(key):
    ks = jax.random.split(key, 12)

    def w(k, shape):
        return 0.02 * jax.random.normal(k, shape, dtype=jnp.float32)

    return (
        jnp.ones((L, 1, H), jnp.float32),    # layernorm_before.weight
        jnp.zeros((L, 1, H), jnp.float32),   # layernorm_before.bias
        w(ks[0], (L, H, H)),                 # attention.query.weight  [in,out]
        w(ks[1], (L, 1, H)),                 # attention.query.bias
        w(ks[2], (L, H, H)),                 # attention.key.weight
        w(ks[3], (L, 1, H)),                 # attention.key.bias
        w(ks[4], (L, H, H)),                 # attention.value.weight
        w(ks[5], (L, 1, H)),                 # attention.value.bias
        w(ks[6], (L, H, H)),                 # attention.output.dense.weight
        w(ks[7], (L, 1, H)),                 # attention.output.dense.bias
        jnp.ones((L, 1, H), jnp.float32),    # layernorm_after.weight
        jnp.zeros((L, 1, H), jnp.float32),   # layernorm_after.bias
        w(ks[8], (L, H, I)),                 # intermediate.dense.weight
        w(ks[9], (L, 1, I)),                 # intermediate.dense.bias
        w(ks[10], (L, I, H)),                # output.dense.weight
        w(ks[11], (L, 1, H)),                # output.dense.bias
    )


# ------------------------------- pure-JAX reference ---------------------------
def _layer_norm_ref(x, gamma, beta):
    mean = jnp.mean(x, axis=-1, keepdims=True)
    var = jnp.mean(jnp.square(x - mean), axis=-1, keepdims=True)
    return (x - mean) * lax.rsqrt(var + LN_EPS) * gamma + beta


def _vit_layer_ref(h, p):
    (ln1_g, ln1_b, wq, bq, wk, bk, wv, bv, wo, bo,
     ln2_g, ln2_b, wi, bi, w2, b2) = p
    ln1 = _layer_norm_ref(h, ln1_g, ln1_b)
    q = jnp.einsum('bsh,hd->bsd', ln1, wq) + bq
    k = jnp.einsum('bsh,hd->bsd', ln1, wk) + bk
    v = jnp.einsum('bsh,hd->bsd', ln1, wv) + bv
    scale = 1.0 / math.sqrt(HEAD_DIM)
    ctx_heads = []
    for n in range(NUM_HEADS):
        sl = slice(n * HEAD_DIM, (n + 1) * HEAD_DIM)
        qh, kh, vh = q[:, :, sl], k[:, :, sl], v[:, :, sl]
        s = jnp.einsum('bqd,bkd->bqk', qh, kh) * scale
        probs = jax.nn.softmax(s, axis=-1)
        ctx_heads.append(jnp.einsum('bqk,bkd->bqd', probs, vh))
    ctx = jnp.concatenate(ctx_heads, axis=-1)
    h = jnp.einsum('bsh,hd->bsd', ctx, wo) + bo + h
    ln2 = _layer_norm_ref(h, ln2_g, ln2_b)
    pre = jnp.einsum('bsh,hi->bsi', ln2, wi) + bi
    inter = 0.5 * pre * (1.0 + lax.erf(pre * (1.0 / math.sqrt(2.0))))   # exact GELU
    return jnp.einsum('bsi,ih->bsh', inter, w2) + b2 + h


def vit_encoder_ref(x, params):
    h = x.astype(jnp.float32)
    for layer in range(L):
        h = _vit_layer_ref(h, tuple(p[layer] for p in params))
    return h


if __name__ == "__main__":
    key = jax.random.PRNGKey(0)
    kx, kp = jax.random.split(key)
    x = jax.random.normal(kx, (B, S, H), dtype=jnp.float32)
    params = make_params(kp)

    out = jax.block_until_ready(vit_encoder(x, params))
    ref = vit_encoder_ref(x, params)

    assert out.shape == (B, S, H), out.shape
    if not jnp.allclose(out, ref, atol=1e-3, rtol=1e-3):
        max_err = float(jnp.max(jnp.abs(out - ref)))
        raise AssertionError(
            f"Pallas output does not match JAX reference (max abs err {max_err})")

    print("KERNEL_OK")
</pallas_src>

<mosaic_0001>
module attributes {stable_mosaic.version = 11 : i64} {
  func.func @vit_encoder_kernel(%arg0: memref<2x8x32xf32, #tpu.memory_space<vmem>>, %arg1: memref<2x32x768xbf16, #tpu.memory_space<vmem>>, %arg2: memref<2x128x32xbf16, #tpu.memory_space<vmem>>, %arg3: memref<2x16x128xf32, #tpu.memory_space<vmem>>, %arg4: memref<2x8x32xf32, #tpu.memory_space<vmem>>) attributes {dimension_semantics = [], scalar_prefetch = 0 : i64, scratch_operands = 0 : i64, tpu.core_type = #tpu.core_type<tc>} {
    %c0 = arith.constant 0 : index
    %c0_0 = arith.constant 0 : index
    %c640 = arith.constant 640 : index
    %0 = vector.load %arg1[%c0, %c0_0, %c640] : memref<2x32x768xbf16, #tpu.memory_space<vmem>>, vector<1x32x32xbf16>
    %1 = vector.shape_cast %0 : vector<1x32x32xbf16> to vector<32x32xbf16>
    %c0_1 = arith.constant 0 : index
    %c0_2 = arith.constant 0 : index
    %c0_3 = arith.constant 0 : index
    %2 = vector.load %arg0[%c0_1, %c0_2, %c0_3] : memref<2x8x32xf32, #tpu.memory_space<vmem>>, vector<2x8x32xf32>
    %3 = vector.shape_cast %2 : vector<2x8x32xf32> to vector<16x32xf32>
    %c0_4 = arith.constant 0 : index
    %c0_5 = arith.constant 0 : index
    %c0_6 = arith.constant 0 : index
    %4 = vector.load %arg3[%c0_4, %c0_5, %c0_6] : memref<2x16x128xf32, #tpu.memory_space<vmem>>, vector<1x1x32xf32>
    %5 = vector.shape_cast %4 : vector<1x1x32xf32> to vector<1x32xf32>
    %c0_7 = arith.constant 0 : index
    %c1 = arith.constant 1 : index
    %c0_8 = arith.constant 0 : index
    %6 = vector.load %arg3[%c0_7, %c1, %c0_8] : memref<2x16x128xf32, #tpu.memory_space<vmem>>, vector<1x1x32xf32>
    %7 = vector.shape_cast %6 : vector<1x1x32xf32> to vector<1x32xf32>
    %c0_9 = arith.constant 0 : index
    %c2 = arith.constant 2 : index
    %c0_10 = arith.constant 0 : index
    %8 = vector.load %arg3[%c0_9, %c2, %c0_10] : memref<2x16x128xf32, #tpu.memory_space<vmem>>, vector<1x1x32xf32>
    %9 = vector.shape_cast %8 : vector<1x1x32xf32> to vector<1x32xf32>
    %c0_11 = arith.constant 0 : index
    %c3 = arith.constant 3 : index
    %c0_12 = arith.constant 0 : index
    %10 = vector.load %arg3[%c0_11, %c3, %c0_12] : memref<2x16x128xf32, #tpu.memory_space<vmem>>, vector<1x1x32xf32>
    %11 = vector.shape_cast %10 : vector<1x1x32xf32> to vector<1x32xf32>
    %c0_13 = arith.constant 0 : index
    %c4 = arith.constant 4 : index
    %c0_14 = arith.constant 0 : index
    %12 = vector.load %arg3[%c0_13, %c4, %c0_14] : memref<2x16x128xf32, #tpu.memory_space<vmem>>, vector<1x1x32xf32>
    %13 = vector.shape_cast %12 : vector<1x1x32xf32> to vector<1x32xf32>
    %c0_15 = arith.constant 0 : index
    %c5 = arith.constant 5 : index
    %c0_16 = arith.constant 0 : index
    %14 = vector.load %arg3[%c0_15, %c5, %c0_16] : memref<2x16x128xf32, #tpu.memory_space<vmem>>, vector<1x1x32xf32>
    %15 = vector.shape_cast %14 : vector<1x1x32xf32> to vector<1x32xf32>
    %c0_17 = arith.constant 0 : index
    %c6 = arith.constant 6 : index
    %c0_18 = arith.constant 0 : index
    %16 = vector.load %arg3[%c0_17, %c6, %c0_18] : memref<2x16x128xf32, #tpu.memory_space<vmem>>, vector<1x1x32xf32>
    %17 = vector.shape_cast %16 : vector<1x1x32xf32> to vector<1x32xf32>
    %c0_19 = arith.constant 0 : index
    %c7 = arith.constant 7 : index
    %c0_20 = arith.constant 0 : index
    %18 = vector.load %arg3[%c0_19, %c7, %c0_20] : memref<2x16x128xf32, #tpu.memory_space<vmem>>, vector<1x1x32xf32>
    %19 = vector.shape_cast %18 : vector<1x1x32xf32> to vector<1x32xf32>
    %c0_21 = arith.constant 0 : index
    %c9 = arith.constant 9 : index
    %c0_22 = arith.constant 0 : index
    %20 = vector.load %arg3[%c0_21, %c9, %c0_22] : memref<2x16x128xf32, #tpu.memory_space<vmem>>, vector<1x1x32xf32>
    %21 = vector.shape_cast %20 : vector<1x1x32xf32> to vector<1x32xf32>
    %c0_23 = arith.constant 0 : index
    %c8 = arith.constant 8 : index
    %c0_24 = arith.constant 0 : index
    %22 = vector.load %arg3[%c0_23, %c8, %c0_24] : memref<2x16x128xf32, #tpu.memory_space<vmem>>, vector<1x1x128xf32>
    %23 = vector.shape_cast %22 : vector<1x1x128xf32> to vector<1x128xf32>
    %c0_25 = arith.constant 0 : index
    %c0_26 = arith.constant 0 : index
    %c0_27 = arith.constant 0 : index
    %24 = vector.load %arg1[%c0_25, %c0_26, %c0_27] : memref<2x32x768xbf16, #tpu.memory_space<vmem>>, vector<1x32x384xbf16>
    %25 = vector.shape_cast %24 : vector<1x32x384xbf16> to vector<32x384xbf16>
    %c0_28 = arith.constant 0 : index
    %c0_29 = arith.constant 0 : index
    %c384 = arith.constant 384 : index
    %26 = vector.load %arg1[%c0_28, %c0_29, %c384] : memref<2x32x768xbf16, #tpu.memory_space<vmem>>, vector<1x32x32xbf16>
    %27 = vector.shape_cast %26 : vector<1x32x32xbf16> to vector<32x32xbf16>
    %c0_30 = arith.constant 0 : index
    %c0_31 = arith.constant 0 : index
    %c512 = arith.constant 512 : index
    %28 = vector.load %arg1[%c0_30, %c0_31, %c512] : memref<2x32x768xbf16, #tpu.memory_space<vmem>>, vector<1x32x128xbf16>
    %29 = vector.shape_cast %28 : vector<1x32x128xbf16> to vector<32x128xbf16>
    %c0_32 = arith.constant 0 : index
    %c0_33 = arith.constant 0 : index
    %c0_34 = arith.constant 0 : index
    %30 = vector.load %arg2[%c0_32, %c0_33, %c0_34] : memref<2x128x32xbf16, #tpu.memory_space<vmem>>, vector<1x128x32xbf16>
    %31 = vector.shape_cast %30 : vector<1x128x32xbf16> to vector<128x32xbf16>
    %cst = arith.constant dense<0.000000e+00> : vector<16xf32>
    %32 = vector.multi_reduction <add>, %3, %cst [1] : vector<16x32xf32> to vector<16xf32>
    %33 = vector.shape_cast %32 : vector<16xf32> to vector<16x1xf32>
    %cst_35 = arith.constant 3.200000e+01 : f32
    %34 = vector.broadcast %cst_35 : f32 to vector<16x1xf32>
    %35 = arith.divf %33, %34 : vector<16x1xf32>
    %36 = arith.mulf %3, %3 : vector<16x32xf32>
    %cst_36 = arith.constant dense<0.000000e+00> : vector<16xf32>
    %37 = vector.multi_reduction <add>, %36, %cst_36 [1] : vector<16x32xf32> to vector<16xf32>
    %38 = vector.shape_cast %37 : vector<16xf32> to vector<16x1xf32>
    %cst_37 = arith.constant 3.200000e+01 : f32
    %39 = vector.broadcast %cst_37 : f32 to vector<16x1xf32>
    %40 = arith.divf %38, %39 : vector<16x1xf32>
    %41 = arith.mulf %35, %35 : vector<16x1xf32>
    %42 = arith.subf %40, %41 : vector<16x1xf32>
    %43 = vector.broadcast %35 : vector<16x1xf32> to vector<16x32xf32>
    %44 = arith.subf %3, %43 : vector<16x32xf32>
    %cst_38 = arith.constant 9.99999996E-13 : f32
    %45 = vector.broadcast %cst_38 : f32 to vector<16x1xf32>
    %46 = arith.addf %42, %45 : vector<16x1xf32>
    %47 = math.rsqrt %46 : vector<16x1xf32>
    %48 = vector.broadcast %47 : vector<16x1xf32> to vector<16x32xf32>
    %49 = arith.mulf %44, %48 : vector<16x32xf32>
    %50 = vector.broadcast %5 : vector<1x32xf32> to vector<16x32xf32>
    %51 = arith.mulf %49, %50 : vector<16x32xf32>
    %52 = vector.broadcast %7 : vector<1x32xf32> to vector<16x32xf32>
    %53 = arith.addf %51, %52 : vector<16x32xf32>
    %54 = arith.truncf %53 : vector<16x32xf32> to vector<16x32xbf16>
    %cst_39 = arith.constant dense<0.000000e+00> : vector<16x384xf32>
    %55 = tpu.matmul %54, %25, %cst_39 {dimension_numbers = #tpu.dot_dimension_numbers<[1], [0], [0], [1], [0, 0, 1, 1], [], []>} : vector<16x32xbf16>, vector<32x384xbf16>, vector<16x384xf32> -> vector<16x384xf32>
    %56 = vector.extract_strided_slice %55 {offsets = [0, 0], sizes = [16, 32], strides = [1, 1]} : vector<16x384xf32> to vector<16x32xf32>
    %57 = vector.broadcast %13 : vector<1x32xf32> to vector<16x32xf32>
    %58 = arith.addf %56, %57 : vector<16x32xf32>
    %59 = vector.extract_strided_slice %55 {offsets = [0, 128], sizes = [16, 32], strides = [1, 1]} : vector<16x384xf32> to vector<16x32xf32>
    %60 = vector.broadcast %15 : vector<1x32xf32> to vector<16x32xf32>
    %61 = arith.addf %59, %60 : vector<16x32xf32>
    %62 = vector.extract_strided_slice %55 {offsets = [0, 256], sizes = [16, 32], strides = [1, 1]} : vector<16x384xf32> to vector<16x32xf32>
    %63 = vector.broadcast %17 : vector<1x32xf32> to vector<16x32xf32>
    %64 = arith.addf %62, %63 : vector<16x32xf32>
    %65 = vector.extract_strided_slice %58 {offsets = [0, 0], sizes = [8, 32], strides = [1, 1]} : vector<16x32xf32> to vector<8x32xf32>
    %66 = vector.extract_strided_slice %61 {offsets = [0, 0], sizes = [8, 32], strides = [1, 1]} : vector<16x32xf32> to vector<8x32xf32>
    %67 = vector.extract_strided_slice %64 {offsets = [0, 0], sizes = [8, 32], strides = [1, 1]} : vector<16x32xf32> to vector<8x32xf32>
    %68 = vector.shape_cast %65 : vector<8x32xf32> to vector<8x1x32xf32>
    %69 = vector.broadcast %68 : vector<8x1x32xf32> to vector<8x8x32xf32>
    %70 = vector.shape_cast %66 : vector<8x32xf32> to vector<1x8x32xf32>
    %71 = vector.broadcast %70 : vector<1x8x32xf32> to vector<8x8x32xf32>
    %72 = arith.mulf %69, %71 : vector<8x8x32xf32>
    %73 = arith.truncf %72 : vector<8x8x32xf32> to vector<8x8x32xbf16>
    %74 = vector.shape_cast %73 : vector<8x8x32xbf16> to vector<64x32xbf16>
    %cst_40 = arith.constant dense<0.000000e+00> : vector<64x32xf32>
    %75 = tpu.matmul %74, %1, %cst_40 {dimension_numbers = #tpu.dot_dimension_numbers<[1], [0], [0], [1], [0, 0, 1, 1], [], []>} : vector<64x32xbf16>, vector<32x32xbf16>, vector<64x32xf32> -> vector<64x32xf32>
    %76 = vector.shape_cast %75 : vector<64x32xf32> to vector<8x8x32xf32>
    %cst_41 = arith.constant dense<0xFF800000> : vector<8x32xf32>
    %77 = vector.multi_reduction <maximumf>, %76, %cst_41 [1] : vector<8x8x32xf32> to vector<8x32xf32>
    %78 = vector.shape_cast %77 : vector<8x32xf32> to vector<8x1x32xf32>
    %79 = vector.broadcast %78 : vector<8x1x32xf32> to vector<8x8x32xf32>
    %80 = arith.subf %76, %79 : vector<8x8x32xf32>
    %81 = math.exp %80 : vector<8x8x32xf32>
    %cst_42 = arith.constant dense<0.000000e+00> : vector<8x32xf32>
    %82 = vector.multi_reduction <add>, %81, %cst_42 [1] : vector<8x8x32xf32> to vector<8x32xf32>
    %83 = vector.shape_cast %82 : vector<8x32xf32> to vector<8x1x32xf32>
    %84 = tpu.reciprocal %83 {approx = true} : vector<8x1x32xf32> -> vector<8x1x32xf32>
    %85 = vector.broadcast %84 : vector<8x1x32xf32> to vector<8x8x32xf32>
    %86 = arith.mulf %81, %85 : vector<8x8x32xf32>
    %87 = vector.shape_cast %67 : vector<8x32xf32> to vector<1x8x32xf32>
    %88 = vector.broadcast %87 : vector<1x8x32xf32> to vector<8x8x32xf32>
    %89 = arith.mulf %86, %88 : vector<8x8x32xf32>
    %cst_43 = arith.constant dense<0.000000e+00> : vector<8x32xf32>
    %90 = vector.multi_reduction <add>, %89, %cst_43 [1] : vector<8x8x32xf32> to vector<8x32xf32>
    %91 = vector.extract_strided_slice %58 {offsets = [8, 0], sizes = [8, 32], strides = [1, 1]} : vector<16x32xf32> to vector<8x32xf32>
    %92 = vector.extract_strided_slice %61 {offsets = [8, 0], sizes = [8, 32], strides = [1, 1]} : vector<16x32xf32> to vector<8x32xf32>
    %93 = vector.extract_strided_slice %64 {offsets = [8, 0], sizes = [8, 32], strides = [1, 1]} : vector<16x32xf32> to vector<8x32xf32>
    %94 = vector.shape_cast %91 : vector<8x32xf32> to vector<8x1x32xf32>
    %95 = vector.broadcast %94 : vector<8x1x32xf32> to vector<8x8x32xf32>
    %96 = vector.shape_cast %92 : vector<8x32xf32> to vector<1x8x32xf32>
    %97 = vector.broadcast %96 : vector<1x8x32xf32> to vector<8x8x32xf32>
    %98 = arith.mulf %95, %97 : vector<8x8x32xf32>
    %99 = arith.truncf %98 : vector<8x8x32xf32> to vector<8x8x32xbf16>
    %100 = vector.shape_cast %99 : vector<8x8x32xbf16> to vector<64x32xbf16>
    %cst_44 = arith.constant dense<0.000000e+00> : vector<64x32xf32>
    %101 = tpu.matmul %100, %1, %cst_44 {dimension_numbers = #tpu.dot_dimension_numbers<[1], [0], [0], [1], [0, 0, 1, 1], [], []>} : vector<64x32xbf16>, vector<32x32xbf16>, vector<64x32xf32> -> vector<64x32xf32>
    %102 = vector.shape_cast %101 : vector<64x32xf32> to vector<8x8x32xf32>
    %cst_45 = arith.constant dense<0xFF800000> : vector<8x32xf32>
    %103 = vector.multi_reduction <maximumf>, %102, %cst_45 [1] : vector<8x8x32xf32> to vector<8x32xf32>
    %104 = vector.shape_cast %103 : vector<8x32xf32> to vector<8x1x32xf32>
    %105 = vector.broadcast %104 : vector<8x1x32xf32> to vector<8x8x32xf32>
    %106 = arith.subf %102, %105 : vector<8x8x32xf32>
    %107 = math.exp %106 : vector<8x8x32xf32>
    %cst_46 = arith.constant dense<0.000000e+00> : vector<8x32xf32>
    %108 = vector.multi_reduction <add>, %107, %cst_46 [1] : vector<8x8x32xf32> to vector<8x32xf32>
    %109 = vector.shape_cast %108 : vector<8x32xf32> to vector<8x1x32xf32>
    %110 = tpu.reciprocal %109 {approx = true} : vector<8x1x32xf32> -> vector<8x1x32xf32>
    %111 = vector.broadcast %110 : vector<8x1x32xf32> to vector<8x8x32xf32>
    %112 = arith.mulf %107, %111 : vector<8x8x32xf32>
    %113 = vector.shape_cast %93 : vector<8x32xf32> to vector<1x8x32xf32>
    %114 = vector.broadcast %113 : vector<1x8x32xf32> to vector<8x8x32xf32>
    %115 = arith.mulf %112, %114 : vector<8x8x32xf32>
    %cst_47 = arith.constant dense<0.000000e+00> : vector<8x32xf32>
    %116 = vector.multi_reduction <add>, %115, %cst_47 [1] : vector<8x8x32xf32> to vector<8x32xf32>
    %117 = tpu.concatenate %90, %116 in 0 : vector<8x32xf32>, vector<8x32xf32> -> vector<16x32xf32>
    %118 = arith.truncf %117 : vector<16x32xf32> to vector<16x32xbf16>
    %cst_48 = arith.constant dense<0.000000e+00> : vector<16x32xf32>
    %119 = tpu.matmul %118, %27, %cst_48 {dimension_numbers = #tpu.dot_dimension_numbers<[1], [0], [0], [1], [0, 0, 1, 1], [], []>} : vector<16x32xbf16>, vector<32x32xbf16>, vector<16x32xf32> -> vector<16x32xf32>
    %120 = vector.broadcast %19 : vector<1x32xf32> to vector<16x32xf32>
    %121 = arith.addf %119, %120 : vector<16x32xf32>
    %122 = arith.addf %121, %3 : vector<16x32xf32>
    %cst_49 = arith.constant dense<0.000000e+00> : vector<16xf32>
    %123 = vector.multi_reduction <add>, %122, %cst_49 [1] : vector<16x32xf32> to vector<16xf32>
    %124 = vector.shape_cast %123 : vector<16xf32> to vector<16x1xf32>
    %cst_50 = arith.constant 3.200000e+01 : f32
    %125 = vector.broadcast %cst_50 : f32 to vector<16x1xf32>
    %126 = arith.divf %124, %125 : vector<16x1xf32>
    %127 = arith.mulf %122, %122 : vector<16x32xf32>
    %cst_51 = arith.constant dense<0.000000e+00> : vector<16xf32>
    %128 = vector.multi_reduction <add>, %127, %cst_51 [1] : vector<16x32xf32> to vector<16xf32>
    %129 = vector.shape_cast %128 : vector<16xf32> to vector<16x1xf32>
    %cst_52 = arith.constant 3.200000e+01 : f32
    %130 = vector.broadcast %cst_52 : f32 to vector<16x1xf32>
    %131 = arith.divf %129, %130 : vector<16x1xf32>
    %132 = arith.mulf %126, %126 : vector<16x1xf32>
    %133 = arith.subf %131, %132 : vector<16x1xf32>
    %134 = vector.broadcast %126 : vector<16x1xf32> to vector<16x32xf32>
    %135 = arith.subf %122, %134 : vector<16x32xf32>
    %cst_53 = arith.constant 9.99999996E-13 : f32
    %136 = vector.broadcast %cst_53 : f32 to vector<16x1xf32>
    %137 = arith.addf %133, %136 : vector<16x1xf32>
    %138 = math.rsqrt %137 : vector<16x1xf32>
    %139 = vector.broadcast %138 : vector<16x1xf32> to vector<16x32xf32>
    %140 = arith.mulf %135, %139 : vector<16x32xf32>
    %141 = vector.broadcast %9 : vector<1x32xf32> to vector<16x32xf32>
    %142 = arith.mulf %140, %141 : vector<16x32xf32>
    %143 = vector.broadcast %11 : vector<1x32xf32> to vector<16x32xf32>
    %144 = arith.addf %142, %143 : vector<16x32xf32>
    %145 = arith.truncf %144 : vector<16x32xf32> to vector<16x32xbf16>
    %cst_54 = arith.constant dense<0.000000e+00> : vector<16x128xf32>
    %146 = tpu.matmul %145, %29, %cst_54 {dimension_numbers = #tpu.dot_dimension_numbers<[1], [0], [0], [1], [0, 0, 1, 1], [], []>} : vector<16x32xbf16>, vector<32x128xbf16>, vector<16x128xf32> -> vector<16x128xf32>
    %147 = vector.broadcast %23 : vector<1x128xf32> to vector<16x128xf32>
    %148 = arith.addf %146, %147 : vector<16x128xf32>
    %cst_55 = arith.constant 5.000000e-01 : f32
    %149 = vector.broadcast %cst_55 : f32 to vector<16x128xf32>
    %150 = arith.mulf %149, %148 : vector<16x128xf32>
    %cst_56 = arith.constant 4.471500e-02 : f32
    %151 = vector.broadcast %cst_56 : f32 to vector<16x128xf32>
    %152 = arith.mulf %151, %148 : vector<16x128xf32>
    %153 = arith.mulf %152, %148 : vector<16x128xf32>
    %154 = arith.mulf %153, %148 : vector<16x128xf32>
    %155 = arith.addf %148, %154 : vector<16x128xf32>
    %cst_57 = arith.constant 0.797884583 : f32
    %156 = vector.broadcast %cst_57 : f32 to vector<16x128xf32>
    %157 = arith.mulf %156, %155 : vector<16x128xf32>
    %158 = math.tanh %157 : vector<16x128xf32>
    %cst_58 = arith.constant 1.000000e+00 : f32
    %159 = vector.broadcast %cst_58 : f32 to vector<16x128xf32>
    %160 = arith.addf %159, %158 : vector<16x128xf32>
    %161 = arith.mulf %150, %160 : vector<16x128xf32>
    %162 = arith.truncf %161 : vector<16x128xf32> to vector<16x128xbf16>
    %cst_59 = arith.constant dense<0.000000e+00> : vector<16x32xf32>
    %163 = tpu.matmul %162, %31, %cst_59 {dimension_numbers = #tpu.dot_dimension_numbers<[1], [0], [0], [1], [0, 0, 1, 1], [], []>} : vector<16x128xbf16>, vector<128x32xbf16>, vector<16x32xf32> -> vector<16x32xf32>
    %164 = vector.broadcast %21 : vector<1x32xf32> to vector<16x32xf32>
    %165 = arith.addf %163, %164 : vector<16x32xf32>
    %166 = arith.addf %165, %122 : vector<16x32xf32>
    %c1_60 = arith.constant 1 : index
    %c0_61 = arith.constant 0 : index
    %c0_62 = arith.constant 0 : index
    %167 = vector.load %arg3[%c1_60, %c0_61, %c0_62] : memref<2x16x128xf32, #tpu.memory_space<vmem>>, vector<1x1x32xf32>
    %168 = vector.shape_cast %167 : vector<1x1x32xf32> to vector<1x32xf32>
    %c1_63 = arith.constant 1 : index
    %c1_64 = arith.constant 1 : index
    %c0_65 = arith.constant 0 : index
    %169 = vector.load %arg3[%c1_63, %c1_64, %c0_65] : memref<2x16x128xf32, #tpu.memory_space<vmem>>, vector<1x1x32xf32>
    %170 = vector.shape_cast %169 : vector<1x1x32xf32> to vector<1x32xf32>
    %c1_66 = arith.constant 1 : index
    %c2_67 = arith.constant 2 : index
    %c0_68 = arith.constant 0 : index
    %171 = vector.load %arg3[%c1_66, %c2_67, %c0_68] : memref<2x16x128xf32, #tpu.memory_space<vmem>>, vector<1x1x32xf32>
    %172 = vector.shape_cast %171 : vector<1x1x32xf32> to vector<1x32xf32>
    %c1_69 = arith.constant 1 : index
    %c3_70 = arith.constant 3 : index
    %c0_71 = arith.constant 0 : index
    %173 = vector.load %arg3[%c1_69, %c3_70, %c0_71] : memref<2x16x128xf32, #tpu.memory_space<vmem>>, vector<1x1x32xf32>
    %174 = vector.shape_cast %173 : vector<1x1x32xf32> to vector<1x32xf32>
    %c1_72 = arith.constant 1 : index
    %c4_73 = arith.constant 4 : index
    %c0_74 = arith.constant 0 : index
    %175 = vector.load %arg3[%c1_72, %c4_73, %c0_74] : memref<2x16x128xf32, #tpu.memory_space<vmem>>, vector<1x1x32xf32>
    %176 = vector.shape_cast %175 : vector<1x1x32xf32> to vector<1x32xf32>
    %c1_75 = arith.constant 1 : index
    %c5_76 = arith.constant 5 : index
    %c0_77 = arith.constant 0 : index
    %177 = vector.load %arg3[%c1_75, %c5_76, %c0_77] : memref<2x16x128xf32, #tpu.memory_space<vmem>>, vector<1x1x32xf32>
    %178 = vector.shape_cast %177 : vector<1x1x32xf32> to vector<1x32xf32>
    %c1_78 = arith.constant 1 : index
    %c6_79 = arith.constant 6 : index
    %c0_80 = arith.constant 0 : index
    %179 = vector.load %arg3[%c1_78, %c6_79, %c0_80] : memref<2x16x128xf32, #tpu.memory_space<vmem>>, vector<1x1x32xf32>
    %180 = vector.shape_cast %179 : vector<1x1x32xf32> to vector<1x32xf32>
    %c1_81 = arith.constant 1 : index
    %c7_82 = arith.constant 7 : index
    %c0_83 = arith.constant 0 : index
    %181 = vector.load %arg3[%c1_81, %c7_82, %c0_83] : memref<2x16x128xf32, #tpu.memory_space<vmem>>, vector<1x1x32xf32>
    %182 = vector.shape_cast %181 : vector<1x1x32xf32> to vector<1x32xf32>
    %c1_84 = arith.constant 1 : index
    %c9_85 = arith.constant 9 : index
    %c0_86 = arith.constant 0 : index
    %183 = vector.load %arg3[%c1_84, %c9_85, %c0_86] : memref<2x16x128xf32, #tpu.memory_space<vmem>>, vector<1x1x32xf32>
    %184 = vector.shape_cast %183 : vector<1x1x32xf32> to vector<1x32xf32>
    %c1_87 = arith.constant 1 : index
    %c8_88 = arith.constant 8 : index
    %c0_89 = arith.constant 0 : index
    %185 = vector.load %arg3[%c1_87, %c8_88, %c0_89] : memref<2x16x128xf32, #tpu.memory_space<vmem>>, vector<1x1x128xf32>
    %186 = vector.shape_cast %185 : vector<1x1x128xf32> to vector<1x128xf32>
    %c1_90 = arith.constant 1 : index
    %c0_91 = arith.constant 0 : index
    %c0_92 = arith.constant 0 : index
    %187 = vector.load %arg1[%c1_90, %c0_91, %c0_92] : memref<2x32x768xbf16, #tpu.memory_space<vmem>>, vector<1x32x384xbf16>
    %188 = vector.shape_cast %187 : vector<1x32x384xbf16> to vector<32x384xbf16>
    %c1_93 = arith.constant 1 : index
    %c0_94 = arith.constant 0 : index
    %c384_95 = arith.constant 384 : index
    %189 = vector.load %arg1[%c1_93, %c0_94, %c384_95] : memref<2x32x768xbf16, #tpu.memory_space<vmem>>, vector<1x32x32xbf16>
    %190 = vector.shape_cast %189 : vector<1x32x32xbf16> to vector<32x32xbf16>
    %c1_96 = arith.constant 1 : index
    %c0_97 = arith.constant 0 : index
    %c512_98 = arith.constant 512 : index
    %191 = vector.load %arg1[%c1_96, %c0_97, %c512_98] : memref<2x32x768xbf16, #tpu.memory_space<vmem>>, vector<1x32x128xbf16>
    %192 = vector.shape_cast %191 : vector<1x32x128xbf16> to vector<32x128xbf16>
    %c1_99 = arith.constant 1 : index
    %c0_100 = arith.constant 0 : index
    %c0_101 = arith.constant 0 : index
    %193 = vector.load %arg2[%c1_99, %c0_100, %c0_101] : memref<2x128x32xbf16, #tpu.memory_space<vmem>>, vector<1x128x32xbf16>
    %194 = vector.shape_cast %193 : vector<1x128x32xbf16> to vector<128x32xbf16>
    %cst_102 = arith.constant dense<0.000000e+00> : vector<16xf32>
    %195 = vector.multi_reduction <add>, %166, %cst_102 [1] : vector<16x32xf32> to vector<16xf32>
    %196 = vector.shape_cast %195 : vector<16xf32> to vector<16x1xf32>
    %cst_103 = arith.constant 3.200000e+01 : f32
    %197 = vector.broadcast %cst_103 : f32 to vector<16x1xf32>
    %198 = arith.divf %196, %197 : vector<16x1xf32>
    %199 = arith.mulf %166, %166 : vector<16x32xf32>
    %cst_104 = arith.constant dense<0.000000e+00> : vector<16xf32>
    %200 = vector.multi_reduction <add>, %199, %cst_104 [1] : vector<16x32xf32> to vector<16xf32>
    %201 = vector.shape_cast %200 : vector<16xf32> to vector<16x1xf32>
    %cst_105 = arith.constant 3.200000e+01 : f32
    %202 = vector.broadcast %cst_105 : f32 to vector<16x1xf32>
    %203 = arith.divf %201, %202 : vector<16x1xf32>
    %204 = arith.mulf %198, %198 : vector<16x1xf32>
    %205 = arith.subf %203, %204 : vector<16x1xf32>
    %206 = vector.broadcast %198 : vector<16x1xf32> to vector<16x32xf32>
    %207 = arith.subf %166, %206 : vector<16x32xf32>
    %cst_106 = arith.constant 9.99999996E-13 : f32
    %208 = vector.broadcast %cst_106 : f32 to vector<16x1xf32>
    %209 = arith.addf %205, %208 : vector<16x1xf32>
    %210 = math.rsqrt %209 : vector<16x1xf32>
    %211 = vector.broadcast %210 : vector<16x1xf32> to vector<16x32xf32>
    %212 = arith.mulf %207, %211 : vector<16x32xf32>
    %213 = vector.broadcast %168 : vector<1x32xf32> to vector<16x32xf32>
    %214 = arith.mulf %212, %213 : vector<16x32xf32>
    %215 = vector.broadcast %170 : vector<1x32xf32> to vector<16x32xf32>
    %216 = arith.addf %214, %215 : vector<16x32xf32>
    %217 = arith.truncf %216 : vector<16x32xf32> to vector<16x32xbf16>
    %cst_107 = arith.constant dense<0.000000e+00> : vector<16x384xf32>
    %218 = tpu.matmul %217, %188, %cst_107 {dimension_numbers = #tpu.dot_dimension_numbers<[1], [0], [0], [1], [0, 0, 1, 1], [], []>} : vector<16x32xbf16>, vector<32x384xbf16>, vector<16x384xf32> -> vector<16x384xf32>
    %219 = vector.extract_strided_slice %218 {offsets = [0, 0], sizes = [16, 32], strides = [1, 1]} : vector<16x384xf32> to vector<16x32xf32>
    %220 = vector.broadcast %176 : vector<1x32xf32> to vector<16x32xf32>
    %221 = arith.addf %219, %220 : vector<16x32xf32>
    %222 = vector.extract_strided_slice %218 {offsets = [0, 128], sizes = [16, 32], strides = [1, 1]} : vector<16x384xf32> to vector<16x32xf32>
    %223 = vector.broadcast %178 : vector<1x32xf32> to vector<16x32xf32>
    %224 = arith.addf %222, %223 : vector<16x32xf32>
    %225 = vector.extract_strided_slice %218 {offsets = [0, 256], sizes = [16, 32], strides = [1, 1]} : vector<16x384xf32> to vector<16x32xf32>
    %226 = vector.broadcast %180 : vector<1x32xf32> to vector<16x32xf32>
    %227 = arith.addf %225, %226 : vector<16x32xf32>
    %228 = vector.extract_strided_slice %221 {offsets = [0, 0], sizes = [8, 32], strides = [1, 1]} : vector<16x32xf32> to vector<8x32xf32>
    %229 = vector.extract_strided_slice %224 {offsets = [0, 0], sizes = [8, 32], strides = [1, 1]} : vector<16x32xf32> to vector<8x32xf32>
    %230 = vector.extract_strided_slice %227 {offsets = [0, 0], sizes = [8, 32], strides = [1, 1]} : vector<16x32xf32> to vector<8x32xf32>
    %231 = vector.shape_cast %228 : vector<8x32xf32> to vector<8x1x32xf32>
    %232 = vector.broadcast %231 : vector<8x1x32xf32> to vector<8x8x32xf32>
    %233 = vector.shape_cast %229 : vector<8x32xf32> to vector<1x8x32xf32>
    %234 = vector.broadcast %233 : vector<1x8x32xf32> to vector<8x8x32xf32>
    %235 = arith.mulf %232, %234 : vector<8x8x32xf32>
    %236 = arith.truncf %235 : vector<8x8x32xf32> to vector<8x8x32xbf16>
    %237 = vector.shape_cast %236 : vector<8x8x32xbf16> to vector<64x32xbf16>
    %cst_108 = arith.constant dense<0.000000e+00> : vector<64x32xf32>
    %238 = tpu.matmul %237, %1, %cst_108 {dimension_numbers = #tpu.dot_dimension_numbers<[1], [0], [0], [1], [0, 0, 1, 1], [], []>} : vector<64x32xbf16>, vector<32x32xbf16>, vector<64x32xf32> -> vector<64x32xf32>
    %239 = vector.shape_cast %238 : vector<64x32xf32> to vector<8x8x32xf32>
    %cst_109 = arith.constant dense<0xFF800000> : vector<8x32xf32>
    %240 = vector.multi_reduction <maximumf>, %239, %cst_109 [1] : vector<8x8x32xf32> to vector<8x32xf32>
    %241 = vector.shape_cast %240 : vector<8x32xf32> to vector<8x1x32xf32>
    %242 = vector.broadcast %241 : vector<8x1x32xf32> to vector<8x8x32xf32>
    %243 = arith.subf %239, %242 : vector<8x8x32xf32>
    %244 = math.exp %243 : vector<8x8x32xf32>
    %cst_110 = arith.constant dense<0.000000e+00> : vector<8x32xf32>
    %245 = vector.multi_reduction <add>, %244, %cst_110 [1] : vector<8x8x32xf32> to vector<8x32xf32>
    %246 = vector.shape_cast %245 : vector<8x32xf32> to vector<8x1x32xf32>
    %247 = tpu.reciprocal %246 {approx = true} : vector<8x1x32xf32> -> vector<8x1x32xf32>
    %248 = vector.broadcast %247 : vector<8x1x32xf32> to vector<8x8x32xf32>
    %249 = arith.mulf %244, %248 : vector<8x8x32xf32>
    %250 = vector.shape_cast %230 : vector<8x32xf32> to vector<1x8x32xf32>
    %251 = vector.broadcast %250 : vector<1x8x32xf32> to vector<8x8x32xf32>
    %252 = arith.mulf %249, %251 : vector<8x8x32xf32>
    %cst_111 = arith.constant dense<0.000000e+00> : vector<8x32xf32>
    %253 = vector.multi_reduction <add>, %252, %cst_111 [1] : vector<8x8x32xf32> to vector<8x32xf32>
    %254 = vector.extract_strided_slice %221 {offsets = [8, 0], sizes = [8, 32], strides = [1, 1]} : vector<16x32xf32> to vector<8x32xf32>
    %255 = vector.extract_strided_slice %224 {offsets = [8, 0], sizes = [8, 32], strides = [1, 1]} : vector<16x32xf32> to vector<8x32xf32>
    %256 = vector.extract_strided_slice %227 {offsets = [8, 0], sizes = [8, 32], strides = [1, 1]} : vector<16x32xf32> to vector<8x32xf32>
    %257 = vector.shape_cast %254 : vector<8x32xf32> to vector<8x1x32xf32>
    %258 = vector.broadcast %257 : vector<8x1x32xf32> to vector<8x8x32xf32>
    %259 = vector.shape_cast %255 : vector<8x32xf32> to vector<1x8x32xf32>
    %260 = vector.broadcast %259 : vector<1x8x32xf32> to vector<8x8x32xf32>
    %261 = arith.mulf %258, %260 : vector<8x8x32xf32>
    %262 = arith.truncf %261 : vector<8x8x32xf32> to vector<8x8x32xbf16>
    %263 = vector.shape_cast %262 : vector<8x8x32xbf16> to vector<64x32xbf16>
    %cst_112 = arith.constant dense<0.000000e+00> : vector<64x32xf32>
    %264 = tpu.matmul %263, %1, %cst_112 {dimension_numbers = #tpu.dot_dimension_numbers<[1], [0], [0], [1], [0, 0, 1, 1], [], []>} : vector<64x32xbf16>, vector<32x32xbf16>, vector<64x32xf32> -> vector<64x32xf32>
    %265 = vector.shape_cast %264 : vector<64x32xf32> to vector<8x8x32xf32>
    %cst_113 = arith.constant dense<0xFF800000> : vector<8x32xf32>
    %266 = vector.multi_reduction <maximumf>, %265, %cst_113 [1] : vector<8x8x32xf32> to vector<8x32xf32>
    %267 = vector.shape_cast %266 : vector<8x32xf32> to vector<8x1x32xf32>
    %268 = vector.broadcast %267 : vector<8x1x32xf32> to vector<8x8x32xf32>
    %269 = arith.subf %265, %268 : vector<8x8x32xf32>
    %270 = math.exp %269 : vector<8x8x32xf32>
    %cst_114 = arith.constant dense<0.000000e+00> : vector<8x32xf32>
    %271 = vector.multi_reduction <add>, %270, %cst_114 [1] : vector<8x8x32xf32> to vector<8x32xf32>
    %272 = vector.shape_cast %271 : vector<8x32xf32> to vector<8x1x32xf32>
    %273 = tpu.reciprocal %272 {approx = true} : vector<8x1x32xf32> -> vector<8x1x32xf32>
    %274 = vector.broadcast %273 : vector<8x1x32xf32> to vector<8x8x32xf32>
    %275 = arith.mulf %270, %274 : vector<8x8x32xf32>
    %276 = vector.shape_cast %256 : vector<8x32xf32> to vector<1x8x32xf32>
    %277 = vector.broadcast %276 : vector<1x8x32xf32> to vector<8x8x32xf32>
    %278 = arith.mulf %275, %277 : vector<8x8x32xf32>
    %cst_115 = arith.constant dense<0.000000e+00> : vector<8x32xf32>
    %279 = vector.multi_reduction <add>, %278, %cst_115 [1] : vector<8x8x32xf32> to vector<8x32xf32>
    %280 = tpu.concatenate %253, %279 in 0 : vector<8x32xf32>, vector<8x32xf32> -> vector<16x32xf32>
    %281 = arith.truncf %280 : vector<16x32xf32> to vector<16x32xbf16>
    %cst_116 = arith.constant dense<0.000000e+00> : vector<16x32xf32>
    %282 = tpu.matmul %281, %190, %cst_116 {dimension_numbers = #tpu.dot_dimension_numbers<[1], [0], [0], [1], [0, 0, 1, 1], [], []>} : vector<16x32xbf16>, vector<32x32xbf16>, vector<16x32xf32> -> vector<16x32xf32>
    %283 = vector.broadcast %182 : vector<1x32xf32> to vector<16x32xf32>
    %284 = arith.addf %282, %283 : vector<16x32xf32>
    %285 = arith.addf %284, %166 : vector<16x32xf32>
    %cst_117 = arith.constant dense<0.000000e+00> : vector<16xf32>
    %286 = vector.multi_reduction <add>, %285, %cst_117 [1] : vector<16x32xf32> to vector<16xf32>
    %287 = vector.shape_cast %286 : vector<16xf32> to vector<16x1xf32>
    %cst_118 = arith.constant 3.200000e+01 : f32
    %288 = vector.broadcast %cst_118 : f32 to vector<16x1xf32>
    %289 = arith.divf %287, %288 : vector<16x1xf32>
    %290 = arith.mulf %285, %285 : vector<16x32xf32>
    %cst_119 = arith.constant dense<0.000000e+00> : vector<16xf32>
    %291 = vector.multi_reduction <add>, %290, %cst_119 [1] : vector<16x32xf32> to vector<16xf32>
    %292 = vector.shape_cast %291 : vector<16xf32> to vector<16x1xf32>
    %cst_120 = arith.constant 3.200000e+01 : f32
    %293 = vector.broadcast %cst_120 : f32 to vector<16x1xf32>
    %294 = arith.divf %292, %293 : vector<16x1xf32>
    %295 = arith.mulf %289, %289 : vector<16x1xf32>
    %296 = arith.subf %294, %295 : vector<16x1xf32>
    %297 = vector.broadcast %289 : vector<16x1xf32> to vector<16x32xf32>
    %298 = arith.subf %285, %297 : vector<16x32xf32>
    %cst_121 = arith.constant 9.99999996E-13 : f32
    %299 = vector.broadcast %cst_121 : f32 to vector<16x1xf32>
    %300 = arith.addf %296, %299 : vector<16x1xf32>
    %301 = math.rsqrt %300 : vector<16x1xf32>
    %302 = vector.broadcast %301 : vector<16x1xf32> to vector<16x32xf32>
    %303 = arith.mulf %298, %302 : vector<16x32xf32>
    %304 = vector.broadcast %172 : vector<1x32xf32> to vector<16x32xf32>
    %305 = arith.mulf %303, %304 : vector<16x32xf32>
    %306 = vector.broadcast %174 : vector<1x32xf32> to vector<16x32xf32>
    %307 = arith.addf %305, %306 : vector<16x32xf32>
    %308 = arith.truncf %307 : vector<16x32xf32> to vector<16x32xbf16>
    %cst_122 = arith.constant dense<0.000000e+00> : vector<16x128xf32>
    %309 = tpu.matmul %308, %192, %cst_122 {dimension_numbers = #tpu.dot_dimension_numbers<[1], [0], [0], [1], [0, 0, 1, 1], [], []>} : vector<16x32xbf16>, vector<32x128xbf16>, vector<16x128xf32> -> vector<16x128xf32>
    %310 = vector.broadcast %186 : vector<1x128xf32> to vector<16x128xf32>
    %311 = arith.addf %309, %310 : vector<16x128xf32>
    %cst_123 = arith.constant 5.000000e-01 : f32
    %312 = vector.broadcast %cst_123 : f32 to vector<16x128xf32>
    %313 = arith.mulf %312, %311 : vector<16x128xf32>
    %cst_124 = arith.constant 4.471500e-02 : f32
    %314 = vector.broadcast %cst_124 : f32 to vector<16x128xf32>
    %315 = arith.mulf %314, %311 : vector<16x128xf32>
    %316 = arith.mulf %315, %311 : vector<16x128xf32>
    %317 = arith.mulf %316, %311 : vector<16x128xf32>
    %318 = arith.addf %311, %317 : vector<16x128xf32>
    %cst_125 = arith.constant 0.797884583 : f32
    %319 = vector.broadcast %cst_125 : f32 to vector<16x128xf32>
    %320 = arith.mulf %319, %318 : vector<16x128xf32>
    %321 = math.tanh %320 : vector<16x128xf32>
    %cst_126 = arith.constant 1.000000e+00 : f32
    %322 = vector.broadcast %cst_126 : f32 to vector<16x128xf32>
    %323 = arith.addf %322, %321 : vector<16x128xf32>
    %324 = arith.mulf %313, %323 : vector<16x128xf32>
    %325 = arith.truncf %324 : vector<16x128xf32> to vector<16x128xbf16>
    %cst_127 = arith.constant dense<0.000000e+00> : vector<16x32xf32>
    %326 = tpu.matmul %325, %194, %cst_127 {dimension_numbers = #tpu.dot_dimension_numbers<[1], [0], [0], [1], [0, 0, 1, 1], [], []>} : vector<16x128xbf16>, vector<128x32xbf16>, vector<16x32xf32> -> vector<16x32xf32>
    %327 = vector.broadcast %184 : vector<1x32xf32> to vector<16x32xf32>
    %328 = arith.addf %326, %327 : vector<16x32xf32>
    %329 = arith.addf %328, %285 : vector<16x32xf32>
    %330 = vector.shape_cast %329 : vector<16x32xf32> to vector<2x8x32xf32>
    %c0_128 = arith.constant 0 : index
    %c0_129 = arith.constant 0 : index
    %c0_130 = arith.constant 0 : index
    %331 = vector.load %arg4[%c0_128, %c0_129, %c0_130] : memref<2x8x32xf32, #tpu.memory_space<vmem>>, vector<2x8x32xf32>
    tpu.vector_store %arg4[%c0_128, %c0_129, %c0_130], %330 {strides = array<i32>} : memref<2x8x32xf32, #tpu.memory_space<vmem>>, vector<2x8x32xf32>,
    return
  }
}

</mosaic_0001>

<llo_original>
// kernel: tpu_custom_call.1
$region0: #{tpu_custom_call.1}
  #allocation0 [shape = 'u32[]', space=smem, size = 0x4, offset = 0x4, fixed_abs, tag = 'smem constant byte address 0x4 - core index']
  #allocation1 [shape = 'u32[144,128]{1,0:T(1,128)}', space=vmem, size = 0x12000, scoped, tag = 'internal scratch']
  %s0 = inlined_call_operand.vmem [shape: f32[2,8,32], index: 0, kind: input, shape index: {}]
  %s1 = inlined_call_operand.hbm [shape: bf16[2,32,768], index: 1, kind: input, shape index: {}]
  %s2 = inlined_call_operand.vmem [shape: bf16[2,128,32], index: 2, kind: input, shape index: {}]
  %s3 = inlined_call_operand.vmem [shape: f32[2,16,128], index: 3, kind: input, shape index: {}]
  %s4 = inlined_call_operand.hbm [shape: f32[2,8,32], index: 4, kind: output, shape index: {}]
  %s5 = sld [smem:[#allocation0]]
  $region30: #{tpu_custom_call.1} parent=0
    _
  %s7 = ssub.s32 1, %s5
  %s8 = scalar_select 0, %s7, %s5
  $region1: #{tpu_custom_call.1} parent=0
    #allocation2 [shape = 'u8[98304]{0}', space=vmem, size = 0x18000, scoped, tag = 'input window, operand 1, single buffered']
    #allocation3 [shape = 's32[1]{0}', space=sflag, size = 0x4, scoped, tag = 'scoped memory for tpu_custom_call.1']
    #allocation4 [shape = 's32[1]{0}', space=sflag, size = 0x4, scoped, tag = 'scoped memory for tpu_custom_call.1']
    #allocation5 [shape = 'u8[8192]{0}', space=vmem, size = 0x2000, scoped, tag = 'output window, operand 0, single buffered']
    %9 = vsyncpa [#allocation3], 0
    %10 = vsyncpa [#allocation4], 0
    // Predicated region
    $region2: #{tpu_custom_call.1} parent=1 // pred_check
      _
    $region3: #{tpu_custom_call.1} parent=1 // pred_check_branch
      %12 = sbr.rel (0) target = $region5
    $region4: #{tpu_custom_call.1} parent=1 // pred_region
      _
    $region5: #{tpu_custom_call.1} parent=1 // pred_fallthru
      _
    // Predicated region
    $region6: #{tpu_custom_call.1} parent=1 // pred_check
      _
    $region7: #{tpu_custom_call.1} parent=1 // pred_check_branch
      %14 = sbr.rel (0) target = $region9
    $region8: #{tpu_custom_call.1} parent=1 // pred_region
      %s16 = ssub.s32 3072, 3072
      %17 = vsyncadd [#allocation3], %s16
      %s18 = sshll.u32 [#allocation2], 4
      %s19 = int_to_ptr.vmem [resolvable:$true] %s18
      %24 = dma.hbm_to_vmem [thread:$0]  %s1, 3072, %s19, [#allocation3], 384, 384, 24
    $region9: #{tpu_custom_call.1} parent=1 // pred_fallthru
      _
    // Predicated region
    $region10: #{tpu_custom_call.1} parent=1 // pred_check
      _
    $region11: #{tpu_custom_call.1} parent=1 // pred_check_branch
      %26 = sbr.rel (0) target = $region13
    $region12: #{tpu_custom_call.1} parent=1 // pred_region
      _
    $region13: #{tpu_custom_call.1} parent=1 // pred_fallthru
      _
    // Predicated region
    $region14: #{tpu_custom_call.1} parent=1 // pred_check
      _
    $region15: #{tpu_custom_call.1} parent=1 // pred_check_branch
      %28 = sbr.rel (0) target = $region17
    $region16: #{tpu_custom_call.1} parent=1 // pred_region
      _
    $region17: #{tpu_custom_call.1} parent=1 // pred_fallthru
      _
    // Predicated region
    $region18: #{tpu_custom_call.1} parent=1 // pred_check
      _
    $region19: #{tpu_custom_call.1} parent=1 // pred_check_branch
      %30 = sbr.rel (0) target = $region21
    $region20: #{tpu_custom_call.1} parent=1 // pred_region
      %31 = dma.done [#allocation3], 3072
    $region21: #{tpu_custom_call.1} parent=1 // pred_fallthru
      _
    %v33 = vld [vmem:[#allocation2 + $0x14] sm:$0xf]
    %v34 = vld [vmem:[#allocation2 + $0x2c] sm:$0xf]
    %v35 = vld [vmem:[#allocation2 + $0x44] sm:$0xf]
    %v36 = vld [vmem:[#allocation2 + $0x5c] sm:$0xf]
    %v37 = vld [vmem:[%s0] sm:$0xff]
    %v38 = vld [vmem:[%s0 + $0x8] sm:$0xff]
    %v39 = vld [vmem:[%s3] sm:$0x1]
    %v40 = vld [vmem:[%s3 + $0x1] sm:$0x1]
    %v41 = vld [vmem:[%s3 + $0x2] sm:$0x1]
    %v42 = vld [vmem:[%s3 + $0x3] sm:$0x1]
    %v43 = vld [vmem:[%s3 + $0x4] sm:$0x1]
    %v44 = vld [vmem:[%s3 + $0x5] sm:$0x1]
    %v45 = vld [vmem:[%s3 + $0x6] sm:$0x1]
    %v46 = vld [vmem:[%s3 + $0x7] sm:$0x1]
    %v47 = vld [vmem:[%s3 + $0x9] sm:$0x1]
    %v48 = vld [vmem:[%s3 + $0x8] sm:$0x1]
    %v49 = vld [vmem:[#allocation2] sm:$0xff]
    %v50 = vld [vmem:[#allocation2 + $0x8] sm:$0xf]
    %v51 = vld [vmem:[#allocation2 + $0x18] sm:$0xff]
    %v52 = vld [vmem:[#allocation2 + $0x20] sm:$0xf]
    %v53 = vld [vmem:[#allocation2 + $0x30] sm:$0xff]
    %v54 = vld [vmem:[#allocation2 + $0x38] sm:$0xf]
    %v55 = vld [vmem:[#allocation2 + $0x48] sm:$0xff]
    %v56 = vld [vmem:[#allocation2 + $0x50] sm:$0xf]
    %v57 = vld [vmem:[#allocation2 + $0xc] sm:$0xf]
    %v58 = vld [vmem:[#allocation2 + $0x24] sm:$0xf]
    %v59 = vld [vmem:[#allocation2 + $0x3c] sm:$0xf]
    %v60 = vld [vmem:[#allocation2 + $0x54] sm:$0xf]
    %v61 = vld [vmem:[#allocation2 + $0x10] sm:$0xf]
    %v62 = vld [vmem:[#allocation2 + $0x28] sm:$0xf]
    %v63 = vld [vmem:[#allocation2 + $0x40] sm:$0xf]
    %v64 = vld [vmem:[#allocation2 + $0x58] sm:$0xf]
    %v65 = vld [vmem:[%s2] sm:$0xf]
    %v66 = vld [vmem:[%s2 + $0x4] sm:$0xf]
    %v67 = vld [vmem:[%s2 + $0x8] sm:$0xf]
    %v68 = vld [vmem:[%s2 + $0xc] sm:$0xf]
    %v69 = vld [vmem:[%s2 + $0x10] sm:$0xf]
    %v70 = vld [vmem:[%s2 + $0x14] sm:$0xf]
    %v71 = vld [vmem:[%s2 + $0x18] sm:$0xf]
    %v72 = vld [vmem:[%s2 + $0x1c] sm:$0xf]
    %v73 = vld [vmem:[%s2 + $0x20] sm:$0xf]
    %v74 = vld [vmem:[%s2 + $0x24] sm:$0xf]
    %v75 = vld [vmem:[%s2 + $0x28] sm:$0xf]
    %v76 = vld [vmem:[%s2 + $0x2c] sm:$0xf]
    %v77 = vld [vmem:[%s2 + $0x30] sm:$0xf]
    %v78 = vld [vmem:[%s2 + $0x34] sm:$0xf]
    %v79 = vld [vmem:[%s2 + $0x38] sm:$0xf]
    %v80 = vld [vmem:[%s2 + $0x3c] sm:$0xf]
    %vm81 = vcmask 261120
    %v82 = vsel %vm81, %v37, 0.0
    %83 = vadd.xlane.f32.xlu0 %v82
    %v84 = vpop.xlane.xlu0 %83
    %v85 = vsel %vm81, %v38, 0.0
    %86 = vadd.xlane.f32.xlu0 %v85
    %v87 = vpop.xlane.xlu0 %86
    %v88 = vrcp.pop 32.0
    %v89 = vmul.f32 %v84, %v88
    %v90 = vmul.f32 %v87, %v88
    %v91 = vmul.f32 %v37, %v37
    %v92 = vmul.f32 %v38, %v38
    %v93 = vsel %vm81, %v91, 0.0
    %94 = vadd.xlane.f32.xlu0 %v93
    %v95 = vpop.xlane.xlu0 %94
    %v96 = vsel %vm81, %v92, 0.0
    %97 = vadd.xlane.f32.xlu0 %v96
    %v98 = vpop.xlane.xlu0 %97
    %v99 = vmul.f32 %v95, %v88
    %v100 = vmul.f32 %v98, %v88
    %v101 = vmul.f32 %v89, %v89
    %v102 = vmul.f32 %v90, %v90
    %v103 = vsub.f32 %v99, %v101
    %v104 = vsub.f32 %v100, %v102
    %v105 = vsub.f32 %v37, %v89
    %v106 = vsub.f32 %v38, %v90
    %v107 = vadd.f32 %v103, 1e-12
    %v108 = vadd.f32 %v104, 1e-12
    %v109 = vrsqrt.pop %v107
    %v110 = vrsqrt.pop %v108
    %v111 = vmul.f32 %v105, %v109
    %v112 = vmul.f32 %v106, %v110
    %v113 = vlaneseq
    %v114 = vshrl.u32 %v113, 7
    %v115 = vsub.s32 0, %v114
    %v116 = vrot.slane %v39, %v115
    %v117 = vmul.f32 %v111, %v116
    %v118 = vmul.f32 %v112, %v116
    %v119 = vlaneseq
    %v120 = vshrl.u32 %v119, 7
    %v121 = vsub.s32 0, %v120
    %v122 = vrot.slane %v40, %v121
    %v123 = vadd.f32 %v117, %v122
    %v124 = vadd.f32 %v118, %v122
    %v125 = vpack.c.bf16 %v124, %v123
    %v134 = vunpack.c.l.b16 %v49
    %v135 = vunpack.c.h.b16 %v49
    %v136 = vunpack.c.l.b16 %v50
    %v137 = vunpack.c.l.b16 %v51
    %v138 = vunpack.c.h.b16 %v51
    %v139 = vunpack.c.l.b16 %v52
    %v140 = vunpack.c.l.b16 %v53
    %v141 = vunpack.c.h.b16 %v53
    %v142 = vunpack.c.l.b16 %v54
    %v143 = vunpack.c.l.b16 %v55
    %v144 = vunpack.c.h.b16 %v55
    %v145 = vunpack.c.l.b16 %v56
    %v146 = vpack.c.b16 %v137, %v134
    %v147 = vpack.c.b16 %v138, %v135
    %v148 = vpack.c.b16 %v139, %v136
    %v149 = vpack.c.b16 %v143, %v140
    %v150 = vpack.c.b16 %v144, %v141
    %v151 = vpack.c.b16 %v145, %v142
    %v159 = vsel %vm81, %v125, 0
    %161 = vmatprep.subr.bf16.mxu0 %v147
    %162 = vmatpush1.bf16.msra.mxu0 %v146
    %163 = vmatprep.subr.bf16.mxu0 %v150
    %164 = vmatpush1.bf16.msra.mxu0 %v149
    %165 = vmatprep.subr.bf16.mxu0 0
    %166 = vmatpush1.bf16.msra.mxu0 0
    %167 = vmatprep.subr.bf16.mxu0 0
    %168 = vmatpush1.bf16.msra.mxu0 0
    %169 = vmatprep.subr.bf16.mxu0 0
    %170 = vmatpush1.bf16.msra.mxu0 0
    %171 = vmatprep.subr.bf16.mxu0 0
    %172 = vmatpush1.bf16.msra.mxu0 0
    %173 = vmatprep.subr.bf16.mxu0 0
    %174 = vmatpush1.bf16.msra.mxu0 0
    %175 = vmatprep.subr.bf16.mxu0 0
    %176 = vmatpush1.bf16.msra.mxu0 0
    %177 = vmatprep.subr.bf16.mxu0 0
    %178 = vmatpush1.bf16.msra.mxu0 0
    %179 = vmatprep.subr.bf16.mxu0 0
    %180 = vmatpush1.bf16.msra.mxu0 0
    %181 = vmatprep.subr.bf16.mxu0 0
    %182 = vmatpush1.bf16.msra.mxu0 0
    %183 = vmatprep.subr.bf16.mxu0 0
    %184 = vmatpush1.bf16.msra.mxu0 0
    %185 = vmatprep.subr.bf16.mxu0 0
    %186 = vmatpush1.bf16.msra.mxu0 0
    %187 = vmatprep.subr.bf16.mxu0 0
    %188 = vmatpush1.bf16.msra.mxu0 0
    %189 = vmatprep.subr.bf16.mxu0 0
    %190 = vmatpush1.bf16.msra.mxu0 0
    %191 = vmatprep.subr.bf16.mxu0 0
    %192 = vmatpush1.bf16.msra.mxu0 0
    %193 = vmatprep.mubr.bf16.mxu0 0
    %194 = vmatmul.mubr.bf16.gmra.mrb[0].mxu0 %v159
    %v195 = vpop.f32.mrb[0].mxu0
    %v196 = vadd.f32 0.0, %v195
    %v197 = vpop.f32.mrb[0].mxu0
    %v198 = vadd.f32 0.0, %v197
    %v199 = vpop.f32.mrb[0].mxu0
    %v200 = vadd.f32 0.0, %v199
    %v201 = vpop.f32.mrb[0].mxu0
    %v202 = vadd.f32 0.0, %v201
    %203 = vdwg.mxu0
    %204 = vmatprep.subr.bf16.mxu0 0
    %205 = vmatpush1.bf16.msra.mxu0 %v148
    %206 = vmatprep.subr.bf16.mxu0 0
    %207 = vmatpush1.bf16.msra.mxu0 %v151
    %208 = vmatprep.subr.bf16.mxu0 0
    %209 = vmatpush1.bf16.msra.mxu0 0
    %210 = vmatprep.subr.bf16.mxu0 0
    %211 = vmatpush1.bf16.msra.mxu0 0
    %212 = vmatprep.subr.bf16.mxu0 0
    %213 = vmatpush1.bf16.msra.mxu0 0
    %214 = vmatprep.subr.bf16.mxu0 0
    %215 = vmatpush1.bf16.msra.mxu0 0
    %216 = vmatprep.subr.bf16.mxu0 0
    %217 = vmatpush1.bf16.msra.mxu0 0
    %218 = vmatprep.subr.bf16.mxu0 0
    %219 = vmatpush1.bf16.msra.mxu0 0
    %220 = vmatprep.subr.bf16.mxu0 0
    %221 = vmatpush1.bf16.msra.mxu0 0
    %222 = vmatprep.subr.bf16.mxu0 0
    %223 = vmatpush1.bf16.msra.mxu0 0
    %224 = vmatprep.subr.bf16.mxu0 0
    %225 = vmatpush1.bf16.msra.mxu0 0
    %226 = vmatprep.subr.bf16.mxu0 0
    %227 = vmatpush1.bf16.msra.mxu0 0
    %228 = vmatprep.subr.bf16.mxu0 0
    %229 = vmatpush1.bf16.msra.mxu0 0
    %230 = vmatprep.subr.bf16.mxu0 0
    %231 = vmatpush1.bf16.msra.mxu0 0
    %232 = vmatprep.subr.bf16.mxu0 0
    %233 = vmatpush1.bf16.msra.mxu0 0
    %234 = vmatprep.subr.bf16.mxu0 0
    %235 = vmatpush1.bf16.msra.mxu0 0
    %236 = vmatprep.mubr.bf16.mxu0 0
    %237 = vmatmul.mubr.bf16.gmra.mrb[0].mxu0 %v159
    %v238 = vpop.f32.mrb[0].mxu0
    %v239 = vadd.f32 0.0, %v238
    %v240 = vpop.f32.mrb[0].mxu0
    %v241 = vpop.f32.mrb[0].mxu0
    %v242 = vadd.f32 0.0, %v241
    %v243 = vpop.f32.mrb[0].mxu0
    %244 = vdwg.mxu0
    %v245 = vlaneseq
    %v246 = vshrl.u32 %v245, 7
    %v247 = vsub.s32 0, %v246
    %v248 = vrot.slane %v43, %v247
    %v249 = vadd.f32 %v196, %v248
    %v250 = vadd.f32 %v200, %v248
    %v251 = vlaneseq
    %v252 = vshrl.u32 %v251, 7
    %v253 = vsub.s32 0, %v252
    %v254 = vrot.slane %v44, %v253
    %v255 = vadd.f32 %v198, %v254
    %v256 = vadd.f32 %v202, %v254
    %v257 = vlaneseq
    %v258 = vshrl.u32 %v257, 7
    %v259 = vsub.s32 0, %v258
    %v260 = vrot.slane %v45, %v259
    %v261 = vadd.f32 %v239, %v260
    %v262 = vadd.f32 %v242, %v260
    %v264 = vcombine.high %v249, %v249
    %v266 = vunpack.c.l.s4 1966171168
    %v267 = vunpack.c.0.s8 %v266
    %v268 = vlaneseq
    %v269 = vshrl.u32 %v268, 7
    %v270 = vsub.s32 %v267, %v269
    %v271 = vrot.slane %v249, %v270
    %v273 = vunpack.c.l.s4 1966171168
    %v274 = vunpack.c.0.s8 %v273
    %v275 = vlaneseq
    %v276 = vshrl.u32 %v275, 7
    %v277 = vsub.s32 %v274, %v276
    %v278 = vrot.slane %v264, %v277
    %v279 = vcombine.high %v271, %v271
    %v280 = vcombine.high %v278, %v278
    %v282 = vunpack.c.l.s4 1966171168
    %v283 = vunpack.c.0.s8 %v282
    %v284 = vlaneseq
    %v285 = vshrl.u32 %v284, 7
    %v286 = vsub.s32 %v283, %v285
    %v287 = vrot.slane %v271, %v286
    %v289 = vunpack.c.l.s4 1966171168
    %v290 = vunpack.c.0.s8 %v289
    %v291 = vlaneseq
    %v292 = vshrl.u32 %v291, 7
    %v293 = vsub.s32 %v290, %v292
    %v294 = vrot.slane %v278, %v293
    %v296 = vunpack.c.l.s4 1966171168
    %v297 = vunpack.c.0.s8 %v296
    %v298 = vlaneseq
    %v299 = vshrl.u32 %v298, 7
    %v300 = vsub.s32 %v297, %v299
    %v301 = vrot.slane %v279, %v300
    %v303 = vunpack.c.l.s4 1966171168
    %v304 = vunpack.c.0.s8 %v303
    %v305 = vlaneseq
    %v306 = vshrl.u32 %v305, 7
    %v307 = vsub.s32 %v304, %v306
    %v308 = vrot.slane %v280, %v307
    %v309 = vcombine.high %v287, %v287
    %v310 = vcombine.high %v294, %v294
    %v311 = vcombine.high %v301, %v301
    %v312 = vcombine.high %v308, %v308
    %v313 = vlaneseq
    %v314 = vshrl.u32 %v313, 7
    %v315 = vsub.s32 0, %v314
    %v316 = vrot.slane %v287, %v315
    %v317 = vlaneseq
    %v318 = vshrl.u32 %v317, 7
    %v319 = vsub.s32 0, %v318
    %v320 = vrot.slane %v301, %v319
    %v321 = vlaneseq
    %v322 = vshrl.u32 %v321, 7
    %v323 = vsub.s32 0, %v322
    %v324 = vrot.slane %v309, %v323
    %v325 = vlaneseq
    %v326 = vshrl.u32 %v325, 7
    %v327 = vsub.s32 0, %v326
    %v328 = vrot.slane %v311, %v327
    %v329 = vlaneseq
    %v330 = vshrl.u32 %v329, 7
    %v331 = vsub.s32 0, %v330
    %v332 = vrot.slane %v294, %v331
    %v333 = vlaneseq
    %v334 = vshrl.u32 %v333, 7
    %v335 = vsub.s32 0, %v334
    %v336 = vrot.slane %v308, %v335
    %v337 = vlaneseq
    %v338 = vshrl.u32 %v337, 7
    %v339 = vsub.s32 0, %v338
    %v340 = vrot.slane %v310, %v339
    %v341 = vlaneseq
    %v342 = vshrl.u32 %v341, 7
    %v343 = vsub.s32 0, %v342
    %v344 = vrot.slane %v312, %v343
    %v353 = vmul.f32 %v316, %v255
    %v354 = vmul.f32 %v320, %v255
    %v355 = vmul.f32 %v324, %v255
    %v356 = vmul.f32 %v328, %v255
    %v357 = vmul.f32 %v332, %v255
    %v358 = vmul.f32 %v336, %v255
    %v359 = vmul.f32 %v340, %v255
    %v360 = vmul.f32 %v344, %v255
    %v361 = vpack.c.bf16 %v353, %v353
    %v362 = vpack.c.bf16 %v354, %v354
    %v363 = vpack.c.bf16 %v355, %v355
    %v364 = vpack.c.bf16 %v356, %v356
    %v365 = vpack.c.bf16 %v357, %v357
    %v366 = vpack.c.bf16 %v358, %v358
    %v367 = vpack.c.bf16 %v359, %v359
    %v368 = vpack.c.bf16 %v360, %v360
    %v377 = vunpack.c.l.b16 %v361
    %v378 = vunpack.c.l.b16 %v362
    %v379 = vunpack.c.l.b16 %v363
    %v380 = vunpack.c.l.b16 %v364
    %v381 = vunpack.c.l.b16 %v365
    %v382 = vunpack.c.l.b16 %v366
    %v383 = vunpack.c.l.b16 %v367
    %v384 = vunpack.c.l.b16 %v368
    %v385 = vpack.c.b16 %v378, %v377
    %v386 = vpack.c.b16 %v380, %v379
    %v387 = vpack.c.b16 %v382, %v381
    %v388 = vpack.c.b16 %v384, %v383
    %v393 = vunpack.c.l.b16 %v33
    %v394 = vunpack.c.l.b16 %v34
    %v395 = vunpack.c.l.b16 %v35
    %v396 = vunpack.c.l.b16 %v36
    %v397 = vpack.c.b16 %v394, %v393
    %v398 = vpack.c.b16 %v396, %v395
    %v402 = vsel %vm81, %v385, 0
    %v405 = vsel %vm81, %v386, 0
    %v408 = vsel %vm81, %v387, 0
    %v411 = vsel %vm81, %v388, 0
    %413 = vmatprep.subr.bf16.mxu0 0
    %414 = vmatpush1.bf16.msra.mxu0 %v397
    %415 = vmatprep.subr.bf16.mxu0 0
    %416 = vmatpush1.bf16.msra.mxu0 %v398
    %417 = vmatprep.subr.bf16.mxu0 0
    %418 = vmatpush1.bf16.msra.mxu0 0
    %419 = vmatprep.subr.bf16.mxu0 0
    %420 = vmatpush1.bf16.msra.mxu0 0
    %421 = vmatprep.subr.bf16.mxu0 0
    %422 = vmatpush1.bf16.msra.mxu0 0
    %423 = vmatprep.subr.bf16.mxu0 0
    %424 = vmatpush1.bf16.msra.mxu0 0
    %425 = vmatprep.subr.bf16.mxu0 0
    %426 = vmatpush1.bf16.msra.mxu0 0
    %427 = vmatprep.subr.bf16.mxu0 0
    %428 = vmatpush1.bf16.msra.mxu0 0
    %429 = vmatprep.subr.bf16.mxu0 0
    %430 = vmatpush1.bf16.msra.mxu0 0
    %431 = vmatprep.subr.bf16.mxu0 0
    %432 = vmatpush1.bf16.msra.mxu0 0
    %433 = vmatprep.subr.bf16.mxu0 0
    %434 = vmatpush1.bf16.msra.mxu0 0
    %435 = vmatprep.subr.bf16.mxu0 0
    %436 = vmatpush1.bf16.msra.mxu0 0
    %437 = vmatprep.subr.bf16.mxu0 0
    %438 = vmatpush1.bf16.msra.mxu0 0
    %439 = vmatprep.subr.bf16.mxu0 0
    %440 = vmatpush1.bf16.msra.mxu0 0
    %441 = vmatprep.subr.bf16.mxu0 0
    %442 = vmatpush1.bf16.msra.mxu0 0
    %443 = vmatprep.subr.bf16.mxu0 0
    %444 = vmatpush1.bf16.msra.mxu0 0
    %445 = vmatprep.mubr.bf16.mxu0 0
    %446 = vmatmul.mubr.bf16.gmra.mrb[0].mxu0 %v402
    %v447 = vpop.f32.mrb[0].mxu0
    %v448 = vadd.f32 0.0, %v447
    %v449 = vpop.f32.mrb[0].mxu0
    %v450 = vpop.f32.mrb[0].mxu0
    %v451 = vadd.f32 0.0, %v450
    %v452 = vpop.f32.mrb[0].mxu0
    %453 = vmatprep.mubr.bf16.mxu0 0
    %454 = vmatmul.mubr.bf16.gmra.mrb[0].mxu0 %v405
    %v455 = vpop.f32.mrb[0].mxu0
    %v456 = vadd.f32 0.0, %v455
    %v457 = vpop.f32.mrb[0].mxu0
    %v458 = vpop.f32.mrb[0].mxu0
    %v459 = vadd.f32 0.0, %v458
    %v460 = vpop.f32.mrb[0].mxu0
    %461 = vmatprep.mubr.bf16.mxu0 0
    %462 = vmatmul.mubr.bf16.gmra.mrb[0].mxu0 %v408
    %v463 = vpop.f32.mrb[0].mxu0
    %v464 = vadd.f32 0.0, %v463
    %v465 = vpop.f32.mrb[0].mxu0
    %v466 = vpop.f32.mrb[0].mxu0
    %v467 = vadd.f32 0.0, %v466
    %v468 = vpop.f32.mrb[0].mxu0
    %469 = vmatprep.mubr.bf16.mxu0 0
    %470 = vmatmul.mubr.bf16.gmra.mrb[0].mxu0 %v411
    %v471 = vpop.f32.mrb[0].mxu0
    %v472 = vadd.f32 0.0, %v471
    %v473 = vpop.f32.mrb[0].mxu0
    %v474 = vpop.f32.mrb[0].mxu0
    %v475 = vadd.f32 0.0, %v474
    %v476 = vpop.f32.mrb[0].mxu0
    %477 = vdwg.mxu0
    %v478 = vsel %vm81, %v448, -inf
    %v479 = vrot.slane %v478, 4
    %v480 = vmax.f32 %v478, %v479
    %v481 = vrot.slane %v480, 2
    %v482 = vmax.f32 %v480, %v481
    %v483 = vrot.slane %v482, 1
    %v484 = vmax.f32 %v482, %v483
    %v485 = vsel %vm81, %v451, -inf
    %v486 = vrot.slane %v485, 4
    %v487 = vmax.f32 %v485, %v486
    %v488 = vrot.slane %v487, 2
    %v489 = vmax.f32 %v487, %v488
    %v490 = vrot.slane %v489, 1
    %v491 = vmax.f32 %v489, %v490
    %v492 = vsel %vm81, %v456, -inf
    %v493 = vrot.slane %v492, 4
    %v494 = vmax.f32 %v492, %v493
    %v495 = vrot.slane %v494, 2
    %v496 = vmax.f32 %v494, %v495
    %v497 = vrot.slane %v496, 1
    %v498 = vmax.f32 %v496, %v497
    %v499 = vsel %vm81, %v459, -inf
    %v500 = vrot.slane %v499, 4
    %v501 = vmax.f32 %v499, %v500
    %v502 = vrot.slane %v501, 2
    %v503 = vmax.f32 %v501, %v502
    %v504 = vrot.slane %v503, 1
    %v505 = vmax.f32 %v503, %v504
    %v506 = vsel %vm81, %v464, -inf
    %v507 = vrot.slane %v506, 4
    %v508 = vmax.f32 %v506, %v507
    %v509 = vrot.slane %v508, 2
    %v510 = vmax.f32 %v508, %v509
    %v511 = vrot.slane %v510, 1
    %v512 = vmax.f32 %v510, %v511
    %v513 = vsel %vm81, %v467, -inf
    %v514 = vrot.slane %v513, 4
    %v515 = vmax.f32 %v513, %v514
    %v516 = vrot.slane %v515, 2
    %v517 = vmax.f32 %v515, %v516
    %v518 = vrot.slane %v517, 1
    %v519 = vmax.f32 %v517, %v518
    %v520 = vsel %vm81, %v472, -inf
    %v521 = vrot.slane %v520, 4
    %v522 = vmax.f32 %v520, %v521
    %v523 = vrot.slane %v522, 2
    %v524 = vmax.f32 %v522, %v523
    %v525 = vrot.slane %v524, 1
    %v526 = vmax.f32 %v524, %v525
    %v527 = vsel %vm81, %v475, -inf
    %v528 = vrot.slane %v527, 4
    %v529 = vmax.f32 %v527, %v528
    %v530 = vrot.slane %v529, 2
    %v531 = vmax.f32 %v529, %v530
    %v532 = vrot.slane %v531, 1
    %v533 = vmax.f32 %v531, %v532
    %v534 = vsub.f32 %v448, %v484
    %v535 = vsub.f32 %v451, %v491
    %v536 = vsub.f32 %v456, %v498
    %v537 = vsub.f32 %v459, %v505
    %v538 = vsub.f32 %v464, %v512
    %v539 = vsub.f32 %v467, %v519
    %v540 = vsub.f32 %v472, %v526
    %v541 = vsub.f32 %v475, %v533
    %v542 = vmul.f32 %v534, 1.442695
    %v543 = vpow.pop %v542
    %v544 = vmul.f32 %v535, 1.442695
    %v545 = vpow.pop %v544
    %v546 = vmul.f32 %v536, 1.442695
    %v547 = vpow.pop %v546
    %v548 = vmul.f32 %v537, 1.442695
    %v549 = vpow.pop %v548
    %v550 = vmul.f32 %v538, 1.442695
    %v551 = vpow.pop %v550
    %v552 = vmul.f32 %v539, 1.442695
    %v553 = vpow.pop %v552
    %v554 = vmul.f32 %v540, 1.442695
    %v555 = vpow.pop %v554
    %v556 = vmul.f32 %v541, 1.442695
    %v557 = vpow.pop %v556
    %v558 = vsel %vm81, %v543, 0.0
    %v559 = vrot.slane %v558, 4
    %v560 = vadd.f32 %v558, %v559
    %v561 = vrot.slane %v560, 2
    %v562 = vadd.f32 %v560, %v561
    %v563 = vrot.slane %v562, 1
    %v564 = vadd.f32 %v562, %v563
    %v565 = vsel %vm81, %v545, 0.0
    %v566 = vrot.slane %v565, 4
    %v567 = vadd.f32 %v565, %v566
    %v568 = vrot.slane %v567, 2
    %v569 = vadd.f32 %v567, %v568
    %v570 = vrot.slane %v569, 1
    %v571 = vadd.f32 %v569, %v570
    %v572 = vsel %vm81, %v547, 0.0
    %v573 = vrot.slane %v572, 4
    %v574 = vadd.f32 %v572, %v573
    %v575 = vrot.slane %v574, 2
    %v576 = vadd.f32 %v574, %v575
    %v577 = vrot.slane %v576, 1
    %v578 = vadd.f32 %v576, %v577
    %v579 = vsel %vm81, %v549, 0.0
    %v580 = vrot.slane %v579, 4
    %v581 = vadd.f32 %v579, %v580
    %v582 = vrot.slane %v581, 2
    %v583 = vadd.f32 %v581, %v582
    %v584 = vrot.slane %v583, 1
    %v585 = vadd.f32 %v583, %v584
    %v586 = vsel %vm81, %v551, 0.0
    %v587 = vrot.slane %v586, 4
    %v588 = vadd.f32 %v586, %v587
    %v589 = vrot.slane %v588, 2
    %v590 = vadd.f32 %v588, %v589
    %v591 = vrot.slane %v590, 1
    %v592 = vadd.f32 %v590, %v591
    %v593 = vsel %vm81, %v553, 0.0
    %v594 = vrot.slane %v593, 4
    %v595 = vadd.f32 %v593, %v594
    %v596 = vrot.slane %v595, 2
    %v597 = vadd.f32 %v595, %v596
    %v598 = vrot.slane %v597, 1
    %v599 = vadd.f32 %v597, %v598
    %v600 = vsel %vm81, %v555, 0.0
    %v601 = vrot.slane %v600, 4
    %v602 = vadd.f32 %v600, %v601
    %v603 = vrot.slane %v602, 2
    %v604 = vadd.f32 %v602, %v603
    %v605 = vrot.slane %v604, 1
    %v606 = vadd.f32 %v604, %v605
    %v607 = vsel %vm81, %v557, 0.0
    %v608 = vrot.slane %v607, 4
    %v609 = vadd.f32 %v607, %v608
    %v610 = vrot.slane %v609, 2
    %v611 = vadd.f32 %v609, %v610
    %v612 = vrot.slane %v611, 1
    %v613 = vadd.f32 %v611, %v612
    %v614 = vrcp.pop %v564
    %v615 = vrcp.pop %v571
    %v616 = vrcp.pop %v578
    %v617 = vrcp.pop %v585
    %v618 = vrcp.pop %v592
    %v619 = vrcp.pop %v599
    %v620 = vrcp.pop %v606
    %v621 = vrcp.pop %v613
    %v622 = vmul.f32 %v543, %v614
    %v623 = vmul.f32 %v545, %v615
    %v624 = vmul.f32 %v547, %v616
    %v625 = vmul.f32 %v549, %v617
    %v626 = vmul.f32 %v551, %v618
    %v627 = vmul.f32 %v553, %v619
    %v628 = vmul.f32 %v555, %v620
    %v629 = vmul.f32 %v557, %v621
    %v630 = vmul.f32 %v622, %v261
    %v631 = vmul.f32 %v623, %v261
    %v632 = vmul.f32 %v624, %v261
    %v633 = vmul.f32 %v625, %v261
    %v634 = vmul.f32 %v626, %v261
    %v635 = vmul.f32 %v627, %v261
    %v636 = vmul.f32 %v628, %v261
    %v637 = vmul.f32 %v629, %v261
    %v638 = vsel %vm81, %v630, 0.0
    %v639 = vrot.slane %v638, 4
    %v640 = vadd.f32 %v638, %v639
    %v641 = vrot.slane %v640, 2
    %v642 = vadd.f32 %v640, %v641
    %v643 = vrot.slane %v642, 1
    %v644 = vadd.f32 %v642, %v643
    %v645 = vsel %vm81, %v631, 0.0
    %v646 = vrot.slane %v645, 4
    %v647 = vadd.f32 %v645, %v646
    %v648 = vrot.slane %v647, 2
    %v649 = vadd.f32 %v647, %v648
    %v650 = vrot.slane %v649, 1
    %v651 = vadd.f32 %v649, %v650
    %v652 = vsel %vm81, %v632, 0.0
    %v653 = vrot.slane %v652, 4
    %v654 = vadd.f32 %v652, %v653
    %v655 = vrot.slane %v654, 2
    %v656 = vadd.f32 %v654, %v655
    %v657 = vrot.slane %v656, 1
    %v658 = vadd.f32 %v656, %v657
    %v659 = vsel %vm81, %v633, 0.0
    %v660 = vrot.slane %v659, 4
    %v661 = vadd.f32 %v659, %v660
    %v662 = vrot.slane %v661, 2
    %v663 = vadd.f32 %v661, %v662
    %v664 = vrot.slane %v663, 1
    %v665 = vadd.f32 %v663, %v664
    %v666 = vsel %vm81, %v634, 0.0
    %v667 = vrot.slane %v666, 4
    %v668 = vadd.f32 %v666, %v667
    %v669 = vrot.slane %v668, 2
    %v670 = vadd.f32 %v668, %v669
    %v671 = vrot.slane %v670, 1
    %v672 = vadd.f32 %v670, %v671
    %v673 = vsel %vm81, %v635, 0.0
    %v674 = vrot.slane %v673, 4
    %v675 = vadd.f32 %v673, %v674
    %v676 = vrot.slane %v675, 2
    %v677 = vadd.f32 %v675, %v676
    %v678 = vrot.slane %v677, 1
    %v679 = vadd.f32 %v677, %v678
    %v680 = vsel %vm81, %v636, 0.0
    %v681 = vrot.slane %v680, 4
    %v682 = vadd.f32 %v680, %v681
    %v683 = vrot.slane %v682, 2
    %v684 = vadd.f32 %v682, %v683
    %v685 = vrot.slane %v684, 1
    %v686 = vadd.f32 %v684, %v685
    %v687 = vsel %vm81, %v637, 0.0
    %v688 = vrot.slane %v687, 4
    %v689 = vadd.f32 %v687, %v688
    %v690 = vrot.slane %v689, 2
    %v691 = vadd.f32 %v689, %v690
    %v692 = vrot.slane %v691, 1
    %v693 = vadd.f32 %v691, %v692
    %v695 = vcombine.high %v250, %v250
    %v697 = vunpack.c.l.s4 1966171168
    %v698 = vunpack.c.0.s8 %v697
    %v699 = vlaneseq
    %v700 = vshrl.u32 %v699, 7
    %v701 = vsub.s32 %v698, %v700
    %v702 = vrot.slane %v250, %v701
    %v704 = vunpack.c.l.s4 1966171168
    %v705 = vunpack.c.0.s8 %v704
    %v706 = vlaneseq
    %v707 = vshrl.u32 %v706, 7
    %v708 = vsub.s32 %v705, %v707
    %v709 = vrot.slane %v695, %v708
    %v710 = vcombine.high %v702, %v702
    %v711 = vcombine.high %v709, %v709
    %v713 = vunpack.c.l.s4 1966171168
    %v714 = vunpack.c.0.s8 %v713
    %v715 = vlaneseq
    %v716 = vshrl.u32 %v715, 7
    %v717 = vsub.s32 %v714, %v716
    %v718 = vrot.slane %v702, %v717
    %v720 = vunpack.c.l.s4 1966171168
    %v721 = vunpack.c.0.s8 %v720
    %v722 = vlaneseq
    %v723 = vshrl.u32 %v722, 7
    %v724 = vsub.s32 %v721, %v723
    %v725 = vrot.slane %v709, %v724
    %v727 = vunpack.c.l.s4 1966171168
    %v728 = vunpack.c.0.s8 %v727
    %v729 = vlaneseq
    %v730 = vshrl.u32 %v729, 7
    %v731 = vsub.s32 %v728, %v730
    %v732 = vrot.slane %v710, %v731
    %v734 = vunpack.c.l.s4 1966171168
    %v735 = vunpack.c.0.s8 %v734
    %v736 = vlaneseq
    %v737 = vshrl.u32 %v736, 7
    %v738 = vsub.s32 %v735, %v737
    %v739 = vrot.slane %v711, %v738
    %v740 = vcombine.high %v718, %v718
    %v741 = vcombine.high %v725, %v725
    %v742 = vcombine.high %v732, %v732
    %v743 = vcombine.high %v739, %v739
    %v744 = vlaneseq
    %v745 = vshrl.u32 %v744, 7
    %v746 = vsub.s32 0, %v745
    %v747 = vrot.slane %v718, %v746
    %v748 = vlaneseq
    %v749 = vshrl.u32 %v748, 7
    %v750 = vsub.s32 0, %v749
    %v751 = vrot.slane %v732, %v750
    %v752 = vlaneseq
    %v753 = vshrl.u32 %v752, 7
    %v754 = vsub.s32 0, %v753
    %v755 = vrot.slane %v740, %v754
    %v756 = vlaneseq
    %v757 = vshrl.u32 %v756, 7
    %v758 = vsub.s32 0, %v757
    %v759 = vrot.slane %v742, %v758
    %v760 = vlaneseq
    %v761 = vshrl.u32 %v760, 7
    %v762 = vsub.s32 0, %v761
    %v763 = vrot.slane %v725, %v762
    %v764 = vlaneseq
    %v765 = vshrl.u32 %v764, 7
    %v766 = vsub.s32 0, %v765
    %v767 = vrot.slane %v739, %v766
    %v768 = vlaneseq
    %v769 = vshrl.u32 %v768, 7
    %v770 = vsub.s32 0, %v769
    %v771 = vrot.slane %v741, %v770
    %v772 = vlaneseq
    %v773 = vshrl.u32 %v772, 7
    %v774 = vsub.s32 0, %v773
    %v775 = vrot.slane %v743, %v774
    %v784 = vmul.f32 %v747, %v256
    %v785 = vmul.f32 %v751, %v256
    %v786 = vmul.f32 %v755, %v256
    %v787 = vmul.f32 %v759, %v256
    %v788 = vmul.f32 %v763, %v256
    %v789 = vmul.f32 %v767, %v256
    %v790 = vmul.f32 %v771, %v256
    %v791 = vmul.f32 %v775, %v256
    %v792 = vpack.c.bf16 %v784, %v784
    %v793 = vpack.c.bf16 %v785, %v785
    %v794 = vpack.c.bf16 %v786, %v786
    %v795 = vpack.c.bf16 %v787, %v787
    %v796 = vpack.c.bf16 %v788, %v788
    %v797 = vpack.c.bf16 %v789, %v789
    %v798 = vpack.c.bf16 %v790, %v790
    %v799 = vpack.c.bf16 %v791, %v791
    %v808 = vunpack.c.l.b16 %v792
    %v809 = vunpack.c.l.b16 %v793
    %v810 = vunpack.c.l.b16 %v794
    %v811 = vunpack.c.l.b16 %v795
    %v812 = vunpack.c.l.b16 %v796
    %v813 = vunpack.c.l.b16 %v797
    %v814 = vunpack.c.l.b16 %v798
    %v815 = vunpack.c.l.b16 %v799
    %v816 = vpack.c.b16 %v809, %v808
    %v817 = vpack.c.b16 %v811, %v810
    %v818 = vpack.c.b16 %v813, %v812
    %v819 = vpack.c.b16 %v815, %v814
    %v821 = vsel %vm81, %v816, 0
    %v824 = vsel %vm81, %v817, 0
    %v827 = vsel %vm81, %v818, 0
    %v830 = vsel %vm81, %v819, 0
    %832 = vmatprep.subr.bf16.mxu0 0
    %833 = vmatpush1.bf16.msra.mxu0 %v397
    %834 = vmatprep.subr.bf16.mxu0 0
    %835 = vmatpush1.bf16.msra.mxu0 %v398
    %836 = vmatprep.subr.bf16.mxu0 0
    %837 = vmatpush1.bf16.msra.mxu0 0
    %838 = vmatprep.subr.bf16.mxu0 0
    %839 = vmatpush1.bf16.msra.mxu0 0
    %840 = vmatprep.subr.bf16.mxu0 0
    %841 = vmatpush1.bf16.msra.mxu0 0
    %842 = vmatprep.subr.bf16.mxu0 0
    %843 = vmatpush1.bf16.msra.mxu0 0
    %844 = vmatprep.subr.bf16.mxu0 0
    %845 = vmatpush1.bf16.msra.mxu0 0
    %846 = vmatprep.subr.bf16.mxu0 0
    %847 = vmatpush1.bf16.msra.mxu0 0
    %848 = vmatprep.subr.bf16.mxu0 0
    %849 = vmatpush1.bf16.msra.mxu0 0
    %850 = vmatprep.subr.bf16.mxu0 0
    %851 = vmatpush1.bf16.msra.mxu0 0
    %852 = vmatprep.subr.bf16.mxu0 0
    %853 = vmatpush1.bf16.msra.mxu0 0
    %854 = vmatprep.subr.bf16.mxu0 0
    %855 = vmatpush1.bf16.msra.mxu0 0
    %856 = vmatprep.subr.bf16.mxu0 0
    %857 = vmatpush1.bf16.msra.mxu0 0
    %858 = vmatprep.subr.bf16.mxu0 0
    %859 = vmatpush1.bf16.msra.mxu0 0
    %860 = vmatprep.subr.bf16.mxu0 0
    %861 = vmatpush1.bf16.msra.mxu0 0
    %862 = vmatprep.subr.bf16.mxu0 0
    %863 = vmatpush1.bf16.msra.mxu0 0
    %864 = vmatprep.mubr.bf16.mxu0 0
    %865 = vmatmul.mubr.bf16.gmra.mrb[0].mxu0 %v821
    %v866 = vpop.f32.mrb[0].mxu0
    %v867 = vadd.f32 0.0, %v866
    %v868 = vpop.f32.mrb[0].mxu0
    %v869 = vpop.f32.mrb[0].mxu0
    %v870 = vadd.f32 0.0, %v869
    %v871 = vpop.f32.mrb[0].mxu0
    %872 = vmatprep.mubr.bf16.mxu0 0
    %873 = vmatmul.mubr.bf16.gmra.mrb[0].mxu0 %v824
    %v874 = vpop.f32.mrb[0].mxu0
    %v875 = vadd.f32 0.0, %v874
    %v876 = vpop.f32.mrb[0].mxu0
    %v877 = vpop.f32.mrb[0].mxu0
    %v878 = vadd.f32 0.0, %v877
    %v879 = vpop.f32.mrb[0].mxu0
    %880 = vmatprep.mubr.bf16.mxu0 0
    %881 = vmatmul.mubr.bf16.gmra.mrb[0].mxu0 %v827
    %v882 = vpop.f32.mrb[0].mxu0
    %v883 = vadd.f32 0.0, %v882
    %v884 = vpop.f32.mrb[0].mxu0
    %v885 = vpop.f32.mrb[0].mxu0
    %v886 = vadd.f32 0.0, %v885
    %v887 = vpop.f32.mrb[0].mxu0
    %888 = vmatprep.mubr.bf16.mxu0 0
    %889 = vmatmul.mubr.bf16.gmra.mrb[0].mxu0 %v830
    %v890 = vpop.f32.mrb[0].mxu0
    %v891 = vadd.f32 0.0, %v890
    %v892 = vpop.f32.mrb[0].mxu0
    %v893 = vpop.f32.mrb[0].mxu0
    %v894 = vadd.f32 0.0, %v893
    %v895 = vpop.f32.mrb[0].mxu0
    %896 = vdwg.mxu0
    %v897 = vsel %vm81, %v867, -inf
    %v898 = vrot.slane %v897, 4
    %v899 = vmax.f32 %v897, %v898
    %v900 = vrot.slane %v899, 2
    %v901 = vmax.f32 %v899, %v900
    %v902 = vrot.slane %v901, 1
    %v903 = vmax.f32 %v901, %v902
    %v904 = vsel %vm81, %v870, -inf
    %v905 = vrot.slane %v904, 4
    %v906 = vmax.f32 %v904, %v905
    %v907 = vrot.slane %v906, 2
    %v908 = vmax.f32 %v906, %v907
    %v909 = vrot.slane %v908, 1
    %v910 = vmax.f32 %v908, %v909
    %v911 = vsel %vm81, %v875, -inf
    %v912 = vrot.slane %v911, 4
    %v913 = vmax.f32 %v911, %v912
    %v914 = vrot.slane %v913, 2
    %v915 = vmax.f32 %v913, %v914
    %v916 = vrot.slane %v915, 1
    %v917 = vmax.f32 %v915, %v916
    %v918 = vsel %vm81, %v878, -inf
    %v919 = vrot.slane %v918, 4
    %v920 = vmax.f32 %v918, %v919
    %v921 = vrot.slane %v920, 2
    %v922 = vmax.f32 %v920, %v921
    %v923 = vrot.slane %v922, 1
    %v924 = vmax.f32 %v922, %v923
    %v925 = vsel %vm81, %v883, -inf
    %v926 = vrot.slane %v925, 4
    %v927 = vmax.f32 %v925, %v926
    %v928 = vrot.slane %v927, 2
    %v929 = vmax.f32 %v927, %v928
    %v930 = vrot.slane %v929, 1
    %v931 = vmax.f32 %v929, %v930
    %v932 = vsel %vm81, %v886, -inf
    %v933 = vrot.slane %v932, 4
    %v934 = vmax.f32 %v932, %v933
    %v935 = vrot.slane %v934, 2
    %v936 = vmax.f32 %v934, %v935
    %v937 = vrot.slane %v936, 1
    %v938 = vmax.f32 %v936, %v937
    %v939 = vsel %vm81, %v891, -inf
    %v940 = vrot.slane %v939, 4
    %v941 = vmax.f32 %v939, %v940
    %v942 = vrot.slane %v941, 2
    %v943 = vmax.f32 %v941, %v942
    %v944 = vrot.slane %v943, 1
    %v945 = vmax.f32 %v943, %v944
    %v946 = vsel %vm81, %v894, -inf
    %v947 = vrot.slane %v946, 4
    %v948 = vmax.f32 %v946, %v947
    %v949 = vrot.slane %v948, 2
    %v950 = vmax.f32 %v948, %v949
    %v951 = vrot.slane %v950, 1
    %v952 = vmax.f32 %v950, %v951
    %v953 = vsub.f32 %v867, %v903
    %v954 = vsub.f32 %v870, %v910
    %v955 = vsub.f32 %v875, %v917
    %v956 = vsub.f32 %v878, %v924
    %v957 = vsub.f32 %v883, %v931
    %v958 = vsub.f32 %v886, %v938
    %v959 = vsub.f32 %v891, %v945
    %v960 = vsub.f32 %v894, %v952
    %v961 = vmul.f32 %v953, 1.442695
    %v962 = vpow.pop %v961
    %v963 = vmul.f32 %v954, 1.442695
    %v964 = vpow.pop %v963
    %v965 = vmul.f32 %v955, 1.442695
    %v966 = vpow.pop %v965
    %v967 = vmul.f32 %v956, 1.442695
    %v968 = vpow.pop %v967
    %v969 = vmul.f32 %v957, 1.442695
    %v970 = vpow.pop %v969
    %v971 = vmul.f32 %v958, 1.442695
    %v972 = vpow.pop %v971
    %v973 = vmul.f32 %v959, 1.442695
    %v974 = vpow.pop %v973
    %v975 = vmul.f32 %v960, 1.442695
    %v976 = vpow.pop %v975
    %v977 = vsel %vm81, %v962, 0.0
    %v978 = vrot.slane %v977, 4
    %v979 = vadd.f32 %v977, %v978
    %v980 = vrot.slane %v979, 2
    %v981 = vadd.f32 %v979, %v980
    %v982 = vrot.slane %v981, 1
    %v983 = vadd.f32 %v981, %v982
    %v984 = vsel %vm81, %v964, 0.0
    %v985 = vrot.slane %v984, 4
    %v986 = vadd.f32 %v984, %v985
    %v987 = vrot.slane %v986, 2
    %v988 = vadd.f32 %v986, %v987
    %v989 = vrot.slane %v988, 1
    %v990 = vadd.f32 %v988, %v989
    %v991 = vsel %vm81, %v966, 0.0
    %v992 = vrot.slane %v991, 4
    %v993 = vadd.f32 %v991, %v992
    %v994 = vrot.slane %v993, 2
    %v995 = vadd.f32 %v993, %v994
    %v996 = vrot.slane %v995, 1
    %v997 = vadd.f32 %v995, %v996
    %v998 = vsel %vm81, %v968, 0.0
    %v999 = vrot.slane %v998, 4
    %v1000 = vadd.f32 %v998, %v999
    %v1001 = vrot.slane %v1000, 2
    %v1002 = vadd.f32 %v1000, %v1001
    %v1003 = vrot.slane %v1002, 1
    %v1004 = vadd.f32 %v1002, %v1003
    %v1005 = vsel %vm81, %v970, 0.0
    %v1006 = vrot.slane %v1005, 4
    %v1007 = vadd.f32 %v1005, %v1006
    %v1008 = vrot.slane %v1007, 2
    %v1009 = vadd.f32 %v1007, %v1008
    %v1010 = vrot.slane %v1009, 1
    %v1011 = vadd.f32 %v1009, %v1010
    %v1012 = vsel %vm81, %v972, 0.0
    %v1013 = vrot.slane %v1012, 4
    %v1014 = vadd.f32 %v1012, %v1013
    %v1015 = vrot.slane %v1014, 2
    %v1016 = vadd.f32 %v1014, %v1015
    %v1017 = vrot.slane %v1016, 1
    %v1018 = vadd.f32 %v1016, %v1017
    %v1019 = vsel %vm81, %v974, 0.0
    %v1020 = vrot.slane %v1019, 4
    %v1021 = vadd.f32 %v1019, %v1020
    %v1022 = vrot.slane %v1021, 2
    %v1023 = vadd.f32 %v1021, %v1022
    %v1024 = vrot.slane %v1023, 1
    %v1025 = vadd.f32 %v1023, %v1024
    %v1026 = vsel %vm81, %v976, 0.0
    %v1027 = vrot.slane %v1026, 4
    %v1028 = vadd.f32 %v1026, %v1027
    %v1029 = vrot.slane %v1028, 2
    %v1030 = vadd.f32 %v1028, %v1029
    %v1031 = vrot.slane %v1030, 1
    %v1032 = vadd.f32 %v1030, %v1031
    %v1033 = vrcp.pop %v983
    %v1034 = vrcp.pop %v990
    %v1035 = vrcp.pop %v997
    %v1036 = vrcp.pop %v1004
    %v1037 = vrcp.pop %v1011
    %v1038 = vrcp.pop %v1018
    %v1039 = vrcp.pop %v1025
    %v1040 = vrcp.pop %v1032
    %v1041 = vmul.f32 %v962, %v1033
    %v1042 = vmul.f32 %v964, %v1034
    %v1043 = vmul.f32 %v966, %v1035
    %v1044 = vmul.f32 %v968, %v1036
    %v1045 = vmul.f32 %v970, %v1037
    %v1046 = vmul.f32 %v972, %v1038
    %v1047 = vmul.f32 %v974, %v1039
    %v1048 = vmul.f32 %v976, %v1040
    %v1049 = vmul.f32 %v1041, %v262
    %v1050 = vmul.f32 %v1042, %v262
    %v1051 = vmul.f32 %v1043, %v262
    %v1052 = vmul.f32 %v1044, %v262
    %v1053 = vmul.f32 %v1045, %v262
    %v1054 = vmul.f32 %v1046, %v262
    %v1055 = vmul.f32 %v1047, %v262
    %v1056 = vmul.f32 %v1048, %v262
    %v1057 = vsel %vm81, %v1049, 0.0
    %v1058 = vrot.slane %v1057, 4
    %v1059 = vadd.f32 %v1057, %v1058
    %v1060 = vrot.slane %v1059, 2
    %v1061 = vadd.f32 %v1059, %v1060
    %v1062 = vrot.slane %v1061, 1
    %v1063 = vadd.f32 %v1061, %v1062
    %v1064 = vsel %vm81, %v1050, 0.0
    %v1065 = vrot.slane %v1064, 4
    %v1066 = vadd.f32 %v1064, %v1065
    %v1067 = vrot.slane %v1066, 2
    %v1068 = vadd.f32 %v1066, %v1067
    %v1069 = vrot.slane %v1068, 1
    %v1070 = vadd.f32 %v1068, %v1069
    %v1071 = vsel %vm81, %v1051, 0.0
    %v1072 = vrot.slane %v1071, 4
    %v1073 = vadd.f32 %v1071, %v1072
    %v1074 = vrot.slane %v1073, 2
    %v1075 = vadd.f32 %v1073, %v1074
    %v1076 = vrot.slane %v1075, 1
    %v1077 = vadd.f32 %v1075, %v1076
    %v1078 = vsel %vm81, %v1052, 0.0
    %v1079 = vrot.slane %v1078, 4
    %v1080 = vadd.f32 %v1078, %v1079
    %v1081 = vrot.slane %v1080, 2
    %v1082 = vadd.f32 %v1080, %v1081
    %v1083 = vrot.slane %v1082, 1
    %v1084 = vadd.f32 %v1082, %v1083
    %v1085 = vsel %vm81, %v1053, 0.0
    %v1086 = vrot.slane %v1085, 4
    %v1087 = vadd.f32 %v1085, %v1086
    %v1088 = vrot.slane %v1087, 2
    %v1089 = vadd.f32 %v1087, %v1088
    %v1090 = vrot.slane %v1089, 1
    %v1091 = vadd.f32 %v1089, %v1090
    %v1092 = vsel %vm81, %v1054, 0.0
    %v1093 = vrot.slane %v1092, 4
    %v1094 = vadd.f32 %v1092, %v1093
    %v1095 = vrot.slane %v1094, 2
    %v1096 = vadd.f32 %v1094, %v1095
    %v1097 = vrot.slane %v1096, 1
    %v1098 = vadd.f32 %v1096, %v1097
    %v1099 = vsel %vm81, %v1055, 0.0
    %v1100 = vrot.slane %v1099, 4
    %v1101 = vadd.f32 %v1099, %v1100
    %v1102 = vrot.slane %v1101, 2
    %v1103 = vadd.f32 %v1101, %v1102
    %v1104 = vrot.slane %v1103, 1
    %v1105 = vadd.f32 %v1103, %v1104
    %v1106 = vsel %vm81, %v1056, 0.0
    %v1107 = vrot.slane %v1106, 4
    %v1108 = vadd.f32 %v1106, %v1107
    %v1109 = vrot.slane %v1108, 2
    %v1110 = vadd.f32 %v1108, %v1109
    %v1111 = vrot.slane %v1110, 1
    %v1112 = vadd.f32 %v1110, %v1111
    %vm1121 = vcmask 1041409
    %v1122 = vsel %vm1121, %v651, %v644
    %vm1123 = vcmask 1042434
    %v1124 = vsel %vm1123, %v658, %v1122
    %vm1125 = vcmask 1043459
    %v1126 = vsel %vm1125, %v665, %v1124
    %vm1127 = vcmask 1044484
    %v1128 = vsel %vm1127, %v672, %v1126
    %vm1129 = vcmask 1045509
    %v1130 = vsel %vm1129, %v679, %v1128
    %vm1131 = vcmask 1046534
    %v1132 = vsel %vm1131, %v686, %v1130
    %vm1133 = vcmask 1047559
    %v1134 = vsel %vm1133, %v693, %v1132
    %v1144 = vsel %vm1121, %v1070, %v1063
    %v1145 = vsel %vm1123, %v1077, %v1144
    %v1146 = vsel %vm1125, %v1084, %v1145
    %v1147 = vsel %vm1127, %v1091, %v1146
    %v1148 = vsel %vm1129, %v1098, %v1147
    %v1149 = vsel %vm1131, %v1105, %v1148
    %v1150 = vsel %vm1133, %v1112, %v1149
    %v1152 = vpack.c.bf16 %v1150, %v1134
    %v1153 = vlaneseq
    %v1154 = vshrl.u32 %v1153, 7
    %v1155 = vsub.s32 0, %v1154
    %v1156 = vrot.slane %v46, %v1155
    %v1161 = vunpack.c.l.b16 %v57
    %v1162 = vunpack.c.l.b16 %v58
    %v1163 = vunpack.c.l.b16 %v59
    %v1164 = vunpack.c.l.b16 %v60
    %v1165 = vpack.c.b16 %v1162, %v1161
    %v1166 = vpack.c.b16 %v1164, %v1163
    %v1170 = vsel %vm81, %v1152, 0
    %1172 = vmatprep.subr.bf16.mxu0 0
    %1173 = vmatpush1.bf16.msra.mxu0 %v1165
    %1174 = vmatprep.subr.bf16.mxu0 0
    %1175 = vmatpush1.bf16.msra.mxu0 %v1166
    %1176 = vmatprep.subr.bf16.mxu0 0
    %1177 = vmatpush1.bf16.msra.mxu0 0
    %1178 = vmatprep.subr.bf16.mxu0 0
    %1179 = vmatpush1.bf16.msra.mxu0 0
    %1180 = vmatprep.subr.bf16.mxu0 0
    %1181 = vmatpush1.bf16.msra.mxu0 0
    %1182 = vmatprep.subr.bf16.mxu0 0
    %1183 = vmatpush1.bf16.msra.mxu0 0
    %1184 = vmatprep.subr.bf16.mxu0 0
    %1185 = vmatpush1.bf16.msra.mxu0 0
    %1186 = vmatprep.subr.bf16.mxu0 0
    %1187 = vmatpush1.bf16.msra.mxu0 0
    %1188 = vmatprep.subr.bf16.mxu0 0
    %1189 = vmatpush1.bf16.msra.mxu0 0
    %1190 = vmatprep.subr.bf16.mxu0 0
    %1191 = vmatpush1.bf16.msra.mxu0 0
    %1192 = vmatprep.subr.bf16.mxu0 0
    %1193 = vmatpush1.bf16.msra.mxu0 0
    %1194 = vmatprep.subr.bf16.mxu0 0
    %1195 = vmatpush1.bf16.msra.mxu0 0
    %1196 = vmatprep.subr.bf16.mxu0 0
    %1197 = vmatpush1.bf16.msra.mxu0 0
    %1198 = vmatprep.subr.bf16.mxu0 0
    %1199 = vmatpush1.bf16.msra.mxu0 0
    %1200 = vmatprep.subr.bf16.mxu0 0
    %1201 = vmatpush1.bf16.msra.mxu0 0
    %1202 = vmatprep.subr.bf16.mxu0 0
    %1203 = vmatpush1.bf16.msra.mxu0 0
    %1204 = vmatprep.mubr.bf16.mxu0 0
    %1205 = vmatmul.mubr.bf16.gmra.mrb[0].mxu0 %v1170
    %v1206 = vpop.f32.mrb[0].mxu0
    %v1207 = vadd.f32 %v1156, %v1206
    %v1208 = vpop.f32.mrb[0].mxu0
    %v1209 = vpop.f32.mrb[0].mxu0
    %v1210 = vadd.f32 %v1156, %v1209
    %v1211 = vpop.f32.mrb[0].mxu0
    %1212 = vdwg.mxu0
    %v1213 = vadd.f32 %v1207, %v37
    %v1214 = vadd.f32 %v1210, %v38
    %v1215 = vsel %vm81, %v1213, 0.0
    %1216 = vadd.xlane.f32.xlu0 %v1215
    %v1217 = vpop.xlane.xlu0 %1216
    %v1218 = vsel %vm81, %v1214, 0.0
    %1219 = vadd.xlane.f32.xlu0 %v1218
    %v1220 = vpop.xlane.xlu0 %1219
    %v1221 = vmul.f32 %v1217, %v88
    %v1222 = vmul.f32 %v1220, %v88
    %v1223 = vmul.f32 %v1213, %v1213
    %v1224 = vmul.f32 %v1214, %v1214
    %v1225 = vsel %vm81, %v1223, 0.0
    %1226 = vadd.xlane.f32.xlu0 %v1225
    %v1227 = vpop.xlane.xlu0 %1226
    %v1228 = vsel %vm81, %v1224, 0.0
    %1229 = vadd.xlane.f32.xlu0 %v1228
    %v1230 = vpop.xlane.xlu0 %1229
    %v1231 = vmul.f32 %v1227, %v88
    %v1232 = vmul.f32 %v1230, %v88
    %v1233 = vmul.f32 %v1221, %v1221
    %v1234 = vmul.f32 %v1222, %v1222
    %v1235 = vsub.f32 %v1231, %v1233
    %v1236 = vsub.f32 %v1232, %v1234
    %v1237 = vsub.f32 %v1213, %v1221
    %v1238 = vsub.f32 %v1214, %v1222
    %v1239 = vadd.f32 %v1235, 1e-12
    %v1240 = vadd.f32 %v1236, 1e-12
    %v1241 = vrsqrt.pop %v1239
    %v1242 = vrsqrt.pop %v1240
    %v1243 = vmul.f32 %v1237, %v1241
    %v1244 = vmul.f32 %v1238, %v1242
    %v1245 = vlaneseq
    %v1246 = vshrl.u32 %v1245, 7
    %v1247 = vsub.s32 0, %v1246
    %v1248 = vrot.slane %v41, %v1247
    %v1249 = vmul.f32 %v1243, %v1248
    %v1250 = vmul.f32 %v1244, %v1248
    %v1251 = vlaneseq
    %v1252 = vshrl.u32 %v1251, 7
    %v1253 = vsub.s32 0, %v1252
    %v1254 = vrot.slane %v42, %v1253
    %v1255 = vadd.f32 %v1249, %v1254
    %v1256 = vadd.f32 %v1250, %v1254
    %v1257 = vpack.c.bf16 %v1256, %v1255
    %v1258 = vlaneseq
    %v1259 = vshrl.u32 %v1258, 7
    %v1260 = vsub.s32 0, %v1259
    %v1261 = vrot.slane %v48, %v1260
    %v1266 = vunpack.c.l.b16 %v61
    %v1267 = vunpack.c.l.b16 %v62
    %v1268 = vunpack.c.l.b16 %v63
    %v1269 = vunpack.c.l.b16 %v64
    %v1270 = vpack.c.b16 %v1267, %v1266
    %v1271 = vpack.c.b16 %v1269, %v1268
    %v1275 = vsel %vm81, %v1257, 0
    %1277 = vmatprep.subr.bf16.mxu0 0
    %1278 = vmatpush1.bf16.msra.mxu0 %v1270
    %1279 = vmatprep.subr.bf16.mxu0 0
    %1280 = vmatpush1.bf16.msra.mxu0 %v1271
    %1281 = vmatprep.subr.bf16.mxu0 0
    %1282 = vmatpush1.bf16.msra.mxu0 0
    %1283 = vmatprep.subr.bf16.mxu0 0
    %1284 = vmatpush1.bf16.msra.mxu0 0
    %1285 = vmatprep.subr.bf16.mxu0 0
    %1286 = vmatpush1.bf16.msra.mxu0 0
    %1287 = vmatprep.subr.bf16.mxu0 0
    %1288 = vmatpush1.bf16.msra.mxu0 0
    %1289 = vmatprep.subr.bf16.mxu0 0
    %1290 = vmatpush1.bf16.msra.mxu0 0
    %1291 = vmatprep.subr.bf16.mxu0 0
    %1292 = vmatpush1.bf16.msra.mxu0 0
    %1293 = vmatprep.subr.bf16.mxu0 0
    %1294 = vmatpush1.bf16.msra.mxu0 0
    %1295 = vmatprep.subr.bf16.mxu0 0
    %1296 = vmatpush1.bf16.msra.mxu0 0
    %1297 = vmatprep.subr.bf16.mxu0 0
    %1298 = vmatpush1.bf16.msra.mxu0 0
    %1299 = vmatprep.subr.bf16.mxu0 0
    %1300 = vmatpush1.bf16.msra.mxu0 0
    %1301 = vmatprep.subr.bf16.mxu0 0
    %1302 = vmatpush1.bf16.msra.mxu0 0
    %1303 = vmatprep.subr.bf16.mxu0 0
    %1304 = vmatpush1.bf16.msra.mxu0 0
    %1305 = vmatprep.subr.bf16.mxu0 0
    %1306 = vmatpush1.bf16.msra.mxu0 0
    %1307 = vmatprep.subr.bf16.mxu0 0
    %1308 = vmatpush1.bf16.msra.mxu0 0
    %1309 = vmatprep.mubr.bf16.mxu0 0
    %1310 = vmatmul.mubr.bf16.gmra.mrb[0].mxu0 %v1275
    %v1311 = vpop.f32.mrb[0].mxu0
    %v1312 = vadd.f32 %v1261, %v1311
    %v1313 = vpop.f32.mrb[0].mxu0
    %v1314 = vpop.f32.mrb[0].mxu0
    %v1315 = vadd.f32 %v1261, %v1314
    %v1316 = vpop.f32.mrb[0].mxu0
    %1317 = vdwg.mxu0
    %v1318 = vmul.f32 %v1312, 0.5
    %v1319 = vmul.f32 %v1315, 0.5
    %v1320 = vmul.f32 %v1312, 0.044715
    %v1321 = vmul.f32 %v1315, 0.044715
    %v1322 = vmul.f32 %v1320, %v1312
    %v1323 = vmul.f32 %v1321, %v1315
    %v1324 = vmul.f32 %v1322, %v1312
    %v1325 = vmul.f32 %v1323, %v1315
    %v1326 = vadd.f32 %v1312, %v1324
    %v1327 = vadd.f32 %v1315, %v1325
    %v1328 = vmul.f32 %v1326, 0.7978846
    %v1329 = vmul.f32 %v1327, 0.7978846
    %v1330 = vtanh.pop %v1328
    %v1331 = vtanh.pop %v1329
    %v1332 = vadd.f32 %v1330, 1.0
    %v1333 = vadd.f32 %v1331, 1.0
    %v1334 = vmul.f32 %v1318, %v1332
    %v1335 = vmul.f32 %v1319, %v1333
    %v1336 = vpack.c.bf16 %v1335, %v1334
    %v1337 = vlaneseq
    %v1338 = vshrl.u32 %v1337, 7
    %v1339 = vsub.s32 0, %v1338
    %v1340 = vrot.slane %v47, %v1339
    %v1357 = vunpack.c.l.b16 %v65
    %v1358 = vunpack.c.l.b16 %v66
    %v1359 = vunpack.c.l.b16 %v67
    %v1360 = vunpack.c.l.b16 %v68
    %v1361 = vunpack.c.l.b16 %v69
    %v1362 = vunpack.c.l.b16 %v70
    %v1363 = vunpack.c.l.b16 %v71
    %v1364 = vunpack.c.l.b16 %v72
    %v1365 = vunpack.c.l.b16 %v73
    %v1366 = vunpack.c.l.b16 %v74
    %v1367 = vunpack.c.l.b16 %v75
    %v1368 = vunpack.c.l.b16 %v76
    %v1369 = vunpack.c.l.b16 %v77
    %v1370 = vunpack.c.l.b16 %v78
    %v1371 = vunpack.c.l.b16 %v79
    %v1372 = vunpack.c.l.b16 %v80
    %v1373 = vpack.c.b16 %v1358, %v1357
    %v1374 = vpack.c.b16 %v1360, %v1359
    %v1375 = vpack.c.b16 %v1362, %v1361
    %v1376 = vpack.c.b16 %v1364, %v1363
    %v1377 = vpack.c.b16 %v1366, %v1365
    %v1378 = vpack.c.b16 %v1368, %v1367
    %v1379 = vpack.c.b16 %v1370, %v1369
    %v1380 = vpack.c.b16 %v1372, %v1371
    %1389 = vmatprep.subr.bf16.mxu0 0
    %1390 = vmatpush1.bf16.msra.mxu0 %v1373
    %1391 = vmatprep.subr.bf16.mxu0 0
    %1392 = vmatpush1.bf16.msra.mxu0 %v1374
    %1393 = vmatprep.subr.bf16.mxu0 0
    %1394 = vmatpush1.bf16.msra.mxu0 %v1375
    %1395 = vmatprep.subr.bf16.mxu0 0
    %1396 = vmatpush1.bf16.msra.mxu0 %v1376
    %1397 = vmatprep.subr.bf16.mxu0 0
    %1398 = vmatpush1.bf16.msra.mxu0 %v1377
    %1399 = vmatprep.subr.bf16.mxu0 0
    %1400 = vmatpush1.bf16.msra.mxu0 %v1378
    %1401 = vmatprep.subr.bf16.mxu0 0
    %1402 = vmatpush1.bf16.msra.mxu0 %v1379
    %1403 = vmatprep.subr.bf16.mxu0 0
    %1404 = vmatpush1.bf16.msra.mxu0 %v1380
    %1405 = vmatprep.subr.bf16.mxu0 0
    %1406 = vmatpush1.bf16.msra.mxu0 0
    %1407 = vmatprep.subr.bf16.mxu0 0
    %1408 = vmatpush1.bf16.msra.mxu0 0
    %1409 = vmatprep.subr.bf16.mxu0 0
    %1410 = vmatpush1.bf16.msra.mxu0 0
    %1411 = vmatprep.subr.bf16.mxu0 0
    %1412 = vmatpush1.bf16.msra.mxu0 0
    %1413 = vmatprep.subr.bf16.mxu0 0
    %1414 = vmatpush1.bf16.msra.mxu0 0
    %1415 = vmatprep.subr.bf16.mxu0 0
    %1416 = vmatpush1.bf16.msra.mxu0 0
    %1417 = vmatprep.subr.bf16.mxu0 0
    %1418 = vmatpush1.bf16.msra.mxu0 0
    %1419 = vmatprep.subr.bf16.mxu0 0
    %1420 = vmatpush1.bf16.msra.mxu0 0
    %1421 = vmatprep.mubr.bf16.mxu0 0
    %1422 = vmatmul.mubr.bf16.gmra.mrb[0].mxu0 %v1336
    %v1423 = vpop.f32.mrb[0].mxu0
    %v1424 = vadd.f32 %v1340, %v1423
    %v1425 = vpop.f32.mrb[0].mxu0
    %v1426 = vpop.f32.mrb[0].mxu0
    %v1427 = vadd.f32 %v1340, %v1426
    %v1428 = vpop.f32.mrb[0].mxu0
    %1429 = vdwg.mxu0
    %v1430 = vadd.f32 %v1424, %v1213
    %v1431 = vadd.f32 %v1427, %v1214
    %s1432 = scalar_lea.vmem %s3, 16
    %v1433 = vld [vmem:[%s1432] sm:$0x1]
    %v1434 = vld [vmem:[%s1432 + $0x1] sm:$0x1]
    %v1435 = vld [vmem:[%s1432 + $0x2] sm:$0x1]
    %v1436 = vld [vmem:[%s1432 + $0x3] sm:$0x1]
    %v1437 = vld [vmem:[%s1432 + $0x4] sm:$0x1]
    %v1438 = vld [vmem:[%s1432 + $0x5] sm:$0x1]
    %v1439 = vld [vmem:[%s1432 + $0x6] sm:$0x1]
    %v1440 = vld [vmem:[%s1432 + $0x7] sm:$0x1]
    %v1441 = vld [vmem:[%s1432 + $0x9] sm:$0x1]
    %v1442 = vld [vmem:[%s1432 + $0x8] sm:$0x1]
    %s1443 = scalar_lea.vmem [#allocation2], 96
    %v1444 = vld [vmem:[%s1443] sm:$0xff]
    %v1445 = vld [vmem:[%s1443 + $0x8] sm:$0xf]
    %v1446 = vld [vmem:[%s1443 + $0x18] sm:$0xff]
    %v1447 = vld [vmem:[%s1443 + $0x20] sm:$0xf]
    %v1448 = vld [vmem:[%s1443 + $0x30] sm:$0xff]
    %v1449 = vld [vmem:[%s1443 + $0x38] sm:$0xf]
    %v1450 = vld [vmem:[%s1443 + $0x48] sm:$0xff]
    %v1451 = vld [vmem:[%s1443 + $0x50] sm:$0xf]
    %v1452 = vld [vmem:[%s1443 + $0xc] sm:$0xf]
    %v1453 = vld [vmem:[%s1443 + $0x24] sm:$0xf]
    %v1454 = vld [vmem:[%s1443 + $0x3c] sm:$0xf]
    %v1455 = vld [vmem:[%s1443 + $0x54] sm:$0xf]
    %v1456 = vld [vmem:[%s1443 + $0x10] sm:$0xf]
    %v1457 = vld [vmem:[%s1443 + $0x28] sm:$0xf]
    %v1458 = vld [vmem:[%s1443 + $0x40] sm:$0xf]
    %v1459 = vld [vmem:[%s1443 + $0x58] sm:$0xf]
    %s1460 = scalar_lea.vmem %s2, 64
    %v1461 = vld [vmem:[%s1460] sm:$0xf]
    %v1462 = vld [vmem:[%s1460 + $0x4] sm:$0xf]
    %v1463 = vld [vmem:[%s1460 + $0x8] sm:$0xf]
    %v1464 = vld [vmem:[%s1460 + $0xc] sm:$0xf]
    %v1465 = vld [vmem:[%s1460 + $0x10] sm:$0xf]
    %v1466 = vld [vmem:[%s1460 + $0x14] sm:$0xf]
    %v1467 = vld [vmem:[%s1460 + $0x18] sm:$0xf]
    %v1468 = vld [vmem:[%s1460 + $0x1c] sm:$0xf]
    %v1469 = vld [vmem:[%s1460 + $0x20] sm:$0xf]
    %v1470 = vld [vmem:[%s1460 + $0x24] sm:$0xf]
    %v1471 = vld [vmem:[%s1460 + $0x28] sm:$0xf]
    %v1472 = vld [vmem:[%s1460 + $0x2c] sm:$0xf]
    %v1473 = vld [vmem:[%s1460 + $0x30] sm:$0xf]
    %v1474 = vld [vmem:[%s1460 + $0x34] sm:$0xf]
    %v1475 = vld [vmem:[%s1460 + $0x38] sm:$0xf]
    %v1476 = vld [vmem:[%s1460 + $0x3c] sm:$0xf]
    %v1477 = vsel %vm81, %v1430, 0.0
    %1478 = vadd.xlane.f32.xlu0 %v1477
    %v1479 = vpop.xlane.xlu0 %1478
    %v1480 = vsel %vm81, %v1431, 0.0
    %1481 = vadd.xlane.f32.xlu0 %v1480
    %v1482 = vpop.xlane.xlu0 %1481
    %v1483 = vmul.f32 %v1479, %v88
    %v1484 = vmul.f32 %v1482, %v88
    %v1485 = vmul.f32 %v1430, %v1430
    %v1486 = vmul.f32 %v1431, %v1431
    %v1487 = vsel %vm81, %v1485, 0.0
    %1488 = vadd.xlane.f32.xlu0 %v1487
    %v1489 = vpop.xlane.xlu0 %1488
    %v1490 = vsel %vm81, %v1486, 0.0
    %1491 = vadd.xlane.f32.xlu0 %v1490
    %v1492 = vpop.xlane.xlu0 %1491
    %v1493 = vmul.f32 %v1489, %v88
    %v1494 = vmul.f32 %v1492, %v88
    %v1495 = vmul.f32 %v1483, %v1483
    %v1496 = vmul.f32 %v1484, %v1484
    %v1497 = vsub.f32 %v1493, %v1495
    %v1498 = vsub.f32 %v1494, %v1496
    %v1499 = vsub.f32 %v1430, %v1483
    %v1500 = vsub.f32 %v1431, %v1484
    %v1501 = vadd.f32 %v1497, 1e-12
    %v1502 = vadd.f32 %v1498, 1e-12
    %v1503 = vrsqrt.pop %v1501
    %v1504 = vrsqrt.pop %v1502
    %v1505 = vmul.f32 %v1499, %v1503
    %v1506 = vmul.f32 %v1500, %v1504
    %v1507 = vlaneseq
    %v1508 = vshrl.u32 %v1507, 7
    %v1509 = vsub.s32 0, %v1508
    %v1510 = vrot.slane %v1433, %v1509
    %v1511 = vmul.f32 %v1505, %v1510
    %v1512 = vmul.f32 %v1506, %v1510
    %v1513 = vlaneseq
    %v1514 = vshrl.u32 %v1513, 7
    %v1515 = vsub.s32 0, %v1514
    %v1516 = vrot.slane %v1434, %v1515
    %v1517 = vadd.f32 %v1511, %v1516
    %v1518 = vadd.f32 %v1512, %v1516
    %v1519 = vpack.c.bf16 %v1518, %v1517
    %v1528 = vunpack.c.l.b16 %v1444
    %v1529 = vunpack.c.h.b16 %v1444
    %v1530 = vunpack.c.l.b16 %v1445
    %v1531 = vunpack.c.l.b16 %v1446
    %v1532 = vunpack.c.h.b16 %v1446
    %v1533 = vunpack.c.l.b16 %v1447
    %v1534 = vunpack.c.l.b16 %v1448
    %v1535 = vunpack.c.h.b16 %v1448
    %v1536 = vunpack.c.l.b16 %v1449
    %v1537 = vunpack.c.l.b16 %v1450
    %v1538 = vunpack.c.h.b16 %v1450
    %v1539 = vunpack.c.l.b16 %v1451
    %v1540 = vpack.c.b16 %v1531, %v1528
    %v1541 = vpack.c.b16 %v1532, %v1529
    %v1542 = vpack.c.b16 %v1533, %v1530
    %v1543 = vpack.c.b16 %v1537, %v1534
    %v1544 = vpack.c.b16 %v1538, %v1535
    %v1545 = vpack.c.b16 %v1539, %v1536
    %v1553 = vsel %vm81, %v1519, 0
    %1555 = vmatprep.subr.bf16.mxu0 %v1541
    %1556 = vmatpush1.bf16.msra.mxu0 %v1540
    %1557 = vmatprep.subr.bf16.mxu0 %v1544
    %1558 = vmatpush1.bf16.msra.mxu0 %v1543
    %1559 = vmatprep.subr.bf16.mxu0 0
    %1560 = vmatpush1.bf16.msra.mxu0 0
    %1561 = vmatprep.subr.bf16.mxu0 0
    %1562 = vmatpush1.bf16.msra.mxu0 0
    %1563 = vmatprep.subr.bf16.mxu0 0
    %1564 = vmatpush1.bf16.msra.mxu0 0
    %1565 = vmatprep.subr.bf16.mxu0 0
    %1566 = vmatpush1.bf16.msra.mxu0 0
    %1567 = vmatprep.subr.bf16.mxu0 0
    %1568 = vmatpush1.bf16.msra.mxu0 0
    %1569 = vmatprep.subr.bf16.mxu0 0
    %1570 = vmatpush1.bf16.msra.mxu0 0
    %1571 = vmatprep.subr.bf16.mxu0 0
    %1572 = vmatpush1.bf16.msra.mxu0 0
    %1573 = vmatprep.subr.bf16.mxu0 0
    %1574 = vmatpush1.bf16.msra.mxu0 0
    %1575 = vmatprep.subr.bf16.mxu0 0
    %1576 = vmatpush1.bf16.msra.mxu0 0
    %1577 = vmatprep.subr.bf16.mxu0 0
    %1578 = vmatpush1.bf16.msra.mxu0 0
    %1579 = vmatprep.subr.bf16.mxu0 0
    %1580 = vmatpush1.bf16.msra.mxu0 0
    %1581 = vmatprep.subr.bf16.mxu0 0
    %1582 = vmatpush1.bf16.msra.mxu0 0
    %1583 = vmatprep.subr.bf16.mxu0 0
    %1584 = vmatpush1.bf16.msra.mxu0 0
    %1585 = vmatprep.subr.bf16.mxu0 0
    %1586 = vmatpush1.bf16.msra.mxu0 0
    %1587 = vmatprep.mubr.bf16.mxu0 0
    %1588 = vmatmul.mubr.bf16.gmra.mrb[0].mxu0 %v1553
    %v1589 = vpop.f32.mrb[0].mxu0
    %v1590 = vadd.f32 0.0, %v1589
    %v1591 = vpop.f32.mrb[0].mxu0
    %v1592 = vadd.f32 0.0, %v1591
    %v1593 = vpop.f32.mrb[0].mxu0
    %v1594 = vadd.f32 0.0, %v1593
    %v1595 = vpop.f32.mrb[0].mxu0
    %v1596 = vadd.f32 0.0, %v1595
    %1597 = vdwg.mxu0
    %1598 = vmatprep.subr.bf16.mxu0 0
    %1599 = vmatpush1.bf16.msra.mxu0 %v1542
    %1600 = vmatprep.subr.bf16.mxu0 0
    %1601 = vmatpush1.bf16.msra.mxu0 %v1545
    %1602 = vmatprep.subr.bf16.mxu0 0
    %1603 = vmatpush1.bf16.msra.mxu0 0
    %1604 = vmatprep.subr.bf16.mxu0 0
    %1605 = vmatpush1.bf16.msra.mxu0 0
    %1606 = vmatprep.subr.bf16.mxu0 0
    %1607 = vmatpush1.bf16.msra.mxu0 0
    %1608 = vmatprep.subr.bf16.mxu0 0
    %1609 = vmatpush1.bf16.msra.mxu0 0
    %1610 = vmatprep.subr.bf16.mxu0 0
    %1611 = vmatpush1.bf16.msra.mxu0 0
    %1612 = vmatprep.subr.bf16.mxu0 0
    %1613 = vmatpush1.bf16.msra.mxu0 0
    %1614 = vmatprep.subr.bf16.mxu0 0
    %1615 = vmatpush1.bf16.msra.mxu0 0
    %1616 = vmatprep.subr.bf16.mxu0 0
    %1617 = vmatpush1.bf16.msra.mxu0 0
    %1618 = vmatprep.subr.bf16.mxu0 0
    %1619 = vmatpush1.bf16.msra.mxu0 0
    %1620 = vmatprep.subr.bf16.mxu0 0
    %1621 = vmatpush1.bf16.msra.mxu0 0
    %1622 = vmatprep.subr.bf16.mxu0 0
    %1623 = vmatpush1.bf16.msra.mxu0 0
    %1624 = vmatprep.subr.bf16.mxu0 0
    %1625 = vmatpush1.bf16.msra.mxu0 0
    %1626 = vmatprep.subr.bf16.mxu0 0
    %1627 = vmatpush1.bf16.msra.mxu0 0
    %1628 = vmatprep.subr.bf16.mxu0 0
    %1629 = vmatpush1.bf16.msra.mxu0 0
    %1630 = vmatprep.mubr.bf16.mxu0 0
    %1631 = vmatmul.mubr.bf16.gmra.mrb[0].mxu0 %v1553
    %v1632 = vpop.f32.mrb[0].mxu0
    %v1633 = vadd.f32 0.0, %v1632
    %v1634 = vpop.f32.mrb[0].mxu0
    %v1635 = vpop.f32.mrb[0].mxu0
    %v1636 = vadd.f32 0.0, %v1635
    %v1637 = vpop.f32.mrb[0].mxu0
    %1638 = vdwg.mxu0
    %v1639 = vlaneseq
    %v1640 = vshrl.u32 %v1639, 7
    %v1641 = vsub.s32 0, %v1640
    %v1642 = vrot.slane %v1437, %v1641
    %v1643 = vadd.f32 %v1590, %v1642
    %v1644 = vadd.f32 %v1594, %v1642
    %v1645 = vlaneseq
    %v1646 = vshrl.u32 %v1645, 7
    %v1647 = vsub.s32 0, %v1646
    %v1648 = vrot.slane %v1438, %v1647
    %v1649 = vadd.f32 %v1592, %v1648
    %v1650 = vadd.f32 %v1596, %v1648
    %v1651 = vlaneseq
    %v1652 = vshrl.u32 %v1651, 7
    %v1653 = vsub.s32 0, %v1652
    %v1654 = vrot.slane %v1439, %v1653
    %v1655 = vadd.f32 %v1633, %v1654
    %v1656 = vadd.f32 %v1636, %v1654
    %v1658 = vcombine.high %v1643, %v1643
    %v1660 = vunpack.c.l.s4 1966171168
    %v1661 = vunpack.c.0.s8 %v1660
    %v1662 = vlaneseq
    %v1663 = vshrl.u32 %v1662, 7
    %v1664 = vsub.s32 %v1661, %v1663
    %v1665 = vrot.slane %v1643, %v1664
    %v1667 = vunpack.c.l.s4 1966171168
    %v1668 = vunpack.c.0.s8 %v1667
    %v1669 = vlaneseq
    %v1670 = vshrl.u32 %v1669, 7
    %v1671 = vsub.s32 %v1668, %v1670
    %v1672 = vrot.slane %v1658, %v1671
    %v1673 = vcombine.high %v1665, %v1665
    %v1674 = vcombine.high %v1672, %v1672
    %v1676 = vunpack.c.l.s4 1966171168
    %v1677 = vunpack.c.0.s8 %v1676
    %v1678 = vlaneseq
    %v1679 = vshrl.u32 %v1678, 7
    %v1680 = vsub.s32 %v1677, %v1679
    %v1681 = vrot.slane %v1665, %v1680
    %v1683 = vunpack.c.l.s4 1966171168
    %v1684 = vunpack.c.0.s8 %v1683
    %v1685 = vlaneseq
    %v1686 = vshrl.u32 %v1685, 7
    %v1687 = vsub.s32 %v1684, %v1686
    %v1688 = vrot.slane %v1672, %v1687
    %v1690 = vunpack.c.l.s4 1966171168
    %v1691 = vunpack.c.0.s8 %v1690
    %v1692 = vlaneseq
    %v1693 = vshrl.u32 %v1692, 7
    %v1694 = vsub.s32 %v1691, %v1693
    %v1695 = vrot.slane %v1673, %v1694
    %v1697 = vunpack.c.l.s4 1966171168
    %v1698 = vunpack.c.0.s8 %v1697
    %v1699 = vlaneseq
    %v1700 = vshrl.u32 %v1699, 7
    %v1701 = vsub.s32 %v1698, %v1700
    %v1702 = vrot.slane %v1674, %v1701
    %v1703 = vcombine.high %v1681, %v1681
    %v1704 = vcombine.high %v1688, %v1688
    %v1705 = vcombine.high %v1695, %v1695
    %v1706 = vcombine.high %v1702, %v1702
    %v1707 = vlaneseq
    %v1708 = vshrl.u32 %v1707, 7
    %v1709 = vsub.s32 0, %v1708
    %v1710 = vrot.slane %v1681, %v1709
    %v1711 = vlaneseq
    %v1712 = vshrl.u32 %v1711, 7
    %v1713 = vsub.s32 0, %v1712
    %v1714 = vrot.slane %v1695, %v1713
    %v1715 = vlaneseq
    %v1716 = vshrl.u32 %v1715, 7
    %v1717 = vsub.s32 0, %v1716
    %v1718 = vrot.slane %v1703, %v1717
    %v1719 = vlaneseq
    %v1720 = vshrl.u32 %v1719, 7
    %v1721 = vsub.s32 0, %v1720
    %v1722 = vrot.slane %v1705, %v1721
    %v1723 = vlaneseq
    %v1724 = vshrl.u32 %v1723, 7
    %v1725 = vsub.s32 0, %v1724
    %v1726 = vrot.slane %v1688, %v1725
    %v1727 = vlaneseq
    %v1728 = vshrl.u32 %v1727, 7
    %v1729 = vsub.s32 0, %v1728
    %v1730 = vrot.slane %v1702, %v1729
    %v1731 = vlaneseq
    %v1732 = vshrl.u32 %v1731, 7
    %v1733 = vsub.s32 0, %v1732
    %v1734 = vrot.slane %v1704, %v1733
    %v1735 = vlaneseq
    %v1736 = vshrl.u32 %v1735, 7
    %v1737 = vsub.s32 0, %v1736
    %v1738 = vrot.slane %v1706, %v1737
    %v1747 = vmul.f32 %v1710, %v1649
    %v1748 = vmul.f32 %v1714, %v1649
    %v1749 = vmul.f32 %v1718, %v1649
    %v1750 = vmul.f32 %v1722, %v1649
    %v1751 = vmul.f32 %v1726, %v1649
    %v1752 = vmul.f32 %v1730, %v1649
    %v1753 = vmul.f32 %v1734, %v1649
    %v1754 = vmul.f32 %v1738, %v1649
    %v1755 = vpack.c.bf16 %v1747, %v1747
    %v1756 = vpack.c.bf16 %v1748, %v1748
    %v1757 = vpack.c.bf16 %v1749, %v1749
    %v1758 = vpack.c.bf16 %v1750, %v1750
    %v1759 = vpack.c.bf16 %v1751, %v1751
    %v1760 = vpack.c.bf16 %v1752, %v1752
    %v1761 = vpack.c.bf16 %v1753, %v1753
    %v1762 = vpack.c.bf16 %v1754, %v1754
    %v1771 = vunpack.c.l.b16 %v1755
    %v1772 = vunpack.c.l.b16 %v1756
    %v1773 = vunpack.c.l.b16 %v1757
    %v1774 = vunpack.c.l.b16 %v1758
    %v1775 = vunpack.c.l.b16 %v1759
    %v1776 = vunpack.c.l.b16 %v1760
    %v1777 = vunpack.c.l.b16 %v1761
    %v1778 = vunpack.c.l.b16 %v1762
    %v1779 = vpack.c.b16 %v1772, %v1771
    %v1780 = vpack.c.b16 %v1774, %v1773
    %v1781 = vpack.c.b16 %v1776, %v1775
    %v1782 = vpack.c.b16 %v1778, %v1777
    %v1784 = vsel %vm81, %v1779, 0
    %v1787 = vsel %vm81, %v1780, 0
    %v1790 = vsel %vm81, %v1781, 0
    %v1793 = vsel %vm81, %v1782, 0
    %1795 = vmatprep.subr.bf16.mxu0 0
    %1796 = vmatpush1.bf16.msra.mxu0 %v397
    %1797 = vmatprep.subr.bf16.mxu0 0
    %1798 = vmatpush1.bf16.msra.mxu0 %v398
    %1799 = vmatprep.subr.bf16.mxu0 0
    %1800 = vmatpush1.bf16.msra.mxu0 0
    %1801 = vmatprep.subr.bf16.mxu0 0
    %1802 = vmatpush1.bf16.msra.mxu0 0
    %1803 = vmatprep.subr.bf16.mxu0 0
    %1804 = vmatpush1.bf16.msra.mxu0 0
    %1805 = vmatprep.subr.bf16.mxu0 0
    %1806 = vmatpush1.bf16.msra.mxu0 0
    %1807 = vmatprep.subr.bf16.mxu0 0
    %1808 = vmatpush1.bf16.msra.mxu0 0
    %1809 = vmatprep.subr.bf16.mxu0 0
    %1810 = vmatpush1.bf16.msra.mxu0 0
    %1811 = vmatprep.subr.bf16.mxu0 0
    %1812 = vmatpush1.bf16.msra.mxu0 0
    %1813 = vmatprep.subr.bf16.mxu0 0
    %1814 = vmatpush1.bf16.msra.mxu0 0
    %1815 = vmatprep.subr.bf16.mxu0 0
    %1816 = vmatpush1.bf16.msra.mxu0 0
    %1817 = vmatprep.subr.bf16.mxu0 0
    %1818 = vmatpush1.bf16.msra.mxu0 0
    %1819 = vmatprep.subr.bf16.mxu0 0
    %1820 = vmatpush1.bf16.msra.mxu0 0
    %1821 = vmatprep.subr.bf16.mxu0 0
    %1822 = vmatpush1.bf16.msra.mxu0 0
    %1823 = vmatprep.subr.bf16.mxu0 0
    %1824 = vmatpush1.bf16.msra.mxu0 0
    %1825 = vmatprep.subr.bf16.mxu0 0
    %1826 = vmatpush1.bf16.msra.mxu0 0
    %1827 = vmatprep.mubr.bf16.mxu0 0
    %1828 = vmatmul.mubr.bf16.gmra.mrb[0].mxu0 %v1784
    %v1829 = vpop.f32.mrb[0].mxu0
    %v1830 = vadd.f32 0.0, %v1829
    %v1831 = vpop.f32.mrb[0].mxu0
    %v1832 = vpop.f32.mrb[0].mxu0
    %v1833 = vadd.f32 0.0, %v1832
    %v1834 = vpop.f32.mrb[0].mxu0
    %1835 = vmatprep.mubr.bf16.mxu0 0
    %1836 = vmatmul.mubr.bf16.gmra.mrb[0].mxu0 %v1787
    %v1837 = vpop.f32.mrb[0].mxu0
    %v1838 = vadd.f32 0.0, %v1837
    %v1839 = vpop.f32.mrb[0].mxu0
    %v1840 = vpop.f32.mrb[0].mxu0
    %v1841 = vadd.f32 0.0, %v1840
    %v1842 = vpop.f32.mrb[0].mxu0
    %1843 = vmatprep.mubr.bf16.mxu0 0
    %1844 = vmatmul.mubr.bf16.gmra.mrb[0].mxu0 %v1790
    %v1845 = vpop.f32.mrb[0].mxu0
    %v1846 = vadd.f32 0.0, %v1845
    %v1847 = vpop.f32.mrb[0].mxu0
    %v1848 = vpop.f32.mrb[0].mxu0
    %v1849 = vadd.f32 0.0, %v1848
    %v1850 = vpop.f32.mrb[0].mxu0
    %1851 = vmatprep.mubr.bf16.mxu0 0
    %1852 = vmatmul.mubr.bf16.gmra.mrb[0].mxu0 %v1793
    %v1853 = vpop.f32.mrb[0].mxu0
    %v1854 = vadd.f32 0.0, %v1853
    %v1855 = vpop.f32.mrb[0].mxu0
    %v1856 = vpop.f32.mrb[0].mxu0
    %v1857 = vadd.f32 0.0, %v1856
    %v1858 = vpop.f32.mrb[0].mxu0
    %1859 = vdwg.mxu0
    %v1860 = vsel %vm81, %v1830, -inf
    %v1861 = vrot.slane %v1860, 4
    %v1862 = vmax.f32 %v1860, %v1861
    %v1863 = vrot.slane %v1862, 2
    %v1864 = vmax.f32 %v1862, %v1863
    %v1865 = vrot.slane %v1864, 1
    %v1866 = vmax.f32 %v1864, %v1865
    %v1867 = vsel %vm81, %v1833, -inf
    %v1868 = vrot.slane %v1867, 4
    %v1869 = vmax.f32 %v1867, %v1868
    %v1870 = vrot.slane %v1869, 2
    %v1871 = vmax.f32 %v1869, %v1870
    %v1872 = vrot.slane %v1871, 1
    %v1873 = vmax.f32 %v1871, %v1872
    %v1874 = vsel %vm81, %v1838, -inf
    %v1875 = vrot.slane %v1874, 4
    %v1876 = vmax.f32 %v1874, %v1875
    %v1877 = vrot.slane %v1876, 2
    %v1878 = vmax.f32 %v1876, %v1877
    %v1879 = vrot.slane %v1878, 1
    %v1880 = vmax.f32 %v1878, %v1879
    %v1881 = vsel %vm81, %v1841, -inf
    %v1882 = vrot.slane %v1881, 4
    %v1883 = vmax.f32 %v1881, %v1882
    %v1884 = vrot.slane %v1883, 2
    %v1885 = vmax.f32 %v1883, %v1884
    %v1886 = vrot.slane %v1885, 1
    %v1887 = vmax.f32 %v1885, %v1886
    %v1888 = vsel %vm81, %v1846, -inf
    %v1889 = vrot.slane %v1888, 4
    %v1890 = vmax.f32 %v1888, %v1889
    %v1891 = vrot.slane %v1890, 2
    %v1892 = vmax.f32 %v1890, %v1891
    %v1893 = vrot.slane %v1892, 1
    %v1894 = vmax.f32 %v1892, %v1893
    %v1895 = vsel %vm81, %v1849, -inf
    %v1896 = vrot.slane %v1895, 4
    %v1897 = vmax.f32 %v1895, %v1896
    %v1898 = vrot.slane %v1897, 2
    %v1899 = vmax.f32 %v1897, %v1898
    %v1900 = vrot.slane %v1899, 1
    %v1901 = vmax.f32 %v1899, %v1900
    %v1902 = vsel %vm81, %v1854, -inf
    %v1903 = vrot.slane %v1902, 4
    %v1904 = vmax.f32 %v1902, %v1903
    %v1905 = vrot.slane %v1904, 2
    %v1906 = vmax.f32 %v1904, %v1905
    %v1907 = vrot.slane %v1906, 1
    %v1908 = vmax.f32 %v1906, %v1907
    %v1909 = vsel %vm81, %v1857, -inf
    %v1910 = vrot.slane %v1909, 4
    %v1911 = vmax.f32 %v1909, %v1910
    %v1912 = vrot.slane %v1911, 2
    %v1913 = vmax.f32 %v1911, %v1912
    %v1914 = vrot.slane %v1913, 1
    %v1915 = vmax.f32 %v1913, %v1914
    %v1916 = vsub.f32 %v1830, %v1866
    %v1917 = vsub.f32 %v1833, %v1873
    %v1918 = vsub.f32 %v1838, %v1880
    %v1919 = vsub.f32 %v1841, %v1887
    %v1920 = vsub.f32 %v1846, %v1894
    %v1921 = vsub.f32 %v1849, %v1901
    %v1922 = vsub.f32 %v1854, %v1908
    %v1923 = vsub.f32 %v1857, %v1915
    %v1924 = vmul.f32 %v1916, 1.442695
    %v1925 = vpow.pop %v1924
    %v1926 = vmul.f32 %v1917, 1.442695
    %v1927 = vpow.pop %v1926
    %v1928 = vmul.f32 %v1918, 1.442695
    %v1929 = vpow.pop %v1928
    %v1930 = vmul.f32 %v1919, 1.442695
    %v1931 = vpow.pop %v1930
    %v1932 = vmul.f32 %v1920, 1.442695
    %v1933 = vpow.pop %v1932
    %v1934 = vmul.f32 %v1921, 1.442695
    %v1935 = vpow.pop %v1934
    %v1936 = vmul.f32 %v1922, 1.442695
    %v1937 = vpow.pop %v1936
    %v1938 = vmul.f32 %v1923, 1.442695
    %v1939 = vpow.pop %v1938
    %v1940 = vsel %vm81, %v1925, 0.0
    %v1941 = vrot.slane %v1940, 4
    %v1942 = vadd.f32 %v1940, %v1941
    %v1943 = vrot.slane %v1942, 2
    %v1944 = vadd.f32 %v1942, %v1943
    %v1945 = vrot.slane %v1944, 1
    %v1946 = vadd.f32 %v1944, %v1945
    %v1947 = vsel %vm81, %v1927, 0.0
    %v1948 = vrot.slane %v1947, 4
    %v1949 = vadd.f32 %v1947, %v1948
    %v1950 = vrot.slane %v1949, 2
    %v1951 = vadd.f32 %v1949, %v1950
    %v1952 = vrot.slane %v1951, 1
    %v1953 = vadd.f32 %v1951, %v1952
    %v1954 = vsel %vm81, %v1929, 0.0
    %v1955 = vrot.slane %v1954, 4
    %v1956 = vadd.f32 %v1954, %v1955
    %v1957 = vrot.slane %v1956, 2
    %v1958 = vadd.f32 %v1956, %v1957
    %v1959 = vrot.slane %v1958, 1
    %v1960 = vadd.f32 %v1958, %v1959
    %v1961 = vsel %vm81, %v1931, 0.0
    %v1962 = vrot.slane %v1961, 4
    %v1963 = vadd.f32 %v1961, %v1962
    %v1964 = vrot.slane %v1963, 2
    %v1965 = vadd.f32 %v1963, %v1964
    %v1966 = vrot.slane %v1965, 1
    %v1967 = vadd.f32 %v1965, %v1966
    %v1968 = vsel %vm81, %v1933, 0.0
    %v1969 = vrot.slane %v1968, 4
    %v1970 = vadd.f32 %v1968, %v1969
    %v1971 = vrot.slane %v1970, 2
    %v1972 = vadd.f32 %v1970, %v1971
    %v1973 = vrot.slane %v1972, 1
    %v1974 = vadd.f32 %v1972, %v1973
    %v1975 = vsel %vm81, %v1935, 0.0
    %v1976 = vrot.slane %v1975, 4
    %v1977 = vadd.f32 %v1975, %v1976
    %v1978 = vrot.slane %v1977, 2
    %v1979 = vadd.f32 %v1977, %v1978
    %v1980 = vrot.slane %v1979, 1
    %v1981 = vadd.f32 %v1979, %v1980
    %v1982 = vsel %vm81, %v1937, 0.0
    %v1983 = vrot.slane %v1982, 4
    %v1984 = vadd.f32 %v1982, %v1983
    %v1985 = vrot.slane %v1984, 2
    %v1986 = vadd.f32 %v1984, %v1985
    %v1987 = vrot.slane %v1986, 1
    %v1988 = vadd.f32 %v1986, %v1987
    %v1989 = vsel %vm81, %v1939, 0.0
    %v1990 = vrot.slane %v1989, 4
    %v1991 = vadd.f32 %v1989, %v1990
    %v1992 = vrot.slane %v1991, 2
    %v1993 = vadd.f32 %v1991, %v1992
    %v1994 = vrot.slane %v1993, 1
    %v1995 = vadd.f32 %v1993, %v1994
    %v1996 = vrcp.pop %v1946
    %v1997 = vrcp.pop %v1953
    %v1998 = vrcp.pop %v1960
    %v1999 = vrcp.pop %v1967
    %v2000 = vrcp.pop %v1974
    %v2001 = vrcp.pop %v1981
    %v2002 = vrcp.pop %v1988
    %v2003 = vrcp.pop %v1995
    %v2004 = vmul.f32 %v1925, %v1996
    %v2005 = vmul.f32 %v1927, %v1997
    %v2006 = vmul.f32 %v1929, %v1998
    %v2007 = vmul.f32 %v1931, %v1999
    %v2008 = vmul.f32 %v1933, %v2000
    %v2009 = vmul.f32 %v1935, %v2001
    %v2010 = vmul.f32 %v1937, %v2002
    %v2011 = vmul.f32 %v1939, %v2003
    %v2012 = vmul.f32 %v2004, %v1655
    %v2013 = vmul.f32 %v2005, %v1655
    %v2014 = vmul.f32 %v2006, %v1655
    %v2015 = vmul.f32 %v2007, %v1655
    %v2016 = vmul.f32 %v2008, %v1655
    %v2017 = vmul.f32 %v2009, %v1655
    %v2018 = vmul.f32 %v2010, %v1655
    %v2019 = vmul.f32 %v2011, %v1655
    %v2020 = vsel %vm81, %v2012, 0.0
    %v2021 = vrot.slane %v2020, 4
    %v2022 = vadd.f32 %v2020, %v2021
    %v2023 = vrot.slane %v2022, 2
    %v2024 = vadd.f32 %v2022, %v2023
    %v2025 = vrot.slane %v2024, 1
    %v2026 = vadd.f32 %v2024, %v2025
    %v2027 = vsel %vm81, %v2013, 0.0
    %v2028 = vrot.slane %v2027, 4
    %v2029 = vadd.f32 %v2027, %v2028
    %v2030 = vrot.slane %v2029, 2
    %v2031 = vadd.f32 %v2029, %v2030
    %v2032 = vrot.slane %v2031, 1
    %v2033 = vadd.f32 %v2031, %v2032
    %v2034 = vsel %vm81, %v2014, 0.0
    %v2035 = vrot.slane %v2034, 4
    %v2036 = vadd.f32 %v2034, %v2035
    %v2037 = vrot.slane %v2036, 2
    %v2038 = vadd.f32 %v2036, %v2037
    %v2039 = vrot.slane %v2038, 1
    %v2040 = vadd.f32 %v2038, %v2039
    %v2041 = vsel %vm81, %v2015, 0.0
    %v2042 = vrot.slane %v2041, 4
    %v2043 = vadd.f32 %v2041, %v2042
    %v2044 = vrot.slane %v2043, 2
    %v2045 = vadd.f32 %v2043, %v2044
    %v2046 = vrot.slane %v2045, 1
    %v2047 = vadd.f32 %v2045, %v2046
    %v2048 = vsel %vm81, %v2016, 0.0
    %v2049 = vrot.slane %v2048, 4
    %v2050 = vadd.f32 %v2048, %v2049
    %v2051 = vrot.slane %v2050, 2
    %v2052 = vadd.f32 %v2050, %v2051
    %v2053 = vrot.slane %v2052, 1
    %v2054 = vadd.f32 %v2052, %v2053
    %v2055 = vsel %vm81, %v2017, 0.0
    %v2056 = vrot.slane %v2055, 4
    %v2057 = vadd.f32 %v2055, %v2056
    %v2058 = vrot.slane %v2057, 2
    %v2059 = vadd.f32 %v2057, %v2058
    %v2060 = vrot.slane %v2059, 1
    %v2061 = vadd.f32 %v2059, %v2060
    %v2062 = vsel %vm81, %v2018, 0.0
    %v2063 = vrot.slane %v2062, 4
    %v2064 = vadd.f32 %v2062, %v2063
    %v2065 = vrot.slane %v2064, 2
    %v2066 = vadd.f32 %v2064, %v2065
    %v2067 = vrot.slane %v2066, 1
    %v2068 = vadd.f32 %v2066, %v2067
    %v2069 = vsel %vm81, %v2019, 0.0
    %v2070 = vrot.slane %v2069, 4
    %v2071 = vadd.f32 %v2069, %v2070
    %v2072 = vrot.slane %v2071, 2
    %v2073 = vadd.f32 %v2071, %v2072
    %v2074 = vrot.slane %v2073, 1
    %v2075 = vadd.f32 %v2073, %v2074
    %v2077 = vcombine.high %v1644, %v1644
    %v2079 = vunpack.c.l.s4 1966171168
    %v2080 = vunpack.c.0.s8 %v2079
    %v2081 = vlaneseq
    %v2082 = vshrl.u32 %v2081, 7
    %v2083 = vsub.s32 %v2080, %v2082
    %v2084 = vrot.slane %v1644, %v2083
    %v2086 = vunpack.c.l.s4 1966171168
    %v2087 = vunpack.c.0.s8 %v2086
    %v2088 = vlaneseq
    %v2089 = vshrl.u32 %v2088, 7
    %v2090 = vsub.s32 %v2087, %v2089
    %v2091 = vrot.slane %v2077, %v2090
    %v2092 = vcombine.high %v2084, %v2084
    %v2093 = vcombine.high %v2091, %v2091
    %v2095 = vunpack.c.l.s4 1966171168
    %v2096 = vunpack.c.0.s8 %v2095
    %v2097 = vlaneseq
    %v2098 = vshrl.u32 %v2097, 7
    %v2099 = vsub.s32 %v2096, %v2098
    %v2100 = vrot.slane %v2084, %v2099
    %v2102 = vunpack.c.l.s4 1966171168
    %v2103 = vunpack.c.0.s8 %v2102
    %v2104 = vlaneseq
    %v2105 = vshrl.u32 %v2104, 7
    %v2106 = vsub.s32 %v2103, %v2105
    %v2107 = vrot.slane %v2091, %v2106
    %v2109 = vunpack.c.l.s4 1966171168
    %v2110 = vunpack.c.0.s8 %v2109
    %v2111 = vlaneseq
    %v2112 = vshrl.u32 %v2111, 7
    %v2113 = vsub.s32 %v2110, %v2112
    %v2114 = vrot.slane %v2092, %v2113
    %v2116 = vunpack.c.l.s4 1966171168
    %v2117 = vunpack.c.0.s8 %v2116
    %v2118 = vlaneseq
    %v2119 = vshrl.u32 %v2118, 7
    %v2120 = vsub.s32 %v2117, %v2119
    %v2121 = vrot.slane %v2093, %v2120
    %v2122 = vcombine.high %v2100, %v2100
    %v2123 = vcombine.high %v2107, %v2107
    %v2124 = vcombine.high %v2114, %v2114
    %v2125 = vcombine.high %v2121, %v2121
    %v2126 = vlaneseq
    %v2127 = vshrl.u32 %v2126, 7
    %v2128 = vsub.s32 0, %v2127
    %v2129 = vrot.slane %v2100, %v2128
    %v2130 = vlaneseq
    %v2131 = vshrl.u32 %v2130, 7
    %v2132 = vsub.s32 0, %v2131
    %v2133 = vrot.slane %v2114, %v2132
    %v2134 = vlaneseq
    %v2135 = vshrl.u32 %v2134, 7
    %v2136 = vsub.s32 0, %v2135
    %v2137 = vrot.slane %v2122, %v2136
    %v2138 = vlaneseq
    %v2139 = vshrl.u32 %v2138, 7
    %v2140 = vsub.s32 0, %v2139
    %v2141 = vrot.slane %v2124, %v2140
    %v2142 = vlaneseq
    %v2143 = vshrl.u32 %v2142, 7
    %v2144 = vsub.s32 0, %v2143
    %v2145 = vrot.slane %v2107, %v2144
    %v2146 = vlaneseq
    %v2147 = vshrl.u32 %v2146, 7
    %v2148 = vsub.s32 0, %v2147
    %v2149 = vrot.slane %v2121, %v2148
    %v2150 = vlaneseq
    %v2151 = vshrl.u32 %v2150, 7
    %v2152 = vsub.s32 0, %v2151
    %v2153 = vrot.slane %v2123, %v2152
    %v2154 = vlaneseq
    %v2155 = vshrl.u32 %v2154, 7
    %v2156 = vsub.s32 0, %v2155
    %v2157 = vrot.slane %v2125, %v2156
    %v2166 = vmul.f32 %v2129, %v1650
    %v2167 = vmul.f32 %v2133, %v1650
    %v2168 = vmul.f32 %v2137, %v1650
    %v2169 = vmul.f32 %v2141, %v1650
    %v2170 = vmul.f32 %v2145, %v1650
    %v2171 = vmul.f32 %v2149, %v1650
    %v2172 = vmul.f32 %v2153, %v1650
    %v2173 = vmul.f32 %v2157, %v1650
    %v2174 = vpack.c.bf16 %v2166, %v2166
    %v2175 = vpack.c.bf16 %v2167, %v2167
    %v2176 = vpack.c.bf16 %v2168, %v2168
    %v2177 = vpack.c.bf16 %v2169, %v2169
    %v2178 = vpack.c.bf16 %v2170, %v2170
    %v2179 = vpack.c.bf16 %v2171, %v2171
    %v2180 = vpack.c.bf16 %v2172, %v2172
    %v2181 = vpack.c.bf16 %v2173, %v2173
    %v2190 = vunpack.c.l.b16 %v2174
    %v2191 = vunpack.c.l.b16 %v2175
    %v2192 = vunpack.c.l.b16 %v2176
    %v2193 = vunpack.c.l.b16 %v2177
    %v2194 = vunpack.c.l.b16 %v2178
    %v2195 = vunpack.c.l.b16 %v2179
    %v2196 = vunpack.c.l.b16 %v2180
    %v2197 = vunpack.c.l.b16 %v2181
    %v2198 = vpack.c.b16 %v2191, %v2190
    %v2199 = vpack.c.b16 %v2193, %v2192
    %v2200 = vpack.c.b16 %v2195, %v2194
    %v2201 = vpack.c.b16 %v2197, %v2196
    %v2203 = vsel %vm81, %v2198, 0
    %v2206 = vsel %vm81, %v2199, 0
    %v2209 = vsel %vm81, %v2200, 0
    %v2212 = vsel %vm81, %v2201, 0
    %2214 = vmatprep.subr.bf16.mxu0 0
    %2215 = vmatpush1.bf16.msra.mxu0 %v397
    %2216 = vmatprep.subr.bf16.mxu0 0
    %2217 = vmatpush1.bf16.msra.mxu0 %v398
    %2218 = vmatprep.subr.bf16.mxu0 0
    %2219 = vmatpush1.bf16.msra.mxu0 0
    %2220 = vmatprep.subr.bf16.mxu0 0
    %2221 = vmatpush1.bf16.msra.mxu0 0
    %2222 = vmatprep.subr.bf16.mxu0 0
    %2223 = vmatpush1.bf16.msra.mxu0 0
    %2224 = vmatprep.subr.bf16.mxu0 0
    %2225 = vmatpush1.bf16.msra.mxu0 0
    %2226 = vmatprep.subr.bf16.mxu0 0
    %2227 = vmatpush1.bf16.msra.mxu0 0
    %2228 = vmatprep.subr.bf16.mxu0 0
    %2229 = vmatpush1.bf16.msra.mxu0 0
    %2230 = vmatprep.subr.bf16.mxu0 0
    %2231 = vmatpush1.bf16.msra.mxu0 0
    %2232 = vmatprep.subr.bf16.mxu0 0
    %2233 = vmatpush1.bf16.msra.mxu0 0
    %2234 = vmatprep.subr.bf16.mxu0 0
    %2235 = vmatpush1.bf16.msra.mxu0 0
    %2236 = vmatprep.subr.bf16.mxu0 0
    %2237 = vmatpush1.bf16.msra.mxu0 0
    %2238 = vmatprep.subr.bf16.mxu0 0
    %2239 = vmatpush1.bf16.msra.mxu0 0
    %2240 = vmatprep.subr.bf16.mxu0 0
    %2241 = vmatpush1.bf16.msra.mxu0 0
    %2242 = vmatprep.subr.bf16.mxu0 0
    %2243 = vmatpush1.bf16.msra.mxu0 0
    %2244 = vmatprep.subr.bf16.mxu0 0
    %2245 = vmatpush1.bf16.msra.mxu0 0
    %2246 = vmatprep.mubr.bf16.mxu0 0
    %2247 = vmatmul.mubr.bf16.gmra.mrb[0].mxu0 %v2203
    %v2248 = vpop.f32.mrb[0].mxu0
    %v2249 = vadd.f32 0.0, %v2248
    %v2250 = vpop.f32.mrb[0].mxu0
    %v2251 = vpop.f32.mrb[0].mxu0
    %v2252 = vadd.f32 0.0, %v2251
    %v2253 = vpop.f32.mrb[0].mxu0
    %2254 = vmatprep.mubr.bf16.mxu0 0
    %2255 = vmatmul.mubr.bf16.gmra.mrb[0].mxu0 %v2206
    %v2256 = vpop.f32.mrb[0].mxu0
    %v2257 = vadd.f32 0.0, %v2256
    %v2258 = vpop.f32.mrb[0].mxu0
    %v2259 = vpop.f32.mrb[0].mxu0
    %v2260 = vadd.f32 0.0, %v2259
    %v2261 = vpop.f32.mrb[0].mxu0
    %2262 = vmatprep.mubr.bf16.mxu0 0
    %2263 = vmatmul.mubr.bf16.gmra.mrb[0].mxu0 %v2209
    %v2264 = vpop.f32.mrb[0].mxu0
    %v2265 = vadd.f32 0.0, %v2264
    %v2266 = vpop.f32.mrb[0].mxu0
    %v2267 = vpop.f32.mrb[0].mxu0
    %v2268 = vadd.f32 0.0, %v2267
    %v2269 = vpop.f32.mrb[0].mxu0
    %2270 = vmatprep.mubr.bf16.mxu0 0
    %2271 = vmatmul.mubr.bf16.gmra.mrb[0].mxu0 %v2212
    %v2272 = vpop.f32.mrb[0].mxu0
    %v2273 = vadd.f32 0.0, %v2272
    %v2274 = vpop.f32.mrb[0].mxu0
    %v2275 = vpop.f32.mrb[0].mxu0
    %v2276 = vadd.f32 0.0, %v2275
    %v2277 = vpop.f32.mrb[0].mxu0
    %2278 = vdwg.mxu0
    %v2279 = vsel %vm81, %v2249, -inf
    %v2280 = vrot.slane %v2279, 4
    %v2281 = vmax.f32 %v2279, %v2280
    %v2282 = vrot.slane %v2281, 2
    %v2283 = vmax.f32 %v2281, %v2282
    %v2284 = vrot.slane %v2283, 1
    %v2285 = vmax.f32 %v2283, %v2284
    %v2286 = vsel %vm81, %v2252, -inf
    %v2287 = vrot.slane %v2286, 4
    %v2288 = vmax.f32 %v2286, %v2287
    %v2289 = vrot.slane %v2288, 2
    %v2290 = vmax.f32 %v2288, %v2289
    %v2291 = vrot.slane %v2290, 1
    %v2292 = vmax.f32 %v2290, %v2291
    %v2293 = vsel %vm81, %v2257, -inf
    %v2294 = vrot.slane %v2293, 4
    %v2295 = vmax.f32 %v2293, %v2294
    %v2296 = vrot.slane %v2295, 2
    %v2297 = vmax.f32 %v2295, %v2296
    %v2298 = vrot.slane %v2297, 1
    %v2299 = vmax.f32 %v2297, %v2298
    %v2300 = vsel %vm81, %v2260, -inf
    %v2301 = vrot.slane %v2300, 4
    %v2302 = vmax.f32 %v2300, %v2301
    %v2303 = vrot.slane %v2302, 2
    %v2304 = vmax.f32 %v2302, %v2303
    %v2305 = vrot.slane %v2304, 1
    %v2306 = vmax.f32 %v2304, %v2305
    %v2307 = vsel %vm81, %v2265, -inf
    %v2308 = vrot.slane %v2307, 4
    %v2309 = vmax.f32 %v2307, %v2308
    %v2310 = vrot.slane %v2309, 2
    %v2311 = vmax.f32 %v2309, %v2310
    %v2312 = vrot.slane %v2311, 1
    %v2313 = vmax.f32 %v2311, %v2312
    %v2314 = vsel %vm81, %v2268, -inf
    %v2315 = vrot.slane %v2314, 4
    %v2316 = vmax.f32 %v2314, %v2315
    %v2317 = vrot.slane %v2316, 2
    %v2318 = vmax.f32 %v2316, %v2317
    %v2319 = vrot.slane %v2318, 1
    %v2320 = vmax.f32 %v2318, %v2319
    %v2321 = vsel %vm81, %v2273, -inf
    %v2322 = vrot.slane %v2321, 4
    %v2323 = vmax.f32 %v2321, %v2322
    %v2324 = vrot.slane %v2323, 2
    %v2325 = vmax.f32 %v2323, %v2324
    %v2326 = vrot.slane %v2325, 1
    %v2327 = vmax.f32 %v2325, %v2326
    %v2328 = vsel %vm81, %v2276, -inf
    %v2329 = vrot.slane %v2328, 4
    %v2330 = vmax.f32 %v2328, %v2329
    %v2331 = vrot.slane %v2330, 2
    %v2332 = vmax.f32 %v2330, %v2331
    %v2333 = vrot.slane %v2332, 1
    %v2334 = vmax.f32 %v2332, %v2333
    %v2335 = vsub.f32 %v2249, %v2285
    %v2336 = vsub.f32 %v2252, %v2292
    %v2337 = vsub.f32 %v2257, %v2299
    %v2338 = vsub.f32 %v2260, %v2306
    %v2339 = vsub.f32 %v2265, %v2313
    %v2340 = vsub.f32 %v2268, %v2320
    %v2341 = vsub.f32 %v2273, %v2327
    %v2342 = vsub.f32 %v2276, %v2334
    %v2343 = vmul.f32 %v2335, 1.442695
    %v2344 = vpow.pop %v2343
    %v2345 = vmul.f32 %v2336, 1.442695
    %v2346 = vpow.pop %v2345
    %v2347 = vmul.f32 %v2337, 1.442695
    %v2348 = vpow.pop %v2347
    %v2349 = vmul.f32 %v2338, 1.442695
    %v2350 = vpow.pop %v2349
    %v2351 = vmul.f32 %v2339, 1.442695
    %v2352 = vpow.pop %v2351
    %v2353 = vmul.f32 %v2340, 1.442695
    %v2354 = vpow.pop %v2353
    %v2355 = vmul.f32 %v2341, 1.442695
    %v2356 = vpow.pop %v2355
    %v2357 = vmul.f32 %v2342, 1.442695
    %v2358 = vpow.pop %v2357
    %v2359 = vsel %vm81, %v2344, 0.0
    %v2360 = vrot.slane %v2359, 4
    %v2361 = vadd.f32 %v2359, %v2360
    %v2362 = vrot.slane %v2361, 2
    %v2363 = vadd.f32 %v2361, %v2362
    %v2364 = vrot.slane %v2363, 1
    %v2365 = vadd.f32 %v2363, %v2364
    %v2366 = vsel %vm81, %v2346, 0.0
    %v2367 = vrot.slane %v2366, 4
    %v2368 = vadd.f32 %v2366, %v2367
    %v2369 = vrot.slane %v2368, 2
    %v2370 = vadd.f32 %v2368, %v2369
    %v2371 = vrot.slane %v2370, 1
    %v2372 = vadd.f32 %v2370, %v2371
    %v2373 = vsel %vm81, %v2348, 0.0
    %v2374 = vrot.slane %v2373, 4
    %v2375 = vadd.f32 %v2373, %v2374
    %v2376 = vrot.slane %v2375, 2
    %v2377 = vadd.f32 %v2375, %v2376
    %v2378 = vrot.slane %v2377, 1
    %v2379 = vadd.f32 %v2377, %v2378
    %v2380 = vsel %vm81, %v2350, 0.0
    %v2381 = vrot.slane %v2380, 4
    %v2382 = vadd.f32 %v2380, %v2381
    %v2383 = vrot.slane %v2382, 2
    %v2384 = vadd.f32 %v2382, %v2383
    %v2385 = vrot.slane %v2384, 1
    %v2386 = vadd.f32 %v2384, %v2385
    %v2387 = vsel %vm81, %v2352, 0.0
    %v2388 = vrot.slane %v2387, 4
    %v2389 = vadd.f32 %v2387, %v2388
    %v2390 = vrot.slane %v2389, 2
    %v2391 = vadd.f32 %v2389, %v2390
    %v2392 = vrot.slane %v2391, 1
    %v2393 = vadd.f32 %v2391, %v2392
    %v2394 = vsel %vm81, %v2354, 0.0
    %v2395 = vrot.slane %v2394, 4
    %v2396 = vadd.f32 %v2394, %v2395
    %v2397 = vrot.slane %v2396, 2
    %v2398 = vadd.f32 %v2396, %v2397
    %v2399 = vrot.slane %v2398, 1
    %v2400 = vadd.f32 %v2398, %v2399
    %v2401 = vsel %vm81, %v2356, 0.0
    %v2402 = vrot.slane %v2401, 4
    %v2403 = vadd.f32 %v2401, %v2402
    %v2404 = vrot.slane %v2403, 2
    %v2405 = vadd.f32 %v2403, %v2404
    %v2406 = vrot.slane %v2405, 1
    %v2407 = vadd.f32 %v2405, %v2406
    %v2408 = vsel %vm81, %v2358, 0.0
    %v2409 = vrot.slane %v2408, 4
    %v2410 = vadd.f32 %v2408, %v2409
    %v2411 = vrot.slane %v2410, 2
    %v2412 = vadd.f32 %v2410, %v2411
    %v2413 = vrot.slane %v2412, 1
    %v2414 = vadd.f32 %v2412, %v2413
    %v2415 = vrcp.pop %v2365
    %v2416 = vrcp.pop %v2372
    %v2417 = vrcp.pop %v2379
    %v2418 = vrcp.pop %v2386
    %v2419 = vrcp.pop %v2393
    %v2420 = vrcp.pop %v2400
    %v2421 = vrcp.pop %v2407
    %v2422 = vrcp.pop %v2414
    %v2423 = vmul.f32 %v2344, %v2415
    %v2424 = vmul.f32 %v2346, %v2416
    %v2425 = vmul.f32 %v2348, %v2417
    %v2426 = vmul.f32 %v2350, %v2418
    %v2427 = vmul.f32 %v2352, %v2419
    %v2428 = vmul.f32 %v2354, %v2420
    %v2429 = vmul.f32 %v2356, %v2421
    %v2430 = vmul.f32 %v2358, %v2422
    %v2431 = vmul.f32 %v2423, %v1656
    %v2432 = vmul.f32 %v2424, %v1656
    %v2433 = vmul.f32 %v2425, %v1656
    %v2434 = vmul.f32 %v2426, %v1656
    %v2435 = vmul.f32 %v2427, %v1656
    %v2436 = vmul.f32 %v2428, %v1656
    %v2437 = vmul.f32 %v2429, %v1656
    %v2438 = vmul.f32 %v2430, %v1656
    %v2439 = vsel %vm81, %v2431, 0.0
    %v2440 = vrot.slane %v2439, 4
    %v2441 = vadd.f32 %v2439, %v2440
    %v2442 = vrot.slane %v2441, 2
    %v2443 = vadd.f32 %v2441, %v2442
    %v2444 = vrot.slane %v2443, 1
    %v2445 = vadd.f32 %v2443, %v2444
    %v2446 = vsel %vm81, %v2432, 0.0
    %v2447 = vrot.slane %v2446, 4
    %v2448 = vadd.f32 %v2446, %v2447
    %v2449 = vrot.slane %v2448, 2
    %v2450 = vadd.f32 %v2448, %v2449
    %v2451 = vrot.slane %v2450, 1
    %v2452 = vadd.f32 %v2450, %v2451
    %v2453 = vsel %vm81, %v2433, 0.0
    %v2454 = vrot.slane %v2453, 4
    %v2455 = vadd.f32 %v2453, %v2454
    %v2456 = vrot.slane %v2455, 2
    %v2457 = vadd.f32 %v2455, %v2456
    %v2458 = vrot.slane %v2457, 1
    %v2459 = vadd.f32 %v2457, %v2458
    %v2460 = vsel %vm81, %v2434, 0.0
    %v2461 = vrot.slane %v2460, 4
    %v2462 = vadd.f32 %v2460, %v2461
    %v2463 = vrot.slane %v2462, 2
    %v2464 = vadd.f32 %v2462, %v2463
    %v2465 = vrot.slane %v2464, 1
    %v2466 = vadd.f32 %v2464, %v2465
    %v2467 = vsel %vm81, %v2435, 0.0
    %v2468 = vrot.slane %v2467, 4
    %v2469 = vadd.f32 %v2467, %v2468
    %v2470 = vrot.slane %v2469, 2
    %v2471 = vadd.f32 %v2469, %v2470
    %v2472 = vrot.slane %v2471, 1
    %v2473 = vadd.f32 %v2471, %v2472
    %v2474 = vsel %vm81, %v2436, 0.0
    %v2475 = vrot.slane %v2474, 4
    %v2476 = vadd.f32 %v2474, %v2475
    %v2477 = vrot.slane %v2476, 2
    %v2478 = vadd.f32 %v2476, %v2477
    %v2479 = vrot.slane %v2478, 1
    %v2480 = vadd.f32 %v2478, %v2479
    %v2481 = vsel %vm81, %v2437, 0.0
    %v2482 = vrot.slane %v2481, 4
    %v2483 = vadd.f32 %v2481, %v2482
    %v2484 = vrot.slane %v2483, 2
    %v2485 = vadd.f32 %v2483, %v2484
    %v2486 = vrot.slane %v2485, 1
    %v2487 = vadd.f32 %v2485, %v2486
    %v2488 = vsel %vm81, %v2438, 0.0
    %v2489 = vrot.slane %v2488, 4
    %v2490 = vadd.f32 %v2488, %v2489
    %v2491 = vrot.slane %v2490, 2
    %v2492 = vadd.f32 %v2490, %v2491
    %v2493 = vrot.slane %v2492, 1
    %v2494 = vadd.f32 %v2492, %v2493
    %v2503 = vsel %vm1121, %v2033, %v2026
    %v2504 = vsel %vm1123, %v2040, %v2503
    %v2505 = vsel %vm1125, %v2047, %v2504
    %v2506 = vsel %vm1127, %v2054, %v2505
    %v2507 = vsel %vm1129, %v2061, %v2506
    %v2508 = vsel %vm1131, %v2068, %v2507
    %v2509 = vsel %vm1133, %v2075, %v2508
    %v2519 = vsel %vm1121, %v2452, %v2445
    %v2520 = vsel %vm1123, %v2459, %v2519
    %v2521 = vsel %vm1125, %v2466, %v2520
    %v2522 = vsel %vm1127, %v2473, %v2521
    %v2523 = vsel %vm1129, %v2480, %v2522
    %v2524 = vsel %vm1131, %v2487, %v2523
    %v2525 = vsel %vm1133, %v2494, %v2524
    %v2527 = vpack.c.bf16 %v2525, %v2509
    %v2528 = vlaneseq
    %v2529 = vshrl.u32 %v2528, 7
    %v2530 = vsub.s32 0, %v2529
    %v2531 = vrot.slane %v1440, %v2530
    %v2536 = vunpack.c.l.b16 %v1452
    %v2537 = vunpack.c.l.b16 %v1453
    %v2538 = vunpack.c.l.b16 %v1454
    %v2539 = vunpack.c.l.b16 %v1455
    %v2540 = vpack.c.b16 %v2537, %v2536
    %v2541 = vpack.c.b16 %v2539, %v2538
    %v2545 = vsel %vm81, %v2527, 0
    %2547 = vmatprep.subr.bf16.mxu0 0
    %2548 = vmatpush1.bf16.msra.mxu0 %v2540
    %2549 = vmatprep.subr.bf16.mxu0 0
    %2550 = vmatpush1.bf16.msra.mxu0 %v2541
    %2551 = vmatprep.subr.bf16.mxu0 0
    %2552 = vmatpush1.bf16.msra.mxu0 0
    %2553 = vmatprep.subr.bf16.mxu0 0
    %2554 = vmatpush1.bf16.msra.mxu0 0
    %2555 = vmatprep.subr.bf16.mxu0 0
    %2556 = vmatpush1.bf16.msra.mxu0 0
    %2557 = vmatprep.subr.bf16.mxu0 0
    %2558 = vmatpush1.bf16.msra.mxu0 0
    %2559 = vmatprep.subr.bf16.mxu0 0
    %2560 = vmatpush1.bf16.msra.mxu0 0
    %2561 = vmatprep.subr.bf16.mxu0 0
    %2562 = vmatpush1.bf16.msra.mxu0 0
    %2563 = vmatprep.subr.bf16.mxu0 0
    %2564 = vmatpush1.bf16.msra.mxu0 0
    %2565 = vmatprep.subr.bf16.mxu0 0
    %2566 = vmatpush1.bf16.msra.mxu0 0
    %2567 = vmatprep.subr.bf16.mxu0 0
    %2568 = vmatpush1.bf16.msra.mxu0 0
    %2569 = vmatprep.subr.bf16.mxu0 0
    %2570 = vmatpush1.bf16.msra.mxu0 0
    %2571 = vmatprep.subr.bf16.mxu0 0
    %2572 = vmatpush1.bf16.msra.mxu0 0
    %2573 = vmatprep.subr.bf16.mxu0 0
    %2574 = vmatpush1.bf16.msra.mxu0 0
    %2575 = vmatprep.subr.bf16.mxu0 0
    %2576 = vmatpush1.bf16.msra.mxu0 0
    %2577 = vmatprep.subr.bf16.mxu0 0
    %2578 = vmatpush1.bf16.msra.mxu0 0
    %2579 = vmatprep.mubr.bf16.mxu0 0
    %2580 = vmatmul.mubr.bf16.gmra.mrb[0].mxu0 %v2545
    %v2581 = vpop.f32.mrb[0].mxu0
    %v2582 = vadd.f32 %v2531, %v2581
    %v2583 = vpop.f32.mrb[0].mxu0
    %v2584 = vpop.f32.mrb[0].mxu0
    %v2585 = vadd.f32 %v2531, %v2584
    %v2586 = vpop.f32.mrb[0].mxu0
    %2587 = vdwg.mxu0
    %v2588 = vadd.f32 %v2582, %v1430
    %v2589 = vadd.f32 %v2585, %v1431
    %v2590 = vsel %vm81, %v2588, 0.0
    %2591 = vadd.xlane.f32.xlu0 %v2590
    %v2592 = vpop.xlane.xlu0 %2591
    %v2593 = vsel %vm81, %v2589, 0.0
    %2594 = vadd.xlane.f32.xlu0 %v2593
    %v2595 = vpop.xlane.xlu0 %2594
    %v2596 = vmul.f32 %v2592, %v88
    %v2597 = vmul.f32 %v2595, %v88
    %v2598 = vmul.f32 %v2588, %v2588
    %v2599 = vmul.f32 %v2589, %v2589
    %v2600 = vsel %vm81, %v2598, 0.0
    %2601 = vadd.xlane.f32.xlu0 %v2600
    %v2602 = vpop.xlane.xlu0 %2601
    %v2603 = vsel %vm81, %v2599, 0.0
    %2604 = vadd.xlane.f32.xlu0 %v2603
    %v2605 = vpop.xlane.xlu0 %2604
    %v2606 = vmul.f32 %v2602, %v88
    %v2607 = vmul.f32 %v2605, %v88
    %v2608 = vmul.f32 %v2596, %v2596
    %v2609 = vmul.f32 %v2597, %v2597
    %v2610 = vsub.f32 %v2606, %v2608
    %v2611 = vsub.f32 %v2607, %v2609
    %v2612 = vsub.f32 %v2588, %v2596
    %v2613 = vsub.f32 %v2589, %v2597
    %v2614 = vadd.f32 %v2610, 1e-12
    %v2615 = vadd.f32 %v2611, 1e-12
    %v2616 = vrsqrt.pop %v2614
    %v2617 = vrsqrt.pop %v2615
    %v2618 = vmul.f32 %v2612, %v2616
    %v2619 = vmul.f32 %v2613, %v2617
    %v2620 = vlaneseq
    %v2621 = vshrl.u32 %v2620, 7
    %v2622 = vsub.s32 0, %v2621
    %v2623 = vrot.slane %v1435, %v2622
    %v2624 = vmul.f32 %v2618, %v2623
    %v2625 = vmul.f32 %v2619, %v2623
    %v2626 = vlaneseq
    %v2627 = vshrl.u32 %v2626, 7
    %v2628 = vsub.s32 0, %v2627
    %v2629 = vrot.slane %v1436, %v2628
    %v2630 = vadd.f32 %v2624, %v2629
    %v2631 = vadd.f32 %v2625, %v2629
    %v2632 = vpack.c.bf16 %v2631, %v2630
    %v2633 = vlaneseq
    %v2634 = vshrl.u32 %v2633, 7
    %v2635 = vsub.s32 0, %v2634
    %v2636 = vrot.slane %v1442, %v2635
    %v2641 = vunpack.c.l.b16 %v1456
    %v2642 = vunpack.c.l.b16 %v1457
    %v2643 = vunpack.c.l.b16 %v1458
    %v2644 = vunpack.c.l.b16 %v1459
    %v2645 = vpack.c.b16 %v2642, %v2641
    %v2646 = vpack.c.b16 %v2644, %v2643
    %v2650 = vsel %vm81, %v2632, 0
    %2652 = vmatprep.subr.bf16.mxu0 0
    %2653 = vmatpush1.bf16.msra.mxu0 %v2645
    %2654 = vmatprep.subr.bf16.mxu0 0
    %2655 = vmatpush1.bf16.msra.mxu0 %v2646
    %2656 = vmatprep.subr.bf16.mxu0 0
    %2657 = vmatpush1.bf16.msra.mxu0 0
    %2658 = vmatprep.subr.bf16.mxu0 0
    %2659 = vmatpush1.bf16.msra.mxu0 0
    %2660 = vmatprep.subr.bf16.mxu0 0
    %2661 = vmatpush1.bf16.msra.mxu0 0
    %2662 = vmatprep.subr.bf16.mxu0 0
    %2663 = vmatpush1.bf16.msra.mxu0 0
    %2664 = vmatprep.subr.bf16.mxu0 0
    %2665 = vmatpush1.bf16.msra.mxu0 0
    %2666 = vmatprep.subr.bf16.mxu0 0
    %2667 = vmatpush1.bf16.msra.mxu0 0
    %2668 = vmatprep.subr.bf16.mxu0 0
    %2669 = vmatpush1.bf16.msra.mxu0 0
    %2670 = vmatprep.subr.bf16.mxu0 0
    %2671 = vmatpush1.bf16.msra.mxu0 0
    %2672 = vmatprep.subr.bf16.mxu0 0
    %2673 = vmatpush1.bf16.msra.mxu0 0
    %2674 = vmatprep.subr.bf16.mxu0 0
    %2675 = vmatpush1.bf16.msra.mxu0 0
    %2676 = vmatprep.subr.bf16.mxu0 0
    %2677 = vmatpush1.bf16.msra.mxu0 0
    %2678 = vmatprep.subr.bf16.mxu0 0
    %2679 = vmatpush1.bf16.msra.mxu0 0
    %2680 = vmatprep.subr.bf16.mxu0 0
    %2681 = vmatpush1.bf16.msra.mxu0 0
    %2682 = vmatprep.subr.bf16.mxu0 0
    %2683 = vmatpush1.bf16.msra.mxu0 0
    %2684 = vmatprep.mubr.bf16.mxu0 0
    %2685 = vmatmul.mubr.bf16.gmra.mrb[0].mxu0 %v2650
    %v2686 = vpop.f32.mrb[0].mxu0
    %v2687 = vadd.f32 %v2636, %v2686
    %v2688 = vpop.f32.mrb[0].mxu0
    %v2689 = vpop.f32.mrb[0].mxu0
    %v2690 = vadd.f32 %v2636, %v2689
    %v2691 = vpop.f32.mrb[0].mxu0
    %2692 = vdwg.mxu0
    %v2693 = vmul.f32 %v2687, 0.5
    %v2694 = vmul.f32 %v2690, 0.5
    %v2695 = vmul.f32 %v2687, 0.044715
    %v2696 = vmul.f32 %v2690, 0.044715
    %v2697 = vmul.f32 %v2695, %v2687
    %v2698 = vmul.f32 %v2696, %v2690
    %v2699 = vmul.f32 %v2697, %v2687
    %v2700 = vmul.f32 %v2698, %v2690
    %v2701 = vadd.f32 %v2687, %v2699
    %v2702 = vadd.f32 %v2690, %v2700
    %v2703 = vmul.f32 %v2701, 0.7978846
    %v2704 = vmul.f32 %v2702, 0.7978846
    %v2705 = vtanh.pop %v2703
    %v2706 = vtanh.pop %v2704
    %v2707 = vadd.f32 %v2705, 1.0
    %v2708 = vadd.f32 %v2706, 1.0
    %v2709 = vmul.f32 %v2693, %v2707
    %v2710 = vmul.f32 %v2694, %v2708
    %v2711 = vpack.c.bf16 %v2710, %v2709
    %v2712 = vlaneseq
    %v2713 = vshrl.u32 %v2712, 7
    %v2714 = vsub.s32 0, %v2713
    %v2715 = vrot.slane %v1441, %v2714
    %v2732 = vunpack.c.l.b16 %v1461
    %v2733 = vunpack.c.l.b16 %v1462
    %v2734 = vunpack.c.l.b16 %v1463
    %v2735 = vunpack.c.l.b16 %v1464
    %v2736 = vunpack.c.l.b16 %v1465
    %v2737 = vunpack.c.l.b16 %v1466
    %v2738 = vunpack.c.l.b16 %v1467
    %v2739 = vunpack.c.l.b16 %v1468
    %v2740 = vunpack.c.l.b16 %v1469
    %v2741 = vunpack.c.l.b16 %v1470
    %v2742 = vunpack.c.l.b16 %v1471
    %v2743 = vunpack.c.l.b16 %v1472
    %v2744 = vunpack.c.l.b16 %v1473
    %v2745 = vunpack.c.l.b16 %v1474
    %v2746 = vunpack.c.l.b16 %v1475
    %v2747 = vunpack.c.l.b16 %v1476
    %v2748 = vpack.c.b16 %v2733, %v2732
    %v2749 = vpack.c.b16 %v2735, %v2734
    %v2750 = vpack.c.b16 %v2737, %v2736
    %v2751 = vpack.c.b16 %v2739, %v2738
    %v2752 = vpack.c.b16 %v2741, %v2740
    %v2753 = vpack.c.b16 %v2743, %v2742
    %v2754 = vpack.c.b16 %v2745, %v2744
    %v2755 = vpack.c.b16 %v2747, %v2746
    %2764 = vmatprep.subr.bf16.mxu0 0
    %2765 = vmatpush1.bf16.msra.mxu0 %v2748
    %2766 = vmatprep.subr.bf16.mxu0 0
    %2767 = vmatpush1.bf16.msra.mxu0 %v2749
    %2768 = vmatprep.subr.bf16.mxu0 0
    %2769 = vmatpush1.bf16.msra.mxu0 %v2750
    %2770 = vmatprep.subr.bf16.mxu0 0
    %2771 = vmatpush1.bf16.msra.mxu0 %v2751
    %2772 = vmatprep.subr.bf16.mxu0 0
    %2773 = vmatpush1.bf16.msra.mxu0 %v2752
    %2774 = vmatprep.subr.bf16.mxu0 0
    %2775 = vmatpush1.bf16.msra.mxu0 %v2753
    %2776 = vmatprep.subr.bf16.mxu0 0
    %2777 = vmatpush1.bf16.msra.mxu0 %v2754
    %2778 = vmatprep.subr.bf16.mxu0 0
    %2779 = vmatpush1.bf16.msra.mxu0 %v2755
    %2780 = vmatprep.subr.bf16.mxu0 0
    %2781 = vmatpush1.bf16.msra.mxu0 0
    %2782 = vmatprep.subr.bf16.mxu0 0
    %2783 = vmatpush1.bf16.msra.mxu0 0
    %2784 = vmatprep.subr.bf16.mxu0 0
    %2785 = vmatpush1.bf16.msra.mxu0 0
    %2786 = vmatprep.subr.bf16.mxu0 0
    %2787 = vmatpush1.bf16.msra.mxu0 0
    %2788 = vmatprep.subr.bf16.mxu0 0
    %2789 = vmatpush1.bf16.msra.mxu0 0
    %2790 = vmatprep.subr.bf16.mxu0 0
    %2791 = vmatpush1.bf16.msra.mxu0 0
    %2792 = vmatprep.subr.bf16.mxu0 0
    %2793 = vmatpush1.bf16.msra.mxu0 0
    %2794 = vmatprep.subr.bf16.mxu0 0
    %2795 = vmatpush1.bf16.msra.mxu0 0
    %2796 = vmatprep.mubr.bf16.mxu0 0
    %2797 = vmatmul.mubr.bf16.gmra.mrb[0].mxu0 %v2711
    %v2798 = vpop.f32.mrb[0].mxu0
    %v2799 = vadd.f32 %v2715, %v2798
    %v2800 = vpop.f32.mrb[0].mxu0
    %v2801 = vpop.f32.mrb[0].mxu0
    %v2802 = vadd.f32 %v2715, %v2801
    %v2803 = vpop.f32.mrb[0].mxu0
    %2804 = vdwg.mxu0
    %v2805 = vadd.f32 %v2799, %v2588
    %v2806 = vadd.f32 %v2802, %v2589
    %2807 = vst.msk [vmem:[#allocation5] sm:$0xff] %vm81, %v2805
    %2808 = vst.msk [vmem:[#allocation5 + $0x8] sm:$0xff] %vm81, %v2806
    // Predicated region
    $region22: #{tpu_custom_call.1} parent=1 // pred_check
      _
    $region23: #{tpu_custom_call.1} parent=1 // pred_check_branch
      %2810 = sbr.rel (0) target = $region25
    $region24: #{tpu_custom_call.1} parent=1 // pred_region
      %s2812 = ssub.s32 256, 256
      %2813 = vsyncadd [#allocation4], %s2812
      %s2814 = sshll.u32 [#allocation5], 4
      %s2815 = int_to_ptr.vmem [resolvable:$true] %s2814
      %2820 = dma.vmem_to_hbm [thread:$0]  %s2815, 256, %s4, [#allocation4], 128, 128, 8
    $region25: #{tpu_custom_call.1} parent=1 // pred_fallthru
      _
    // Predicated region
    $region26: #{tpu_custom_call.1} parent=1 // pred_check
      _
    $region27: #{tpu_custom_call.1} parent=1 // pred_check_branch
      %2822 = sbr.rel (0) target = $region29
    $region28: #{tpu_custom_call.1} parent=1 // pred_region
      %2823 = dma.done [#allocation4], 256
    $region29: #{tpu_custom_call.1} parent=1 // pred_fallthru
      _
    %2824 = vsyncpa [#allocation3], 1
    %2825 = vsyncpa [#allocation4], 1

</llo_original>
